<compile_context>
chip_gen: v5e
topology: v5e:2x2
jax: 0.10.0
libtpu: 0.0.40
codegen_flags: <defaults>
</compile_context>

<pallas_src>
import numpy as np
import jax
import jax.numpy as jnp
from jax.experimental import pallas as pl
from jax.experimental.pallas import tpu as pltpu

MAX_STEPS = 1000.0
HIDDEN = [256, 128, 64]          # scaled-down analogue of [1024, 512, 256]
NUM_CLASSES = 10
NC_PAD = 16                      # one-hot contraction dim padded to 16
GN_GROUPS = 32
GN_EPS = 1e-5


def _round_up(n, m):
    return ((n + m - 1) // m) * m


# ----------------------------- in-kernel helpers -----------------------------

def _sigmoid_fast(x):
    # exp on EUP, approx reciprocal also on EUP -> off the VALU critical path.
    return pl.reciprocal(1.0 + jnp.exp(-x), approx=True)


def _silu(x):
    return x * _sigmoid_fast(x)


def _sigmoid_exact(x):
    # Exact sigmoid for the blend gate (parity-sensitive).
    return 1.0 / (1.0 + jnp.exp(-x))


# --------------------------------- fused kernel -------------------------------

def _make_kernel(meta):
    """Builds the fused kernel; `meta` holds static (Python int) slab offsets."""
    voff = meta['vec']
    w16o, w64o, w128o = meta['w16'], meta['w64'], meta['w128']
    w256o, w512o = meta['w256'], meta['w512']
    poff, soff = meta['p'], meta['s']

    def kernel(x_ref, t_ref, y_ref, vec_ref, w16_ref, w64_ref, w128_ref,
               w256_ref, p_ref, s_ref, w512_hbm, out_ref, w512_buf, dma_sem):
        # Stream the big, late-consumed CNN weight slab (~640 KB bf16) from HBM
        # while the MLP branch computes; wait just before its first use.
        cnn_cp = pltpu.make_async_copy(w512_hbm, w512_buf, dma_sem)
        cnn_cp.start()

        def vec(name):
            off, n = voff[name]
            return vec_ref[:, off:off + n]

        def mm(a, ref, offs, name):
            off, n = offs[name]
            return jnp.dot(a.astype(jnp.bfloat16), ref[:, off:off + n],
                           preferred_element_type=jnp.float32)

        def gn(h, gname, bname, c):
            # Factored GroupNorm: group means via a (C,32) pooling matmul,
            # broadcast back via a tiny (32,C) 0/1 scatter matmul (all f32).
            pool = p_ref[poff[c]:poff[c] + c, :]
            so, sn = soff[c]
            scat = s_ref[:, so:so + sn]
            m32 = jnp.dot(h, pool, preferred_element_type=jnp.float32)
            mean = jnp.dot(m32, scat, preferred_element_type=jnp.float32)
            hc = h - mean
            v32 = jnp.dot(hc * hc, pool, preferred_element_type=jnp.float32)
            var = jnp.dot(v32, scat, preferred_element_type=jnp.float32)
            return hc * jax.lax.rsqrt(var + GN_EPS) * vec(gname) + vec(bname)

        x = x_ref[...]          # (BP, DP) f32, zero padded
        t = t_ref[...]          # (BP, 1)  f32, already t / max_steps
        y = y_ref[...]          # (BP, 16) f32 one-hot (padded)

        # --- learnable_weight_time -> blend gate (K=1 / N=1 layers on VPU) ---
        h = _silu(t * vec('lwt_w1') + vec('lwt_b1'))                    # (BP,128)
        z = jnp.sum(h * vec('lwt_w2'), axis=-1, keepdims=True) + vec('lwt_b2')
        wfac = _sigmoid_exact(z)                                        # (BP,1)

        # --- UnetMLP branch ---------------------------------------------------
        # Down block 0: DP -> 256
        h1 = _silu(mm(x, w128_ref, w128o, 'd0_w1') + vec('d0_b1'))
        h2 = _silu(mm(h1, w256_ref, w256o, 'd0_w2') + vec('d0_b2'))
        skip_d0 = h2                                                    # pre-norm skip
        hm = h1 + _silu(mm(gn(h2, 'd0_g', 'd0_be', 256),
                           w256_ref, w256o, 'd0_w3') + vec('d0_b3'))

        # Down block 1: 256 -> 128
        h1 = _silu(mm(hm, w256_ref, w256o, 'd1_w1') + vec('d1_b1'))
        h2 = _silu(mm(h1, w128_ref, w128o, 'd1_w2') + vec('d1_b2'))
        skip_d1 = h2
        hm = h1 + _silu(mm(gn(h2, 'd1_g', 'd1_be', 128),
                           w128_ref, w128o, 'd1_w3') + vec('d1_b3'))

        # Bottleneck: 128 -> 64
        hm = mm(hm, w128_ref, w128o, 'bn_w1') + vec('bn_b1')
        hm = _silu(gn(hm, 'bn_g', 'bn_be', 64))
        hm = _silu(mm(hm, w64_ref, w64o, 'bn_w2') + vec('bn_b2'))

        # Up block 0: 64 -> 128 (skip = down1 pre-norm activation)
        h1 = _silu(mm(hm, w64_ref, w64o, 'u0_w1') + vec('u0_b1'))
        nrm = gn(h1, 'u0_g', 'u0_be', 128)
        # lin2(concat(nrm, skip)) as two matmuls into one accumulator.
        h = _silu(mm(nrm, w128_ref, w128o, 'u0_w2a')
                  + mm(skip_d1, w128_ref, w128o, 'u0_w2b') + vec('u0_b2'))
        temb = t * vec('u0_wt') + vec('u0_bt')                          # K=1 -> VPU
        cemb = mm(y, w16_ref, w16o, 'u0_wc') + vec('u0_bc')
        h = h * cemb + temb
        hm = _silu(mm(h, w128_ref, w128o, 'u0_w3') + vec('u0_b3')) + h1

        # Up block 1: 128 -> 256 (skip = down0 pre-norm activation)
        h1 = _silu(mm(hm, w128_ref, w128o, 'u1_w1') + vec('u1_b1'))
        nrm = gn(h1, 'u1_g', 'u1_be', 256)
        h = _silu(mm(nrm, w256_ref, w256o, 'u1_w2a')
                  + mm(skip_d0, w256_ref, w256o, 'u1_w2b') + vec('u1_b2'))
        temb = t * vec('u1_wt') + vec('u1_bt')
        cemb = mm(y, w16_ref, w16o, 'u1_wc') + vec('u1_bc')
        h = h * cemb + temb
        hm = _silu(mm(h, w256_ref, w256o, 'u1_w3') + vec('u1_b3')) + h1

        # Out head + input skip
        x1 = (mm(_silu(gn(hm, 'out_g', 'out_be', 256)),
                 w256_ref, w256o, 'out_w') + vec('out_b') + x)

        # --- CNN branch: conv1d stack folded into Toeplitz matmuls ------------
        c1 = _silu(mm(x, w128_ref, w128o, 'cnn_w1') + vec('cnn_b1'))
        cnn_cp.wait()
        o2, n2 = w512o['cnn_w2']
        o3, n3 = w512o['cnn_w3']
        c2 = _silu(jnp.dot(c1.astype(jnp.bfloat16), w512_buf[:, o2:o2 + n2],
                           preferred_element_type=jnp.float32)
                   + mm(y, w16_ref, w16o, 'cnn_wc')
                   + t * vec('cnn_wt') + vec('cnn_bmid'))
        x2 = (jnp.dot(c2.astype(jnp.bfloat16), w512_buf[:, o3:o3 + n3],
                      preferred_element_type=jnp.float32) + vec('cnn_b3'))

        # --- blend ------------------------------------------------------------
        out_ref[...] = x1 * (1.0 - wfac) + x2 * wfac

    return kernel


# --------------------------- host-side parameter packing ----------------------

class _SlabPacker:
    """Concatenates (rows, n_i) matrices along the last axis at 128-aligned
    column offsets so every in-kernel slice is static and lane-aligned."""

    def __init__(self, rows, out_dtype):
        self.rows = rows
        self.out_dtype = out_dtype
        self.parts = []
        self.offsets = {}
        self.cursor = 0

    def add(self, name, arr):
        arr = np.asarray(arr, np.float32)
        assert arr.ndim == 2 and arr.shape[0] == self.rows, (name, arr.shape)
        n = arr.shape[1]
        self.offsets[name] = (self.cursor, n)
        n_pad = _round_up(n, 128)
        if n_pad > n:
            arr = np.pad(arr, ((0, 0), (0, n_pad - n)))
        self.parts.append(arr)
        self.cursor += n_pad

    def finalize(self):
        slab = np.concatenate(self.parts, axis=1)
        return jnp.asarray(slab, self.out_dtype), self.offsets


def _dense_np(key, din, dout, scale=0.05):
    kw, kb = jax.random.split(key)
    w = np.asarray(jax.random.normal(kw, (din, dout), jnp.float32)) * scale
    b = np.asarray(jax.random.normal(kb, (1, dout), jnp.float32)) * scale
    return w, b


def _gn_factored(c):
    assert c % GN_GROUPS == 0, "GroupNorm(32, C) requires C % 32 == 0"
    gs = c // GN_GROUPS
    gid = np.arange(c) // gs
    pool = (gid[:, None] == np.arange(GN_GROUPS)[None, :]).astype(np.float32) / gs
    scat = (np.arange(GN_GROUPS)[:, None] == gid[None, :]).astype(np.float32)
    return pool, scat


# Toeplitz builders: fold 3-tap 'same'-padded conv1d into dense matmul weights.
def _toeplitz_first(ker, L):
    # input layout c*L + l (channel-first flat), output layout l*Cout + w.
    K, Cin, Cout = ker.shape
    M = np.zeros((Cin * L, L * Cout), np.float32)
    for lo in range(L):
        for k in range(K):
            li = lo + k - 1
            if 0 <= li < L:
                M[li::L, lo * Cout:(lo + 1) * Cout] = ker[k]
    return M


def _toeplitz_mid(ker, L):
    # both layouts l*C + c (position-major).
    K, Cin, Cout = ker.shape
    M = np.zeros((L * Cin, L * Cout), np.float32)
    for lo in range(L):
        for k in range(K):
            li = lo + k - 1
            if 0 <= li < L:
                M[li * Cin:(li + 1) * Cin, lo * Cout:(lo + 1) * Cout] = ker[k]
    return M


def _toeplitz_last(ker, L):
    # input layout l*Cin + w, output layout c*L + l (channel-first flat).
    K, Cin, Cout = ker.shape
    M = np.zeros((L * Cin, Cout * L), np.float32)
    for lo in range(L):
        for k in range(K):
            li = lo + k - 1
            if 0 <= li < L:
                M[li * Cin:(li + 1) * Cin, lo::L] = ker[k]
    return M


def build_params(key, channels_mlp, channels_cnn, seq_len, d_pad,
                 base_width=32, num_classes=NUM_CLASSES):
    assert d_pad == 128, "packing assumes padded input width == HIDDEN[1] == 128"
    ki = iter(jax.random.split(key, 32))
    ones = lambda c: np.ones((1, c), np.float32)
    zeros = lambda c: np.zeros((1, c), np.float32)

    vec = _SlabPacker(1, jnp.float32)
    w16 = _SlabPacker(NC_PAD, jnp.bfloat16)
    w64 = _SlabPacker(64, jnp.bfloat16)
    w128 = _SlabPacker(d_pad, jnp.bfloat16)
    w256 = _SlabPacker(256, jnp.bfloat16)
    w512 = _SlabPacker(seq_len * base_width, jnp.bfloat16)
    s32 = _SlabPacker(GN_GROUPS, jnp.float32)

    # learnable_weight_time: Linear(1,128) -> SiLU -> Linear(128,1), VPU form.
    w, b = _dense_np(next(ki), 1, 128)
    vec.add('lwt_w1', w); vec.add('lwt_b1', b)
    w, b = _dense_np(next(ki), 128, 1)
    vec.add('lwt_w2', w.T); vec.add('lwt_b2', b)

    # Down block 0: channels_mlp -> 256
    w1, b1 = _dense_np(next(ki), channels_mlp, 256)
    w128.add('d0_w1', np.pad(w1, ((0, d_pad - channels_mlp), (0, 0))))
    vec.add('d0_b1', b1)
    w2, b2 = _dense_np(next(ki), 256, 256); w256.add('d0_w2', w2); vec.add('d0_b2', b2)
    w3, b3 = _dense_np(next(ki), 256, 256); w256.add('d0_w3', w3); vec.add('d0_b3', b3)
    vec.add('d0_g', ones(256)); vec.add('d0_be', zeros(256))

    # Down block 1: 256 -> 128
    w1, b1 = _dense_np(next(ki), 256, 128); w256.add('d1_w1', w1); vec.add('d1_b1', b1)
    w2, b2 = _dense_np(next(ki), 128, 128); w128.add('d1_w2', w2); vec.add('d1_b2', b2)
    w3, b3 = _dense_np(next(ki), 128, 128); w128.add('d1_w3', w3); vec.add('d1_b3', b3)
    vec.add('d1_g', ones(128)); vec.add('d1_be', zeros(128))

    # Bottleneck: 128 -> 64 -> 64
    w1, b1 = _dense_np(next(ki), 128, 64); w128.add('bn_w1', w1); vec.add('bn_b1', b1)
    vec.add('bn_g', ones(64)); vec.add('bn_be', zeros(64))
    w2, b2 = _dense_np(next(ki), 64, 64); w64.add('bn_w2', w2); vec.add('bn_b2', b2)

    # Up block 0: 64 -> 128 (lin2 over concat(norm, skip), single bias).
    w1, b1 = _dense_np(next(ki), 64, 128); w64.add('u0_w1', w1); vec.add('u0_b1', b1)
    w2, b2 = _dense_np(next(ki), 2 * 128, 128)
    w128.add('u0_w2a', w2[:128]); w128.add('u0_w2b', w2[128:]); vec.add('u0_b2', b2)
    w3, b3 = _dense_np(next(ki), 128, 128); w128.add('u0_w3', w3); vec.add('u0_b3', b3)
    vec.add('u0_g', ones(128)); vec.add('u0_be', zeros(128))
    wt, bt = _dense_np(next(ki), 1, 128); vec.add('u0_wt', wt); vec.add('u0_bt', bt)
    wc, bc = _dense_np(next(ki), num_classes, 128)
    w16.add('u0_wc', np.pad(wc, ((0, NC_PAD - num_classes), (0, 0))))
    vec.add('u0_bc', bc)

    # Up block 1: 128 -> 256
    w1, b1 = _dense_np(next(ki), 128, 256); w128.add('u1_w1', w1); vec.add('u1_b1', b1)
    w2, b2 = _dense_np(next(ki), 2 * 256, 256)
    w256.add('u1_w2a', w2[:256]); w256.add('u1_w2b', w2[256:]); vec.add('u1_b2', b2)
    w3, b3 = _dense_np(next(ki), 256, 256); w256.add('u1_w3', w3); vec.add('u1_b3', b3)
    vec.add('u1_g', ones(256)); vec.add('u1_be', zeros(256))
    wt, bt = _dense_np(next(ki), 1, 256); vec.add('u1_wt', wt); vec.add('u1_bt', bt)
    wc, bc = _dense_np(next(ki), num_classes, 256)
    w16.add('u1_wc', np.pad(wc, ((0, NC_PAD - num_classes), (0, 0))))
    vec.add('u1_bc', bc)

    # Out head: GN(32,256) -> SiLU -> Linear(256, channels_mlp)
    vec.add('out_g', ones(256)); vec.add('out_be', zeros(256))
    w, b = _dense_np(next(ki), 256, channels_mlp)
    w256.add('out_w', np.pad(w, ((0, 0), (0, d_pad - channels_mlp))))
    vec.add('out_b', np.pad(b, ((0, 0), (0, d_pad - channels_mlp))))

    # GroupNorm structural matrices: deduped per channel width, factored form.
    p_parts, p_off, row = [], {}, 0
    for c in (64, 128, 256):
        pool, scat = _gn_factored(c)
        p_off[c] = row
        p_parts.append(pool)
        row += c
        s32.add(c, scat)
    p_slab = jnp.asarray(np.concatenate(p_parts, axis=0), jnp.float32)

    # CNN branch stand-in (UNet1d source unavailable; Toeplitz-folded convs).
    C, L, W = channels_cnn, seq_len, base_width
    kc = jax.random.split(next(ki), 5)
    ker1 = np.asarray(jax.random.normal(kc[0], (3, C, W), jnp.float32)) * 0.05
    ker2 = np.asarray(jax.random.normal(kc[1], (3, W, W), jnp.float32)) * 0.05
    ker3 = np.asarray(jax.random.normal(kc[2], (3, W, C), jnp.float32)) * 0.05
    wt_c = np.asarray(jax.random.normal(kc[3], (1, W), jnp.float32)) * 0.05
    wc_c = np.asarray(jax.random.normal(kc[4], (num_classes, W), jnp.float32)) * 0.05

    w128.add('cnn_w1', np.pad(_toeplitz_first(ker1, L), ((0, d_pad - C * L), (0, 0))))
    vec.add('cnn_b1', zeros(L * W))
    w512.add('cnn_w2', _toeplitz_mid(ker2, L))
    vec.add('cnn_wt', np.tile(wt_c, (1, L)))
    w16.add('cnn_wc', np.pad(np.tile(wc_c, (1, L)), ((0, NC_PAD - num_classes), (0, 0))))
    vec.add('cnn_bmid', zeros(L * W))
    w512.add('cnn_w3', np.pad(_toeplitz_last(ker3, L), ((0, 0), (0, d_pad - C * L))))
    vec.add('cnn_b3', zeros(d_pad))

    arrays, meta = {}, {}
    for name, packer in (('vec', vec), ('w16', w16), ('w64', w64),
                         ('w128', w128), ('w256', w256), ('w512', w512),
                         ('s', s32)):
        arrays[name], meta[name] = packer.finalize()
    arrays['p'] = p_slab
    meta['p'] = p_off
    meta['dp'] = d_pad
    meta['w512_shape'] = tuple(arrays['w512'].shape)
    return arrays, meta


# ----------------------------------- forward -----------------------------------

def make_forward(meta):
    kernel = _make_kernel(meta)
    DP = meta['dp']

    def forward(arrays, x, t, y):
        B, C, L = x.shape
        D = C * L
        BP = _round_up(max(B, 8), 8)
        f32 = jnp.float32

        x_pad = jnp.zeros((BP, DP), f32).at[:B, :D].set(x.reshape(B, D).astype(f32))
        t_col = jnp.zeros((BP, 1), f32).at[:B, 0].set(t.astype(f32) / MAX_STEPS)
        y_oh = jnp.zeros((BP, NC_PAD), f32).at[:B, :NUM_CLASSES].set(
            jax.nn.one_hot(y, NUM_CLASSES, dtype=f32))

        vmem = pl.BlockSpec(memory_space=pltpu.MemorySpace.VMEM)
        hbm = pl.BlockSpec(memory_space=pl.ANY)
        args = (x_pad, t_col, y_oh, arrays['vec'], arrays['w16'], arrays['w64'],
                arrays['w128'], arrays['w256'], arrays['p'], arrays['s'],
                arrays['w512'])

        out_pad = pl.pallas_call(
            kernel,
            out_shape=jax.ShapeDtypeStruct((BP, DP), f32),
            in_specs=[vmem] * 10 + [hbm],
            out_specs=vmem,
            scratch_shapes=[
                pltpu.VMEM(meta['w512_shape'], jnp.bfloat16),
                pltpu.SemaphoreType.DMA(()),
            ],
            compiler_params=pltpu.CompilerParams(
                vmem_limit_bytes=16 * 1024 * 1024),
        )(*args)

        return out_pad[:B, :D].reshape(B, C, L)

    return forward


# ------------------------------------ main --------------------------------------

if __name__ == "__main__":
    B, C, L = 2, 4, 16           # channels_MLP = C*L = 64, channels_CNN = C = 4
    key = jax.random.PRNGKey(0)
    kx, kt, ky, kp = jax.random.split(key, 4)

    x = jax.random.normal(kx, (B, C, L), jnp.float32)
    t = jax.random.randint(kt, (B,), 0, int(MAX_STEPS)).astype(jnp.float32)
    y = jax.random.randint(ky, (B,), 0, NUM_CLASSES)

    arrays, meta = build_params(kp, channels_mlp=C * L, channels_cnn=C,
                                seq_len=L, d_pad=_round_up(C * L, 128),
                                base_width=32)

    fwd = jax.jit(make_forward(meta))
    out = jax.block_until_ready(fwd(arrays, x, t, y))

    assert out.shape == (B, C, L) and out.dtype == jnp.float32
    assert bool(jnp.all(jnp.isfinite(out)))
    print("KERNEL_OK")
</pallas_src>

<mosaic_0001>
module attributes {stable_mosaic.version = 11 : i64} {
  func.func @kernel(%arg0: memref<8x128xf32, #tpu.memory_space<vmem>>, %arg1: memref<8x1xf32, #tpu.memory_space<vmem>>, %arg2: memref<8x16xf32, #tpu.memory_space<vmem>>, %arg3: memref<1x8320xf32, #tpu.memory_space<vmem>>, %arg4: memref<16x896xbf16, #tpu.memory_space<vmem>>, %arg5: memref<64x256xbf16, #tpu.memory_space<vmem>>, %arg6: memref<128x1792xbf16, #tpu.memory_space<vmem>>, %arg7: memref<256x1536xbf16, #tpu.memory_space<vmem>>, %arg8: memref<448x32xf32, #tpu.memory_space<vmem>>, %arg9: memref<32x512xf32, #tpu.memory_space<vmem>>, %arg10: memref<512x640xbf16, #tpu.memory_space<any>>, %arg11: memref<8x128xf32, #tpu.memory_space<vmem>>, %arg12: memref<512x640xbf16, #tpu.memory_space<vmem>>, %arg13: memref<!tpu.dma_semaphore, #tpu.memory_space<semaphore_mem>>) attributes {dimension_semantics = [], scalar_prefetch = 0 : i64, scratch_operands = 2 : i64, tpu.core_type = #tpu.core_type<tc>} {
    tpu.enqueue_dma source(%arg10 : memref<512x640xbf16, #tpu.memory_space<any>>) target(%arg12 : memref<512x640xbf16, #tpu.memory_space<vmem>>) target_semaphore(%arg13 : memref<!tpu.dma_semaphore, #tpu.memory_space<semaphore_mem>>)
    %c0 = arith.constant 0 : index
    %c0_0 = arith.constant 0 : index
    %0 = vector.load %arg0[%c0, %c0_0] : memref<8x128xf32, #tpu.memory_space<vmem>>, vector<8x128xf32>
    %c0_1 = arith.constant 0 : index
    %c0_2 = arith.constant 0 : index
    %1 = vector.load %arg1[%c0_1, %c0_2] : memref<8x1xf32, #tpu.memory_space<vmem>>, vector<8x1xf32>
    %c0_3 = arith.constant 0 : index
    %c0_4 = arith.constant 0 : index
    %2 = vector.load %arg2[%c0_3, %c0_4] : memref<8x16xf32, #tpu.memory_space<vmem>>, vector<8x16xf32>
    %c0_5 = arith.constant 0 : index
    %c0_6 = arith.constant 0 : index
    %3 = vector.load %arg3[%c0_5, %c0_6] : memref<1x8320xf32, #tpu.memory_space<vmem>>, vector<1x128xf32>
    %4 = vector.broadcast %1 : vector<8x1xf32> to vector<8x128xf32>
    %5 = vector.broadcast %3 : vector<1x128xf32> to vector<8x128xf32>
    %6 = arith.mulf %4, %5 : vector<8x128xf32>
    %c0_7 = arith.constant 0 : index
    %c128 = arith.constant 128 : index
    %7 = vector.load %arg3[%c0_7, %c128] : memref<1x8320xf32, #tpu.memory_space<vmem>>, vector<1x128xf32>
    %8 = vector.broadcast %7 : vector<1x128xf32> to vector<8x128xf32>
    %9 = arith.addf %6, %8 : vector<8x128xf32>
    %cst = arith.constant 0.000000e+00 : f32
    %10 = vector.broadcast %cst : f32 to vector<8x128xf32>
    %11 = arith.subf %10, %9 : vector<8x128xf32>
    %12 = math.exp %11 : vector<8x128xf32>
    %cst_8 = arith.constant 1.000000e+00 : f32
    %13 = vector.broadcast %cst_8 : f32 to vector<8x128xf32>
    %14 = arith.addf %13, %12 : vector<8x128xf32>
    %15 = tpu.reciprocal %14 {approx = true} : vector<8x128xf32> -> vector<8x128xf32>
    %16 = arith.mulf %9, %15 : vector<8x128xf32>
    %c0_9 = arith.constant 0 : index
    %c256 = arith.constant 256 : index
    %17 = vector.load %arg3[%c0_9, %c256] : memref<1x8320xf32, #tpu.memory_space<vmem>>, vector<1x128xf32>
    %18 = vector.broadcast %17 : vector<1x128xf32> to vector<8x128xf32>
    %19 = arith.mulf %16, %18 : vector<8x128xf32>
    %cst_10 = arith.constant dense<0.000000e+00> : vector<8xf32>
    %20 = vector.multi_reduction <add>, %19, %cst_10 [1] : vector<8x128xf32> to vector<8xf32>
    %21 = vector.shape_cast %20 : vector<8xf32> to vector<8x1xf32>
    %c0_11 = arith.constant 0 : index
    %c384 = arith.constant 384 : index
    %22 = vector.load %arg3[%c0_11, %c384] : memref<1x8320xf32, #tpu.memory_space<vmem>>, vector<1x1xf32>
    %23 = vector.broadcast %22 : vector<1x1xf32> to vector<8x1xf32>
    %24 = arith.addf %21, %23 : vector<8x1xf32>
    %cst_12 = arith.constant 0.000000e+00 : f32
    %25 = vector.broadcast %cst_12 : f32 to vector<8x1xf32>
    %26 = arith.subf %25, %24 : vector<8x1xf32>
    %27 = math.exp %26 : vector<8x1xf32>
    %cst_13 = arith.constant 1.000000e+00 : f32
    %28 = vector.broadcast %cst_13 : f32 to vector<8x1xf32>
    %29 = arith.addf %28, %27 : vector<8x1xf32>
    %cst_14 = arith.constant 1.000000e+00 : f32
    %30 = vector.broadcast %cst_14 : f32 to vector<8x1xf32>
    %31 = arith.divf %30, %29 : vector<8x1xf32>
    %32 = arith.truncf %0 : vector<8x128xf32> to vector<8x128xbf16>
    %c0_15 = arith.constant 0 : index
    %c0_16 = arith.constant 0 : index
    %33 = vector.load %arg6[%c0_15, %c0_16] : memref<128x1792xbf16, #tpu.memory_space<vmem>>, vector<128x256xbf16>
    %cst_17 = arith.constant dense<0.000000e+00> : vector<8x256xf32>
    %34 = tpu.matmul %32, %33, %cst_17 {dimension_numbers = #tpu.dot_dimension_numbers<[1], [0], [0], [1], [0, 0, 1, 1], [], []>} : vector<8x128xbf16>, vector<128x256xbf16>, vector<8x256xf32> -> vector<8x256xf32>
    %c0_18 = arith.constant 0 : index
    %c512 = arith.constant 512 : index
    %35 = vector.load %arg3[%c0_18, %c512] : memref<1x8320xf32, #tpu.memory_space<vmem>>, vector<1x256xf32>
    %36 = vector.broadcast %35 : vector<1x256xf32> to vector<8x256xf32>
    %37 = arith.addf %34, %36 : vector<8x256xf32>
    %cst_19 = arith.constant 0.000000e+00 : f32
    %38 = vector.broadcast %cst_19 : f32 to vector<8x256xf32>
    %39 = arith.subf %38, %37 : vector<8x256xf32>
    %40 = math.exp %39 : vector<8x256xf32>
    %cst_20 = arith.constant 1.000000e+00 : f32
    %41 = vector.broadcast %cst_20 : f32 to vector<8x256xf32>
    %42 = arith.addf %41, %40 : vector<8x256xf32>
    %43 = tpu.reciprocal %42 {approx = true} : vector<8x256xf32> -> vector<8x256xf32>
    %44 = arith.mulf %37, %43 : vector<8x256xf32>
    %45 = arith.truncf %44 : vector<8x256xf32> to vector<8x256xbf16>
    %c0_21 = arith.constant 0 : index
    %c0_22 = arith.constant 0 : index
    %46 = vector.load %arg7[%c0_21, %c0_22] : memref<256x1536xbf16, #tpu.memory_space<vmem>>, vector<256x256xbf16>
    %cst_23 = arith.constant dense<0.000000e+00> : vector<8x256xf32>
    %47 = tpu.matmul %45, %46, %cst_23 {dimension_numbers = #tpu.dot_dimension_numbers<[1], [0], [0], [1], [0, 0, 1, 1], [], []>} : vector<8x256xbf16>, vector<256x256xbf16>, vector<8x256xf32> -> vector<8x256xf32>
    %c0_24 = arith.constant 0 : index
    %c768 = arith.constant 768 : index
    %48 = vector.load %arg3[%c0_24, %c768] : memref<1x8320xf32, #tpu.memory_space<vmem>>, vector<1x256xf32>
    %49 = vector.broadcast %48 : vector<1x256xf32> to vector<8x256xf32>
    %50 = arith.addf %47, %49 : vector<8x256xf32>
    %cst_25 = arith.constant 0.000000e+00 : f32
    %51 = vector.broadcast %cst_25 : f32 to vector<8x256xf32>
    %52 = arith.subf %51, %50 : vector<8x256xf32>
    %53 = math.exp %52 : vector<8x256xf32>
    %cst_26 = arith.constant 1.000000e+00 : f32
    %54 = vector.broadcast %cst_26 : f32 to vector<8x256xf32>
    %55 = arith.addf %54, %53 : vector<8x256xf32>
    %56 = tpu.reciprocal %55 {approx = true} : vector<8x256xf32> -> vector<8x256xf32>
    %57 = arith.mulf %50, %56 : vector<8x256xf32>
    %c192 = arith.constant 192 : index
    %c0_27 = arith.constant 0 : index
    %58 = vector.load %arg8[%c192, %c0_27] : memref<448x32xf32, #tpu.memory_space<vmem>>, vector<256x32xf32>
    %c0_28 = arith.constant 0 : index
    %c256_29 = arith.constant 256 : index
    %59 = vector.load %arg9[%c0_28, %c256_29] : memref<32x512xf32, #tpu.memory_space<vmem>>, vector<32x256xf32>
    %cst_30 = arith.constant dense<0.000000e+00> : vector<8x32xf32>
    %60 = tpu.matmul %57, %58, %cst_30 {dimension_numbers = #tpu.dot_dimension_numbers<[1], [0], [0], [1], [0, 0, 1, 1], [], []>} : vector<8x256xf32>, vector<256x32xf32>, vector<8x32xf32> -> vector<8x32xf32>
    %cst_31 = arith.constant dense<0.000000e+00> : vector<8x256xf32>
    %61 = tpu.matmul %60, %59, %cst_31 {dimension_numbers = #tpu.dot_dimension_numbers<[1], [0], [0], [1], [0, 0, 1, 1], [], []>} : vector<8x32xf32>, vector<32x256xf32>, vector<8x256xf32> -> vector<8x256xf32>
    %62 = arith.subf %57, %61 : vector<8x256xf32>
    %63 = arith.mulf %62, %62 : vector<8x256xf32>
    %cst_32 = arith.constant dense<0.000000e+00> : vector<8x32xf32>
    %64 = tpu.matmul %63, %58, %cst_32 {dimension_numbers = #tpu.dot_dimension_numbers<[1], [0], [0], [1], [0, 0, 1, 1], [], []>} : vector<8x256xf32>, vector<256x32xf32>, vector<8x32xf32> -> vector<8x32xf32>
    %cst_33 = arith.constant dense<0.000000e+00> : vector<8x256xf32>
    %65 = tpu.matmul %64, %59, %cst_33 {dimension_numbers = #tpu.dot_dimension_numbers<[1], [0], [0], [1], [0, 0, 1, 1], [], []>} : vector<8x32xf32>, vector<32x256xf32>, vector<8x256xf32> -> vector<8x256xf32>
    %cst_34 = arith.constant 9.99999974E-6 : f32
    %66 = vector.broadcast %cst_34 : f32 to vector<8x256xf32>
    %67 = arith.addf %65, %66 : vector<8x256xf32>
    %68 = math.rsqrt %67 : vector<8x256xf32>
    %69 = arith.mulf %62, %68 : vector<8x256xf32>
    %c0_35 = arith.constant 0 : index
    %c1280 = arith.constant 1280 : index
    %70 = vector.load %arg3[%c0_35, %c1280] : memref<1x8320xf32, #tpu.memory_space<vmem>>, vector<1x256xf32>
    %71 = vector.broadcast %70 : vector<1x256xf32> to vector<8x256xf32>
    %72 = arith.mulf %69, %71 : vector<8x256xf32>
    %c0_36 = arith.constant 0 : index
    %c1536 = arith.constant 1536 : index
    %73 = vector.load %arg3[%c0_36, %c1536] : memref<1x8320xf32, #tpu.memory_space<vmem>>, vector<1x256xf32>
    %74 = vector.broadcast %73 : vector<1x256xf32> to vector<8x256xf32>
    %75 = arith.addf %72, %74 : vector<8x256xf32>
    %76 = arith.truncf %75 : vector<8x256xf32> to vector<8x256xbf16>
    %c0_37 = arith.constant 0 : index
    %c256_38 = arith.constant 256 : index
    %77 = vector.load %arg7[%c0_37, %c256_38] : memref<256x1536xbf16, #tpu.memory_space<vmem>>, vector<256x256xbf16>
    %cst_39 = arith.constant dense<0.000000e+00> : vector<8x256xf32>
    %78 = tpu.matmul %76, %77, %cst_39 {dimension_numbers = #tpu.dot_dimension_numbers<[1], [0], [0], [1], [0, 0, 1, 1], [], []>} : vector<8x256xbf16>, vector<256x256xbf16>, vector<8x256xf32> -> vector<8x256xf32>
    %c0_40 = arith.constant 0 : index
    %c1024 = arith.constant 1024 : index
    %79 = vector.load %arg3[%c0_40, %c1024] : memref<1x8320xf32, #tpu.memory_space<vmem>>, vector<1x256xf32>
    %80 = vector.broadcast %79 : vector<1x256xf32> to vector<8x256xf32>
    %81 = arith.addf %78, %80 : vector<8x256xf32>
    %cst_41 = arith.constant 0.000000e+00 : f32
    %82 = vector.broadcast %cst_41 : f32 to vector<8x256xf32>
    %83 = arith.subf %82, %81 : vector<8x256xf32>
    %84 = math.exp %83 : vector<8x256xf32>
    %cst_42 = arith.constant 1.000000e+00 : f32
    %85 = vector.broadcast %cst_42 : f32 to vector<8x256xf32>
    %86 = arith.addf %85, %84 : vector<8x256xf32>
    %87 = tpu.reciprocal %86 {approx = true} : vector<8x256xf32> -> vector<8x256xf32>
    %88 = arith.mulf %81, %87 : vector<8x256xf32>
    %89 = arith.addf %44, %88 : vector<8x256xf32>
    %90 = arith.truncf %89 : vector<8x256xf32> to vector<8x256xbf16>
    %c0_43 = arith.constant 0 : index
    %c512_44 = arith.constant 512 : index
    %91 = vector.load %arg7[%c0_43, %c512_44] : memref<256x1536xbf16, #tpu.memory_space<vmem>>, vector<256x128xbf16>
    %cst_45 = arith.constant dense<0.000000e+00> : vector<8x128xf32>
    %92 = tpu.matmul %90, %91, %cst_45 {dimension_numbers = #tpu.dot_dimension_numbers<[1], [0], [0], [1], [0, 0, 1, 1], [], []>} : vector<8x256xbf16>, vector<256x128xbf16>, vector<8x128xf32> -> vector<8x128xf32>
    %c0_46 = arith.constant 0 : index
    %c1792 = arith.constant 1792 : index
    %93 = vector.load %arg3[%c0_46, %c1792] : memref<1x8320xf32, #tpu.memory_space<vmem>>, vector<1x128xf32>
    %94 = vector.broadcast %93 : vector<1x128xf32> to vector<8x128xf32>
    %95 = arith.addf %92, %94 : vector<8x128xf32>
    %cst_47 = arith.constant 0.000000e+00 : f32
    %96 = vector.broadcast %cst_47 : f32 to vector<8x128xf32>
    %97 = arith.subf %96, %95 : vector<8x128xf32>
    %98 = math.exp %97 : vector<8x128xf32>
    %cst_48 = arith.constant 1.000000e+00 : f32
    %99 = vector.broadcast %cst_48 : f32 to vector<8x128xf32>
    %100 = arith.addf %99, %98 : vector<8x128xf32>
    %101 = tpu.reciprocal %100 {approx = true} : vector<8x128xf32> -> vector<8x128xf32>
    %102 = arith.mulf %95, %101 : vector<8x128xf32>
    %103 = arith.truncf %102 : vector<8x128xf32> to vector<8x128xbf16>
    %c0_49 = arith.constant 0 : index
    %c256_50 = arith.constant 256 : index
    %104 = vector.load %arg6[%c0_49, %c256_50] : memref<128x1792xbf16, #tpu.memory_space<vmem>>, vector<128x128xbf16>
    %cst_51 = arith.constant dense<0.000000e+00> : vector<8x128xf32>
    %105 = tpu.matmul %103, %104, %cst_51 {dimension_numbers = #tpu.dot_dimension_numbers<[1], [0], [0], [1], [0, 0, 1, 1], [], []>} : vector<8x128xbf16>, vector<128x128xbf16>, vector<8x128xf32> -> vector<8x128xf32>
    %c0_52 = arith.constant 0 : index
    %c1920 = arith.constant 1920 : index
    %106 = vector.load %arg3[%c0_52, %c1920] : memref<1x8320xf32, #tpu.memory_space<vmem>>, vector<1x128xf32>
    %107 = vector.broadcast %106 : vector<1x128xf32> to vector<8x128xf32>
    %108 = arith.addf %105, %107 : vector<8x128xf32>
    %cst_53 = arith.constant 0.000000e+00 : f32
    %109 = vector.broadcast %cst_53 : f32 to vector<8x128xf32>
    %110 = arith.subf %109, %108 : vector<8x128xf32>
    %111 = math.exp %110 : vector<8x128xf32>
    %cst_54 = arith.constant 1.000000e+00 : f32
    %112 = vector.broadcast %cst_54 : f32 to vector<8x128xf32>
    %113 = arith.addf %112, %111 : vector<8x128xf32>
    %114 = tpu.reciprocal %113 {approx = true} : vector<8x128xf32> -> vector<8x128xf32>
    %115 = arith.mulf %108, %114 : vector<8x128xf32>
    %c64 = arith.constant 64 : index
    %c0_55 = arith.constant 0 : index
    %116 = vector.load %arg8[%c64, %c0_55] : memref<448x32xf32, #tpu.memory_space<vmem>>, vector<128x32xf32>
    %c0_56 = arith.constant 0 : index
    %c128_57 = arith.constant 128 : index
    %117 = vector.load %arg9[%c0_56, %c128_57] : memref<32x512xf32, #tpu.memory_space<vmem>>, vector<32x128xf32>
    %cst_58 = arith.constant dense<0.000000e+00> : vector<8x32xf32>
    %118 = tpu.matmul %115, %116, %cst_58 {dimension_numbers = #tpu.dot_dimension_numbers<[1], [0], [0], [1], [0, 0, 1, 1], [], []>} : vector<8x128xf32>, vector<128x32xf32>, vector<8x32xf32> -> vector<8x32xf32>
    %cst_59 = arith.constant dense<0.000000e+00> : vector<8x128xf32>
    %119 = tpu.matmul %118, %117, %cst_59 {dimension_numbers = #tpu.dot_dimension_numbers<[1], [0], [0], [1], [0, 0, 1, 1], [], []>} : vector<8x32xf32>, vector<32x128xf32>, vector<8x128xf32> -> vector<8x128xf32>
    %120 = arith.subf %115, %119 : vector<8x128xf32>
    %121 = arith.mulf %120, %120 : vector<8x128xf32>
    %cst_60 = arith.constant dense<0.000000e+00> : vector<8x32xf32>
    %122 = tpu.matmul %121, %116, %cst_60 {dimension_numbers = #tpu.dot_dimension_numbers<[1], [0], [0], [1], [0, 0, 1, 1], [], []>} : vector<8x128xf32>, vector<128x32xf32>, vector<8x32xf32> -> vector<8x32xf32>
    %cst_61 = arith.constant dense<0.000000e+00> : vector<8x128xf32>
    %123 = tpu.matmul %122, %117, %cst_61 {dimension_numbers = #tpu.dot_dimension_numbers<[1], [0], [0], [1], [0, 0, 1, 1], [], []>} : vector<8x32xf32>, vector<32x128xf32>, vector<8x128xf32> -> vector<8x128xf32>
    %cst_62 = arith.constant 9.99999974E-6 : f32
    %124 = vector.broadcast %cst_62 : f32 to vector<8x128xf32>
    %125 = arith.addf %123, %124 : vector<8x128xf32>
    %126 = math.rsqrt %125 : vector<8x128xf32>
    %127 = arith.mulf %120, %126 : vector<8x128xf32>
    %c0_63 = arith.constant 0 : index
    %c2176 = arith.constant 2176 : index
    %128 = vector.load %arg3[%c0_63, %c2176] : memref<1x8320xf32, #tpu.memory_space<vmem>>, vector<1x128xf32>
    %129 = vector.broadcast %128 : vector<1x128xf32> to vector<8x128xf32>
    %130 = arith.mulf %127, %129 : vector<8x128xf32>
    %c0_64 = arith.constant 0 : index
    %c2304 = arith.constant 2304 : index
    %131 = vector.load %arg3[%c0_64, %c2304] : memref<1x8320xf32, #tpu.memory_space<vmem>>, vector<1x128xf32>
    %132 = vector.broadcast %131 : vector<1x128xf32> to vector<8x128xf32>
    %133 = arith.addf %130, %132 : vector<8x128xf32>
    %134 = arith.truncf %133 : vector<8x128xf32> to vector<8x128xbf16>
    %c0_65 = arith.constant 0 : index
    %c384_66 = arith.constant 384 : index
    %135 = vector.load %arg6[%c0_65, %c384_66] : memref<128x1792xbf16, #tpu.memory_space<vmem>>, vector<128x128xbf16>
    %cst_67 = arith.constant dense<0.000000e+00> : vector<8x128xf32>
    %136 = tpu.matmul %134, %135, %cst_67 {dimension_numbers = #tpu.dot_dimension_numbers<[1], [0], [0], [1], [0, 0, 1, 1], [], []>} : vector<8x128xbf16>, vector<128x128xbf16>, vector<8x128xf32> -> vector<8x128xf32>
    %c0_68 = arith.constant 0 : index
    %c2048 = arith.constant 2048 : index
    %137 = vector.load %arg3[%c0_68, %c2048] : memref<1x8320xf32, #tpu.memory_space<vmem>>, vector<1x128xf32>
    %138 = vector.broadcast %137 : vector<1x128xf32> to vector<8x128xf32>
    %139 = arith.addf %136, %138 : vector<8x128xf32>
    %cst_69 = arith.constant 0.000000e+00 : f32
    %140 = vector.broadcast %cst_69 : f32 to vector<8x128xf32>
    %141 = arith.subf %140, %139 : vector<8x128xf32>
    %142 = math.exp %141 : vector<8x128xf32>
    %cst_70 = arith.constant 1.000000e+00 : f32
    %143 = vector.broadcast %cst_70 : f32 to vector<8x128xf32>
    %144 = arith.addf %143, %142 : vector<8x128xf32>
    %145 = tpu.reciprocal %144 {approx = true} : vector<8x128xf32> -> vector<8x128xf32>
    %146 = arith.mulf %139, %145 : vector<8x128xf32>
    %147 = arith.addf %102, %146 : vector<8x128xf32>
    %148 = arith.truncf %147 : vector<8x128xf32> to vector<8x128xbf16>
    %c0_71 = arith.constant 0 : index
    %c512_72 = arith.constant 512 : index
    %149 = vector.load %arg6[%c0_71, %c512_72] : memref<128x1792xbf16, #tpu.memory_space<vmem>>, vector<128x64xbf16>
    %cst_73 = arith.constant dense<0.000000e+00> : vector<8x64xf32>
    %150 = tpu.matmul %148, %149, %cst_73 {dimension_numbers = #tpu.dot_dimension_numbers<[1], [0], [0], [1], [0, 0, 1, 1], [], []>} : vector<8x128xbf16>, vector<128x64xbf16>, vector<8x64xf32> -> vector<8x64xf32>
    %c0_74 = arith.constant 0 : index
    %c2432 = arith.constant 2432 : index
    %151 = vector.load %arg3[%c0_74, %c2432] : memref<1x8320xf32, #tpu.memory_space<vmem>>, vector<1x64xf32>
    %152 = vector.broadcast %151 : vector<1x64xf32> to vector<8x64xf32>
    %153 = arith.addf %150, %152 : vector<8x64xf32>
    %c0_75 = arith.constant 0 : index
    %c0_76 = arith.constant 0 : index
    %154 = vector.load %arg8[%c0_75, %c0_76] : memref<448x32xf32, #tpu.memory_space<vmem>>, vector<64x32xf32>
    %c0_77 = arith.constant 0 : index
    %c0_78 = arith.constant 0 : index
    %155 = vector.load %arg9[%c0_77, %c0_78] : memref<32x512xf32, #tpu.memory_space<vmem>>, vector<32x64xf32>
    %cst_79 = arith.constant dense<0.000000e+00> : vector<8x32xf32>
    %156 = tpu.matmul %153, %154, %cst_79 {dimension_numbers = #tpu.dot_dimension_numbers<[1], [0], [0], [1], [0, 0, 1, 1], [], []>} : vector<8x64xf32>, vector<64x32xf32>, vector<8x32xf32> -> vector<8x32xf32>
    %cst_80 = arith.constant dense<0.000000e+00> : vector<8x64xf32>
    %157 = tpu.matmul %156, %155, %cst_80 {dimension_numbers = #tpu.dot_dimension_numbers<[1], [0], [0], [1], [0, 0, 1, 1], [], []>} : vector<8x32xf32>, vector<32x64xf32>, vector<8x64xf32> -> vector<8x64xf32>
    %158 = arith.subf %153, %157 : vector<8x64xf32>
    %159 = arith.mulf %158, %158 : vector<8x64xf32>
    %cst_81 = arith.constant dense<0.000000e+00> : vector<8x32xf32>
    %160 = tpu.matmul %159, %154, %cst_81 {dimension_numbers = #tpu.dot_dimension_numbers<[1], [0], [0], [1], [0, 0, 1, 1], [], []>} : vector<8x64xf32>, vector<64x32xf32>, vector<8x32xf32> -> vector<8x32xf32>
    %cst_82 = arith.constant dense<0.000000e+00> : vector<8x64xf32>
    %161 = tpu.matmul %160, %155, %cst_82 {dimension_numbers = #tpu.dot_dimension_numbers<[1], [0], [0], [1], [0, 0, 1, 1], [], []>} : vector<8x32xf32>, vector<32x64xf32>, vector<8x64xf32> -> vector<8x64xf32>
    %cst_83 = arith.constant 9.99999974E-6 : f32
    %162 = vector.broadcast %cst_83 : f32 to vector<8x64xf32>
    %163 = arith.addf %161, %162 : vector<8x64xf32>
    %164 = math.rsqrt %163 : vector<8x64xf32>
    %165 = arith.mulf %158, %164 : vector<8x64xf32>
    %c0_84 = arith.constant 0 : index
    %c2560 = arith.constant 2560 : index
    %166 = vector.load %arg3[%c0_84, %c2560] : memref<1x8320xf32, #tpu.memory_space<vmem>>, vector<1x64xf32>
    %167 = vector.broadcast %166 : vector<1x64xf32> to vector<8x64xf32>
    %168 = arith.mulf %165, %167 : vector<8x64xf32>
    %c0_85 = arith.constant 0 : index
    %c2688 = arith.constant 2688 : index
    %169 = vector.load %arg3[%c0_85, %c2688] : memref<1x8320xf32, #tpu.memory_space<vmem>>, vector<1x64xf32>
    %170 = vector.broadcast %169 : vector<1x64xf32> to vector<8x64xf32>
    %171 = arith.addf %168, %170 : vector<8x64xf32>
    %cst_86 = arith.constant 0.000000e+00 : f32
    %172 = vector.broadcast %cst_86 : f32 to vector<8x64xf32>
    %173 = arith.subf %172, %171 : vector<8x64xf32>
    %174 = math.exp %173 : vector<8x64xf32>
    %cst_87 = arith.constant 1.000000e+00 : f32
    %175 = vector.broadcast %cst_87 : f32 to vector<8x64xf32>
    %176 = arith.addf %175, %174 : vector<8x64xf32>
    %177 = tpu.reciprocal %176 {approx = true} : vector<8x64xf32> -> vector<8x64xf32>
    %178 = arith.mulf %171, %177 : vector<8x64xf32>
    %179 = arith.truncf %178 : vector<8x64xf32> to vector<8x64xbf16>
    %c0_88 = arith.constant 0 : index
    %c0_89 = arith.constant 0 : index
    %180 = vector.load %arg5[%c0_88, %c0_89] : memref<64x256xbf16, #tpu.memory_space<vmem>>, vector<64x64xbf16>
    %cst_90 = arith.constant dense<0.000000e+00> : vector<8x64xf32>
    %181 = tpu.matmul %179, %180, %cst_90 {dimension_numbers = #tpu.dot_dimension_numbers<[1], [0], [0], [1], [0, 0, 1, 1], [], []>} : vector<8x64xbf16>, vector<64x64xbf16>, vector<8x64xf32> -> vector<8x64xf32>
    %c0_91 = arith.constant 0 : index
    %c2816 = arith.constant 2816 : index
    %182 = vector.load %arg3[%c0_91, %c2816] : memref<1x8320xf32, #tpu.memory_space<vmem>>, vector<1x64xf32>
    %183 = vector.broadcast %182 : vector<1x64xf32> to vector<8x64xf32>
    %184 = arith.addf %181, %183 : vector<8x64xf32>
    %cst_92 = arith.constant 0.000000e+00 : f32
    %185 = vector.broadcast %cst_92 : f32 to vector<8x64xf32>
    %186 = arith.subf %185, %184 : vector<8x64xf32>
    %187 = math.exp %186 : vector<8x64xf32>
    %cst_93 = arith.constant 1.000000e+00 : f32
    %188 = vector.broadcast %cst_93 : f32 to vector<8x64xf32>
    %189 = arith.addf %188, %187 : vector<8x64xf32>
    %190 = tpu.reciprocal %189 {approx = true} : vector<8x64xf32> -> vector<8x64xf32>
    %191 = arith.mulf %184, %190 : vector<8x64xf32>
    %192 = arith.truncf %191 : vector<8x64xf32> to vector<8x64xbf16>
    %c0_94 = arith.constant 0 : index
    %c128_95 = arith.constant 128 : index
    %193 = vector.load %arg5[%c0_94, %c128_95] : memref<64x256xbf16, #tpu.memory_space<vmem>>, vector<64x128xbf16>
    %cst_96 = arith.constant dense<0.000000e+00> : vector<8x128xf32>
    %194 = tpu.matmul %192, %193, %cst_96 {dimension_numbers = #tpu.dot_dimension_numbers<[1], [0], [0], [1], [0, 0, 1, 1], [], []>} : vector<8x64xbf16>, vector<64x128xbf16>, vector<8x128xf32> -> vector<8x128xf32>
    %c0_97 = arith.constant 0 : index
    %c2944 = arith.constant 2944 : index
    %195 = vector.load %arg3[%c0_97, %c2944] : memref<1x8320xf32, #tpu.memory_space<vmem>>, vector<1x128xf32>
    %196 = vector.broadcast %195 : vector<1x128xf32> to vector<8x128xf32>
    %197 = arith.addf %194, %196 : vector<8x128xf32>
    %cst_98 = arith.constant 0.000000e+00 : f32
    %198 = vector.broadcast %cst_98 : f32 to vector<8x128xf32>
    %199 = arith.subf %198, %197 : vector<8x128xf32>
    %200 = math.exp %199 : vector<8x128xf32>
    %cst_99 = arith.constant 1.000000e+00 : f32
    %201 = vector.broadcast %cst_99 : f32 to vector<8x128xf32>
    %202 = arith.addf %201, %200 : vector<8x128xf32>
    %203 = tpu.reciprocal %202 {approx = true} : vector<8x128xf32> -> vector<8x128xf32>
    %204 = arith.mulf %197, %203 : vector<8x128xf32>
    %c64_100 = arith.constant 64 : index
    %c0_101 = arith.constant 0 : index
    %205 = vector.load %arg8[%c64_100, %c0_101] : memref<448x32xf32, #tpu.memory_space<vmem>>, vector<128x32xf32>
    %c0_102 = arith.constant 0 : index
    %c128_103 = arith.constant 128 : index
    %206 = vector.load %arg9[%c0_102, %c128_103] : memref<32x512xf32, #tpu.memory_space<vmem>>, vector<32x128xf32>
    %cst_104 = arith.constant dense<0.000000e+00> : vector<8x32xf32>
    %207 = tpu.matmul %204, %205, %cst_104 {dimension_numbers = #tpu.dot_dimension_numbers<[1], [0], [0], [1], [0, 0, 1, 1], [], []>} : vector<8x128xf32>, vector<128x32xf32>, vector<8x32xf32> -> vector<8x32xf32>
    %cst_105 = arith.constant dense<0.000000e+00> : vector<8x128xf32>
    %208 = tpu.matmul %207, %206, %cst_105 {dimension_numbers = #tpu.dot_dimension_numbers<[1], [0], [0], [1], [0, 0, 1, 1], [], []>} : vector<8x32xf32>, vector<32x128xf32>, vector<8x128xf32> -> vector<8x128xf32>
    %209 = arith.subf %204, %208 : vector<8x128xf32>
    %210 = arith.mulf %209, %209 : vector<8x128xf32>
    %cst_106 = arith.constant dense<0.000000e+00> : vector<8x32xf32>
    %211 = tpu.matmul %210, %205, %cst_106 {dimension_numbers = #tpu.dot_dimension_numbers<[1], [0], [0], [1], [0, 0, 1, 1], [], []>} : vector<8x128xf32>, vector<128x32xf32>, vector<8x32xf32> -> vector<8x32xf32>
    %cst_107 = arith.constant dense<0.000000e+00> : vector<8x128xf32>
    %212 = tpu.matmul %211, %206, %cst_107 {dimension_numbers = #tpu.dot_dimension_numbers<[1], [0], [0], [1], [0, 0, 1, 1], [], []>} : vector<8x32xf32>, vector<32x128xf32>, vector<8x128xf32> -> vector<8x128xf32>
    %cst_108 = arith.constant 9.99999974E-6 : f32
    %213 = vector.broadcast %cst_108 : f32 to vector<8x128xf32>
    %214 = arith.addf %212, %213 : vector<8x128xf32>
    %215 = math.rsqrt %214 : vector<8x128xf32>
    %216 = arith.mulf %209, %215 : vector<8x128xf32>
    %c0_109 = arith.constant 0 : index
    %c3328 = arith.constant 3328 : index
    %217 = vector.load %arg3[%c0_109, %c3328] : memref<1x8320xf32, #tpu.memory_space<vmem>>, vector<1x128xf32>
    %218 = vector.broadcast %217 : vector<1x128xf32> to vector<8x128xf32>
    %219 = arith.mulf %216, %218 : vector<8x128xf32>
    %c0_110 = arith.constant 0 : index
    %c3456 = arith.constant 3456 : index
    %220 = vector.load %arg3[%c0_110, %c3456] : memref<1x8320xf32, #tpu.memory_space<vmem>>, vector<1x128xf32>
    %221 = vector.broadcast %220 : vector<1x128xf32> to vector<8x128xf32>
    %222 = arith.addf %219, %221 : vector<8x128xf32>
    %223 = arith.truncf %222 : vector<8x128xf32> to vector<8x128xbf16>
    %c0_111 = arith.constant 0 : index
    %c640 = arith.constant 640 : index
    %224 = vector.load %arg6[%c0_111, %c640] : memref<128x1792xbf16, #tpu.memory_space<vmem>>, vector<128x128xbf16>
    %cst_112 = arith.constant dense<0.000000e+00> : vector<8x128xf32>
    %225 = tpu.matmul %223, %224, %cst_112 {dimension_numbers = #tpu.dot_dimension_numbers<[1], [0], [0], [1], [0, 0, 1, 1], [], []>} : vector<8x128xbf16>, vector<128x128xbf16>, vector<8x128xf32> -> vector<8x128xf32>
    %226 = arith.truncf %115 : vector<8x128xf32> to vector<8x128xbf16>
    %c0_113 = arith.constant 0 : index
    %c768_114 = arith.constant 768 : index
    %227 = vector.load %arg6[%c0_113, %c768_114] : memref<128x1792xbf16, #tpu.memory_space<vmem>>, vector<128x128xbf16>
    %cst_115 = arith.constant dense<0.000000e+00> : vector<8x128xf32>
    %228 = tpu.matmul %226, %227, %cst_115 {dimension_numbers = #tpu.dot_dimension_numbers<[1], [0], [0], [1], [0, 0, 1, 1], [], []>} : vector<8x128xbf16>, vector<128x128xbf16>, vector<8x128xf32> -> vector<8x128xf32>
    %229 = arith.addf %225, %228 : vector<8x128xf32>
    %c0_116 = arith.constant 0 : index
    %c3072 = arith.constant 3072 : index
    %230 = vector.load %arg3[%c0_116, %c3072] : memref<1x8320xf32, #tpu.memory_space<vmem>>, vector<1x128xf32>
    %231 = vector.broadcast %230 : vector<1x128xf32> to vector<8x128xf32>
    %232 = arith.addf %229, %231 : vector<8x128xf32>
    %cst_117 = arith.constant 0.000000e+00 : f32
    %233 = vector.broadcast %cst_117 : f32 to vector<8x128xf32>
    %234 = arith.subf %233, %232 : vector<8x128xf32>
    %235 = math.exp %234 : vector<8x128xf32>
    %cst_118 = arith.constant 1.000000e+00 : f32
    %236 = vector.broadcast %cst_118 : f32 to vector<8x128xf32>
    %237 = arith.addf %236, %235 : vector<8x128xf32>
    %238 = tpu.reciprocal %237 {approx = true} : vector<8x128xf32> -> vector<8x128xf32>
    %239 = arith.mulf %232, %238 : vector<8x128xf32>
    %c0_119 = arith.constant 0 : index
    %c3584 = arith.constant 3584 : index
    %240 = vector.load %arg3[%c0_119, %c3584] : memref<1x8320xf32, #tpu.memory_space<vmem>>, vector<1x128xf32>
    %241 = vector.broadcast %1 : vector<8x1xf32> to vector<8x128xf32>
    %242 = vector.broadcast %240 : vector<1x128xf32> to vector<8x128xf32>
    %243 = arith.mulf %241, %242 : vector<8x128xf32>
    %c0_120 = arith.constant 0 : index
    %c3712 = arith.constant 3712 : index
    %244 = vector.load %arg3[%c0_120, %c3712] : memref<1x8320xf32, #tpu.memory_space<vmem>>, vector<1x128xf32>
    %245 = vector.broadcast %244 : vector<1x128xf32> to vector<8x128xf32>
    %246 = arith.addf %243, %245 : vector<8x128xf32>
    %247 = arith.truncf %2 : vector<8x16xf32> to vector<8x16xbf16>
    %c0_121 = arith.constant 0 : index
    %c0_122 = arith.constant 0 : index
    %248 = vector.load %arg4[%c0_121, %c0_122] : memref<16x896xbf16, #tpu.memory_space<vmem>>, vector<16x128xbf16>
    %cst_123 = arith.constant dense<0.000000e+00> : vector<8x128xf32>
    %249 = tpu.matmul %247, %248, %cst_123 {dimension_numbers = #tpu.dot_dimension_numbers<[1], [0], [0], [1], [0, 0, 1, 1], [], []>} : vector<8x16xbf16>, vector<16x128xbf16>, vector<8x128xf32> -> vector<8x128xf32>
    %c0_124 = arith.constant 0 : index
    %c3840 = arith.constant 3840 : index
    %250 = vector.load %arg3[%c0_124, %c3840] : memref<1x8320xf32, #tpu.memory_space<vmem>>, vector<1x128xf32>
    %251 = vector.broadcast %250 : vector<1x128xf32> to vector<8x128xf32>
    %252 = arith.addf %249, %251 : vector<8x128xf32>
    %253 = arith.mulf %239, %252 : vector<8x128xf32>
    %254 = arith.addf %253, %246 : vector<8x128xf32>
    %255 = arith.truncf %254 : vector<8x128xf32> to vector<8x128xbf16>
    %c0_125 = arith.constant 0 : index
    %c896 = arith.constant 896 : index
    %256 = vector.load %arg6[%c0_125, %c896] : memref<128x1792xbf16, #tpu.memory_space<vmem>>, vector<128x128xbf16>
    %cst_126 = arith.constant dense<0.000000e+00> : vector<8x128xf32>
    %257 = tpu.matmul %255, %256, %cst_126 {dimension_numbers = #tpu.dot_dimension_numbers<[1], [0], [0], [1], [0, 0, 1, 1], [], []>} : vector<8x128xbf16>, vector<128x128xbf16>, vector<8x128xf32> -> vector<8x128xf32>
    %c0_127 = arith.constant 0 : index
    %c3200 = arith.constant 3200 : index
    %258 = vector.load %arg3[%c0_127, %c3200] : memref<1x8320xf32, #tpu.memory_space<vmem>>, vector<1x128xf32>
    %259 = vector.broadcast %258 : vector<1x128xf32> to vector<8x128xf32>
    %260 = arith.addf %257, %259 : vector<8x128xf32>
    %cst_128 = arith.constant 0.000000e+00 : f32
    %261 = vector.broadcast %cst_128 : f32 to vector<8x128xf32>
    %262 = arith.subf %261, %260 : vector<8x128xf32>
    %263 = math.exp %262 : vector<8x128xf32>
    %cst_129 = arith.constant 1.000000e+00 : f32
    %264 = vector.broadcast %cst_129 : f32 to vector<8x128xf32>
    %265 = arith.addf %264, %263 : vector<8x128xf32>
    %266 = tpu.reciprocal %265 {approx = true} : vector<8x128xf32> -> vector<8x128xf32>
    %267 = arith.mulf %260, %266 : vector<8x128xf32>
    %268 = arith.addf %267, %204 : vector<8x128xf32>
    %269 = arith.truncf %268 : vector<8x128xf32> to vector<8x128xbf16>
    %c0_130 = arith.constant 0 : index
    %c1024_131 = arith.constant 1024 : index
    %270 = vector.load %arg6[%c0_130, %c1024_131] : memref<128x1792xbf16, #tpu.memory_space<vmem>>, vector<128x256xbf16>
    %cst_132 = arith.constant dense<0.000000e+00> : vector<8x256xf32>
    %271 = tpu.matmul %269, %270, %cst_132 {dimension_numbers = #tpu.dot_dimension_numbers<[1], [0], [0], [1], [0, 0, 1, 1], [], []>} : vector<8x128xbf16>, vector<128x256xbf16>, vector<8x256xf32> -> vector<8x256xf32>
    %c0_133 = arith.constant 0 : index
    %c3968 = arith.constant 3968 : index
    %272 = vector.load %arg3[%c0_133, %c3968] : memref<1x8320xf32, #tpu.memory_space<vmem>>, vector<1x256xf32>
    %273 = vector.broadcast %272 : vector<1x256xf32> to vector<8x256xf32>
    %274 = arith.addf %271, %273 : vector<8x256xf32>
    %cst_134 = arith.constant 0.000000e+00 : f32
    %275 = vector.broadcast %cst_134 : f32 to vector<8x256xf32>
    %276 = arith.subf %275, %274 : vector<8x256xf32>
    %277 = math.exp %276 : vector<8x256xf32>
    %cst_135 = arith.constant 1.000000e+00 : f32
    %278 = vector.broadcast %cst_135 : f32 to vector<8x256xf32>
    %279 = arith.addf %278, %277 : vector<8x256xf32>
    %280 = tpu.reciprocal %279 {approx = true} : vector<8x256xf32> -> vector<8x256xf32>
    %281 = arith.mulf %274, %280 : vector<8x256xf32>
    %c192_136 = arith.constant 192 : index
    %c0_137 = arith.constant 0 : index
    %282 = vector.load %arg8[%c192_136, %c0_137] : memref<448x32xf32, #tpu.memory_space<vmem>>, vector<256x32xf32>
    %c0_138 = arith.constant 0 : index
    %c256_139 = arith.constant 256 : index
    %283 = vector.load %arg9[%c0_138, %c256_139] : memref<32x512xf32, #tpu.memory_space<vmem>>, vector<32x256xf32>
    %cst_140 = arith.constant dense<0.000000e+00> : vector<8x32xf32>
    %284 = tpu.matmul %281, %282, %cst_140 {dimension_numbers = #tpu.dot_dimension_numbers<[1], [0], [0], [1], [0, 0, 1, 1], [], []>} : vector<8x256xf32>, vector<256x32xf32>, vector<8x32xf32> -> vector<8x32xf32>
    %cst_141 = arith.constant dense<0.000000e+00> : vector<8x256xf32>
    %285 = tpu.matmul %284, %283, %cst_141 {dimension_numbers = #tpu.dot_dimension_numbers<[1], [0], [0], [1], [0, 0, 1, 1], [], []>} : vector<8x32xf32>, vector<32x256xf32>, vector<8x256xf32> -> vector<8x256xf32>
    %286 = arith.subf %281, %285 : vector<8x256xf32>
    %287 = arith.mulf %286, %286 : vector<8x256xf32>
    %cst_142 = arith.constant dense<0.000000e+00> : vector<8x32xf32>
    %288 = tpu.matmul %287, %282, %cst_142 {dimension_numbers = #tpu.dot_dimension_numbers<[1], [0], [0], [1], [0, 0, 1, 1], [], []>} : vector<8x256xf32>, vector<256x32xf32>, vector<8x32xf32> -> vector<8x32xf32>
    %cst_143 = arith.constant dense<0.000000e+00> : vector<8x256xf32>
    %289 = tpu.matmul %288, %283, %cst_143 {dimension_numbers = #tpu.dot_dimension_numbers<[1], [0], [0], [1], [0, 0, 1, 1], [], []>} : vector<8x32xf32>, vector<32x256xf32>, vector<8x256xf32> -> vector<8x256xf32>
    %cst_144 = arith.constant 9.99999974E-6 : f32
    %290 = vector.broadcast %cst_144 : f32 to vector<8x256xf32>
    %291 = arith.addf %289, %290 : vector<8x256xf32>
    %292 = math.rsqrt %291 : vector<8x256xf32>
    %293 = arith.mulf %286, %292 : vector<8x256xf32>
    %c0_145 = arith.constant 0 : index
    %c4736 = arith.constant 4736 : index
    %294 = vector.load %arg3[%c0_145, %c4736] : memref<1x8320xf32, #tpu.memory_space<vmem>>, vector<1x256xf32>
    %295 = vector.broadcast %294 : vector<1x256xf32> to vector<8x256xf32>
    %296 = arith.mulf %293, %295 : vector<8x256xf32>
    %c0_146 = arith.constant 0 : index
    %c4992 = arith.constant 4992 : index
    %297 = vector.load %arg3[%c0_146, %c4992] : memref<1x8320xf32, #tpu.memory_space<vmem>>, vector<1x256xf32>
    %298 = vector.broadcast %297 : vector<1x256xf32> to vector<8x256xf32>
    %299 = arith.addf %296, %298 : vector<8x256xf32>
    %300 = arith.truncf %299 : vector<8x256xf32> to vector<8x256xbf16>
    %c0_147 = arith.constant 0 : index
    %c640_148 = arith.constant 640 : index
    %301 = vector.load %arg7[%c0_147, %c640_148] : memref<256x1536xbf16, #tpu.memory_space<vmem>>, vector<256x256xbf16>
    %cst_149 = arith.constant dense<0.000000e+00> : vector<8x256xf32>
    %302 = tpu.matmul %300, %301, %cst_149 {dimension_numbers = #tpu.dot_dimension_numbers<[1], [0], [0], [1], [0, 0, 1, 1], [], []>} : vector<8x256xbf16>, vector<256x256xbf16>, vector<8x256xf32> -> vector<8x256xf32>
    %303 = arith.truncf %57 : vector<8x256xf32> to vector<8x256xbf16>
    %c0_150 = arith.constant 0 : index
    %c896_151 = arith.constant 896 : index
    %304 = vector.load %arg7[%c0_150, %c896_151] : memref<256x1536xbf16, #tpu.memory_space<vmem>>, vector<256x256xbf16>
    %cst_152 = arith.constant dense<0.000000e+00> : vector<8x256xf32>
    %305 = tpu.matmul %303, %304, %cst_152 {dimension_numbers = #tpu.dot_dimension_numbers<[1], [0], [0], [1], [0, 0, 1, 1], [], []>} : vector<8x256xbf16>, vector<256x256xbf16>, vector<8x256xf32> -> vector<8x256xf32>
    %306 = arith.addf %302, %305 : vector<8x256xf32>
    %c0_153 = arith.constant 0 : index
    %c4224 = arith.constant 4224 : index
    %307 = vector.load %arg3[%c0_153, %c4224] : memref<1x8320xf32, #tpu.memory_space<vmem>>, vector<1x256xf32>
    %308 = vector.broadcast %307 : vector<1x256xf32> to vector<8x256xf32>
    %309 = arith.addf %306, %308 : vector<8x256xf32>
    %cst_154 = arith.constant 0.000000e+00 : f32
    %310 = vector.broadcast %cst_154 : f32 to vector<8x256xf32>
    %311 = arith.subf %310, %309 : vector<8x256xf32>
    %312 = math.exp %311 : vector<8x256xf32>
    %cst_155 = arith.constant 1.000000e+00 : f32
    %313 = vector.broadcast %cst_155 : f32 to vector<8x256xf32>
    %314 = arith.addf %313, %312 : vector<8x256xf32>
    %315 = tpu.reciprocal %314 {approx = true} : vector<8x256xf32> -> vector<8x256xf32>
    %316 = arith.mulf %309, %315 : vector<8x256xf32>
    %c0_156 = arith.constant 0 : index
    %c5248 = arith.constant 5248 : index
    %317 = vector.load %arg3[%c0_156, %c5248] : memref<1x8320xf32, #tpu.memory_space<vmem>>, vector<1x256xf32>
    %318 = vector.broadcast %1 : vector<8x1xf32> to vector<8x256xf32>
    %319 = vector.broadcast %317 : vector<1x256xf32> to vector<8x256xf32>
    %320 = arith.mulf %318, %319 : vector<8x256xf32>
    %c0_157 = arith.constant 0 : index
    %c5504 = arith.constant 5504 : index
    %321 = vector.load %arg3[%c0_157, %c5504] : memref<1x8320xf32, #tpu.memory_space<vmem>>, vector<1x256xf32>
    %322 = vector.broadcast %321 : vector<1x256xf32> to vector<8x256xf32>
    %323 = arith.addf %320, %322 : vector<8x256xf32>
    %324 = arith.truncf %2 : vector<8x16xf32> to vector<8x16xbf16>
    %c0_158 = arith.constant 0 : index
    %c128_159 = arith.constant 128 : index
    %325 = vector.load %arg4[%c0_158, %c128_159] : memref<16x896xbf16, #tpu.memory_space<vmem>>, vector<16x256xbf16>
    %cst_160 = arith.constant dense<0.000000e+00> : vector<8x256xf32>
    %326 = tpu.matmul %324, %325, %cst_160 {dimension_numbers = #tpu.dot_dimension_numbers<[1], [0], [0], [1], [0, 0, 1, 1], [], []>} : vector<8x16xbf16>, vector<16x256xbf16>, vector<8x256xf32> -> vector<8x256xf32>
    %c0_161 = arith.constant 0 : index
    %c5760 = arith.constant 5760 : index
    %327 = vector.load %arg3[%c0_161, %c5760] : memref<1x8320xf32, #tpu.memory_space<vmem>>, vector<1x256xf32>
    %328 = vector.broadcast %327 : vector<1x256xf32> to vector<8x256xf32>
    %329 = arith.addf %326, %328 : vector<8x256xf32>
    %330 = arith.mulf %316, %329 : vector<8x256xf32>
    %331 = arith.addf %330, %323 : vector<8x256xf32>
    %332 = arith.truncf %331 : vector<8x256xf32> to vector<8x256xbf16>
    %c0_162 = arith.constant 0 : index
    %c1152 = arith.constant 1152 : index
    %333 = vector.load %arg7[%c0_162, %c1152] : memref<256x1536xbf16, #tpu.memory_space<vmem>>, vector<256x256xbf16>
    %cst_163 = arith.constant dense<0.000000e+00> : vector<8x256xf32>
    %334 = tpu.matmul %332, %333, %cst_163 {dimension_numbers = #tpu.dot_dimension_numbers<[1], [0], [0], [1], [0, 0, 1, 1], [], []>} : vector<8x256xbf16>, vector<256x256xbf16>, vector<8x256xf32> -> vector<8x256xf32>
    %c0_164 = arith.constant 0 : index
    %c4480 = arith.constant 4480 : index
    %335 = vector.load %arg3[%c0_164, %c4480] : memref<1x8320xf32, #tpu.memory_space<vmem>>, vector<1x256xf32>
    %336 = vector.broadcast %335 : vector<1x256xf32> to vector<8x256xf32>
    %337 = arith.addf %334, %336 : vector<8x256xf32>
    %cst_165 = arith.constant 0.000000e+00 : f32
    %338 = vector.broadcast %cst_165 : f32 to vector<8x256xf32>
    %339 = arith.subf %338, %337 : vector<8x256xf32>
    %340 = math.exp %339 : vector<8x256xf32>
    %cst_166 = arith.constant 1.000000e+00 : f32
    %341 = vector.broadcast %cst_166 : f32 to vector<8x256xf32>
    %342 = arith.addf %341, %340 : vector<8x256xf32>
    %343 = tpu.reciprocal %342 {approx = true} : vector<8x256xf32> -> vector<8x256xf32>
    %344 = arith.mulf %337, %343 : vector<8x256xf32>
    %345 = arith.addf %344, %281 : vector<8x256xf32>
    %c192_167 = arith.constant 192 : index
    %c0_168 = arith.constant 0 : index
    %346 = vector.load %arg8[%c192_167, %c0_168] : memref<448x32xf32, #tpu.memory_space<vmem>>, vector<256x32xf32>
    %c0_169 = arith.constant 0 : index
    %c256_170 = arith.constant 256 : index
    %347 = vector.load %arg9[%c0_169, %c256_170] : memref<32x512xf32, #tpu.memory_space<vmem>>, vector<32x256xf32>
    %cst_171 = arith.constant dense<0.000000e+00> : vector<8x32xf32>
    %348 = tpu.matmul %345, %346, %cst_171 {dimension_numbers = #tpu.dot_dimension_numbers<[1], [0], [0], [1], [0, 0, 1, 1], [], []>} : vector<8x256xf32>, vector<256x32xf32>, vector<8x32xf32> -> vector<8x32xf32>
    %cst_172 = arith.constant dense<0.000000e+00> : vector<8x256xf32>
    %349 = tpu.matmul %348, %347, %cst_172 {dimension_numbers = #tpu.dot_dimension_numbers<[1], [0], [0], [1], [0, 0, 1, 1], [], []>} : vector<8x32xf32>, vector<32x256xf32>, vector<8x256xf32> -> vector<8x256xf32>
    %350 = arith.subf %345, %349 : vector<8x256xf32>
    %351 = arith.mulf %350, %350 : vector<8x256xf32>
    %cst_173 = arith.constant dense<0.000000e+00> : vector<8x32xf32>
    %352 = tpu.matmul %351, %346, %cst_173 {dimension_numbers = #tpu.dot_dimension_numbers<[1], [0], [0], [1], [0, 0, 1, 1], [], []>} : vector<8x256xf32>, vector<256x32xf32>, vector<8x32xf32> -> vector<8x32xf32>
    %cst_174 = arith.constant dense<0.000000e+00> : vector<8x256xf32>
    %353 = tpu.matmul %352, %347, %cst_174 {dimension_numbers = #tpu.dot_dimension_numbers<[1], [0], [0], [1], [0, 0, 1, 1], [], []>} : vector<8x32xf32>, vector<32x256xf32>, vector<8x256xf32> -> vector<8x256xf32>
    %cst_175 = arith.constant 9.99999974E-6 : f32
    %354 = vector.broadcast %cst_175 : f32 to vector<8x256xf32>
    %355 = arith.addf %353, %354 : vector<8x256xf32>
    %356 = math.rsqrt %355 : vector<8x256xf32>
    %357 = arith.mulf %350, %356 : vector<8x256xf32>
    %c0_176 = arith.constant 0 : index
    %c6016 = arith.constant 6016 : index
    %358 = vector.load %arg3[%c0_176, %c6016] : memref<1x8320xf32, #tpu.memory_space<vmem>>, vector<1x256xf32>
    %359 = vector.broadcast %358 : vector<1x256xf32> to vector<8x256xf32>
    %360 = arith.mulf %357, %359 : vector<8x256xf32>
    %c0_177 = arith.constant 0 : index
    %c6272 = arith.constant 6272 : index
    %361 = vector.load %arg3[%c0_177, %c6272] : memref<1x8320xf32, #tpu.memory_space<vmem>>, vector<1x256xf32>
    %362 = vector.broadcast %361 : vector<1x256xf32> to vector<8x256xf32>
    %363 = arith.addf %360, %362 : vector<8x256xf32>
    %cst_178 = arith.constant 0.000000e+00 : f32
    %364 = vector.broadcast %cst_178 : f32 to vector<8x256xf32>
    %365 = arith.subf %364, %363 : vector<8x256xf32>
    %366 = math.exp %365 : vector<8x256xf32>
    %cst_179 = arith.constant 1.000000e+00 : f32
    %367 = vector.broadcast %cst_179 : f32 to vector<8x256xf32>
    %368 = arith.addf %367, %366 : vector<8x256xf32>
    %369 = tpu.reciprocal %368 {approx = true} : vector<8x256xf32> -> vector<8x256xf32>
    %370 = arith.mulf %363, %369 : vector<8x256xf32>
    %371 = arith.truncf %370 : vector<8x256xf32> to vector<8x256xbf16>
    %c0_180 = arith.constant 0 : index
    %c1408 = arith.constant 1408 : index
    %372 = vector.load %arg7[%c0_180, %c1408] : memref<256x1536xbf16, #tpu.memory_space<vmem>>, vector<256x128xbf16>
    %cst_181 = arith.constant dense<0.000000e+00> : vector<8x128xf32>
    %373 = tpu.matmul %371, %372, %cst_181 {dimension_numbers = #tpu.dot_dimension_numbers<[1], [0], [0], [1], [0, 0, 1, 1], [], []>} : vector<8x256xbf16>, vector<256x128xbf16>, vector<8x128xf32> -> vector<8x128xf32>
    %c0_182 = arith.constant 0 : index
    %c6528 = arith.constant 6528 : index
    %374 = vector.load %arg3[%c0_182, %c6528] : memref<1x8320xf32, #tpu.memory_space<vmem>>, vector<1x128xf32>
    %375 = vector.broadcast %374 : vector<1x128xf32> to vector<8x128xf32>
    %376 = arith.addf %373, %375 : vector<8x128xf32>
    %377 = arith.addf %376, %0 : vector<8x128xf32>
    %378 = arith.truncf %0 : vector<8x128xf32> to vector<8x128xbf16>
    %c0_183 = arith.constant 0 : index
    %c1280_184 = arith.constant 1280 : index
    %379 = vector.load %arg6[%c0_183, %c1280_184] : memref<128x1792xbf16, #tpu.memory_space<vmem>>, vector<128x512xbf16>
    %cst_185 = arith.constant dense<0.000000e+00> : vector<8x512xf32>
    %380 = tpu.matmul %378, %379, %cst_185 {dimension_numbers = #tpu.dot_dimension_numbers<[1], [0], [0], [1], [0, 0, 1, 1], [], []>} : vector<8x128xbf16>, vector<128x512xbf16>, vector<8x512xf32> -> vector<8x512xf32>
    %c0_186 = arith.constant 0 : index
    %c6656 = arith.constant 6656 : index
    %381 = vector.load %arg3[%c0_186, %c6656] : memref<1x8320xf32, #tpu.memory_space<vmem>>, vector<1x512xf32>
    %382 = vector.broadcast %381 : vector<1x512xf32> to vector<8x512xf32>
    %383 = arith.addf %380, %382 : vector<8x512xf32>
    %cst_187 = arith.constant 0.000000e+00 : f32
    %384 = vector.broadcast %cst_187 : f32 to vector<8x512xf32>
    %385 = arith.subf %384, %383 : vector<8x512xf32>
    %386 = math.exp %385 : vector<8x512xf32>
    %cst_188 = arith.constant 1.000000e+00 : f32
    %387 = vector.broadcast %cst_188 : f32 to vector<8x512xf32>
    %388 = arith.addf %387, %386 : vector<8x512xf32>
    %389 = tpu.reciprocal %388 {approx = true} : vector<8x512xf32> -> vector<8x512xf32>
    %390 = arith.mulf %383, %389 : vector<8x512xf32>
    tpu.wait_dma2 semaphore(%arg13 : memref<!tpu.dma_semaphore, #tpu.memory_space<semaphore_mem>>) src(%arg10 : memref<512x640xbf16, #tpu.memory_space<any>>) dst(%arg12 : memref<512x640xbf16, #tpu.memory_space<vmem>>)
    %391 = arith.truncf %390 : vector<8x512xf32> to vector<8x512xbf16>
    %c0_189 = arith.constant 0 : index
    %c0_190 = arith.constant 0 : index
    %392 = vector.load %arg12[%c0_189, %c0_190] : memref<512x640xbf16, #tpu.memory_space<vmem>>, vector<512x512xbf16>
    %cst_191 = arith.constant dense<0.000000e+00> : vector<8x512xf32>
    %393 = tpu.matmul %391, %392, %cst_191 {dimension_numbers = #tpu.dot_dimension_numbers<[1], [0], [0], [1], [0, 0, 1, 1], [], []>} : vector<8x512xbf16>, vector<512x512xbf16>, vector<8x512xf32> -> vector<8x512xf32>
    %394 = arith.truncf %2 : vector<8x16xf32> to vector<8x16xbf16>
    %c0_192 = arith.constant 0 : index
    %c384_193 = arith.constant 384 : index
    %395 = vector.load %arg4[%c0_192, %c384_193] : memref<16x896xbf16, #tpu.memory_space<vmem>>, vector<16x512xbf16>
    %cst_194 = arith.constant dense<0.000000e+00> : vector<8x512xf32>
    %396 = tpu.matmul %394, %395, %cst_194 {dimension_numbers = #tpu.dot_dimension_numbers<[1], [0], [0], [1], [0, 0, 1, 1], [], []>} : vector<8x16xbf16>, vector<16x512xbf16>, vector<8x512xf32> -> vector<8x512xf32>
    %397 = arith.addf %393, %396 : vector<8x512xf32>
    %c0_195 = arith.constant 0 : index
    %c7168 = arith.constant 7168 : index
    %398 = vector.load %arg3[%c0_195, %c7168] : memref<1x8320xf32, #tpu.memory_space<vmem>>, vector<1x512xf32>
    %399 = vector.broadcast %1 : vector<8x1xf32> to vector<8x512xf32>
    %400 = vector.broadcast %398 : vector<1x512xf32> to vector<8x512xf32>
    %401 = arith.mulf %399, %400 : vector<8x512xf32>
    %402 = arith.addf %397, %401 : vector<8x512xf32>
    %c0_196 = arith.constant 0 : index
    %c7680 = arith.constant 7680 : index
    %403 = vector.load %arg3[%c0_196, %c7680] : memref<1x8320xf32, #tpu.memory_space<vmem>>, vector<1x512xf32>
    %404 = vector.broadcast %403 : vector<1x512xf32> to vector<8x512xf32>
    %405 = arith.addf %402, %404 : vector<8x512xf32>
    %cst_197 = arith.constant 0.000000e+00 : f32
    %406 = vector.broadcast %cst_197 : f32 to vector<8x512xf32>
    %407 = arith.subf %406, %405 : vector<8x512xf32>
    %408 = math.exp %407 : vector<8x512xf32>
    %cst_198 = arith.constant 1.000000e+00 : f32
    %409 = vector.broadcast %cst_198 : f32 to vector<8x512xf32>
    %410 = arith.addf %409, %408 : vector<8x512xf32>
    %411 = tpu.reciprocal %410 {approx = true} : vector<8x512xf32> -> vector<8x512xf32>
    %412 = arith.mulf %405, %411 : vector<8x512xf32>
    %413 = arith.truncf %412 : vector<8x512xf32> to vector<8x512xbf16>
    %c0_199 = arith.constant 0 : index
    %c512_200 = arith.constant 512 : index
    %414 = vector.load %arg12[%c0_199, %c512_200] : memref<512x640xbf16, #tpu.memory_space<vmem>>, vector<512x128xbf16>
    %cst_201 = arith.constant dense<0.000000e+00> : vector<8x128xf32>
    %415 = tpu.matmul %413, %414, %cst_201 {dimension_numbers = #tpu.dot_dimension_numbers<[1], [0], [0], [1], [0, 0, 1, 1], [], []>} : vector<8x512xbf16>, vector<512x128xbf16>, vector<8x128xf32> -> vector<8x128xf32>
    %c0_202 = arith.constant 0 : index
    %c8192 = arith.constant 8192 : index
    %416 = vector.load %arg3[%c0_202, %c8192] : memref<1x8320xf32, #tpu.memory_space<vmem>>, vector<1x128xf32>
    %417 = vector.broadcast %416 : vector<1x128xf32> to vector<8x128xf32>
    %418 = arith.addf %415, %417 : vector<8x128xf32>
    %cst_203 = arith.constant 1.000000e+00 : f32
    %419 = vector.broadcast %cst_203 : f32 to vector<8x1xf32>
    %420 = arith.subf %419, %31 : vector<8x1xf32>
    %421 = vector.broadcast %420 : vector<8x1xf32> to vector<8x128xf32>
    %422 = arith.mulf %377, %421 : vector<8x128xf32>
    %423 = vector.broadcast %31 : vector<8x1xf32> to vector<8x128xf32>
    %424 = arith.mulf %418, %423 : vector<8x128xf32>
    %425 = arith.addf %422, %424 : vector<8x128xf32>
    %c0_204 = arith.constant 0 : index
    %c0_205 = arith.constant 0 : index
    %426 = vector.load %arg11[%c0_204, %c0_205] : memref<8x128xf32, #tpu.memory_space<vmem>>, vector<8x128xf32>
    tpu.vector_store %arg11[%c0_204, %c0_205], %425 {strides = array<i32>} : memref<8x128xf32, #tpu.memory_space<vmem>>, vector<8x128xf32>,
    return
  }
}

</mosaic_0001>

<llo_original>
// kernel: forward.1
$region0: #{forward.1}
  #allocation0 [shape = 'u32[]', space=smem, size = 0x4, offset = 0x4, fixed_abs, tag = 'smem constant byte address 0x4 - core index']
  #allocation1 [shape = 'u32[72,128]{1,0:T(1,128)}', space=vmem, size = 0x9000, scoped, tag = 'internal scratch']
  #allocation2 [shape = 'bf16[512,640]{1,0:T(8,128)(2,1)}', space=vmem, size = 0xa0000, scoped, tag = 'scratch operand']
  #allocation3 [shape = 's32[1]{0}', space=sflag, size = 0x4, scoped, tag = 'scratch operand']
  #allocation8 [shape = 's32[]', space=sflag, size = 0x4, offset = 0, fixed_abs, tag = 'sflag constant byte address 0x0 - dummy sync flag']
  #allocation9 [shape = 's32[]', space=sflag, size = 0x4, offset = 0, fixed_abs, tag = 'sflag constant byte address 0x0 - dummy sync flag']
  #allocation10 [shape = 'u32[]', space=smem, size = 0x4, offset = 0x44, fixed_abs, tag = 'smem constant byte address 0x44 - assertion arg 0']
  #allocation11 [shape = 'u32[]', space=smem, size = 0x4, offset = 0x48, fixed_abs, tag = 'smem constant byte address 0x48 - assertion arg 1']
  %s0 = inlined_call_operand.vmem [shape: f32[8,128], index: 0, kind: input, shape index: {}]
  %s1 = inlined_call_operand.vmem [shape: f32[8,1], index: 1, kind: input, shape index: {}]
  %s2 = inlined_call_operand.vmem [shape: f32[8,16], index: 2, kind: input, shape index: {}]
  %s3 = inlined_call_operand.vmem [shape: f32[1,8320], index: 3, kind: input, shape index: {}]
  %s4 = inlined_call_operand.vmem [shape: bf16[16,896], index: 4, kind: input, shape index: {}]
  %s5 = inlined_call_operand.vmem [shape: bf16[64,256], index: 5, kind: input, shape index: {}]
  %s6 = inlined_call_operand.hbm [shape: bf16[128,1792], index: 6, kind: input, shape index: {}]
  %s7 = inlined_call_operand.hbm [shape: bf16[256,1536], index: 7, kind: input, shape index: {}]
  %s8 = inlined_call_operand.vmem [shape: f32[448,32], index: 8, kind: input, shape index: {}]
  %s9 = inlined_call_operand.vmem [shape: f32[32,512], index: 9, kind: input, shape index: {}]
  %s10 = inlined_call_operand.hbm [shape: bf16[512,640], index: 10, kind: input, shape index: {}]
  %s11 = inlined_call_operand.vmem [shape: f32[8,128], index: 11, kind: output, shape index: {}]
  %s12 = sld [smem:[#allocation0]]
  $region62: #{forward.1} parent=0
    _
  %s14 = ssub.s32 1, %s12
  %s15 = scalar_select 0, %s14, %s12
  $region1: #{forward.1} parent=0
    #allocation4 [shape = 'u8[458752]{0}', space=vmem, size = 0x70000, scoped, tag = 'input window, operand 6, single buffered']
    #allocation5 [shape = 's32[1]{0}', space=sflag, size = 0x4, scoped, tag = 'scoped memory for forward.1']
    #allocation6 [shape = 'u8[786432]{0}', space=vmem, size = 0xc0000, scoped, tag = 'input window, operand 7, single buffered']
    #allocation7 [shape = 's32[1]{0}', space=sflag, size = 0x4, scoped, tag = 'scoped memory for forward.1']
    %16 = vsyncpa [#allocation5], 0
    %17 = vsyncpa [#allocation7], 0
    // Predicated region
    $region2: #{forward.1} parent=1 // pred_check
      _
    $region3: #{forward.1} parent=1 // pred_check_branch
      %19 = sbr.rel (0) target = $region5
    $region4: #{forward.1} parent=1 // pred_region
      _
    $region5: #{forward.1} parent=1 // pred_fallthru
      _
    // Predicated region
    $region6: #{forward.1} parent=1 // pred_check
      _
    $region7: #{forward.1} parent=1 // pred_check_branch
      %21 = sbr.rel (0) target = $region9
    $region8: #{forward.1} parent=1 // pred_region
      _
    $region9: #{forward.1} parent=1 // pred_fallthru
      _
    // Predicated region
    $region10: #{forward.1} parent=1 // pred_check
      _
    $region11: #{forward.1} parent=1 // pred_check_branch
      %23 = sbr.rel (0) target = $region13
    $region12: #{forward.1} parent=1 // pred_region
      _
    $region13: #{forward.1} parent=1 // pred_fallthru
      _
    // Predicated region
    $region14: #{forward.1} parent=1 // pred_check
      _
    $region15: #{forward.1} parent=1 // pred_check_branch
      %25 = sbr.rel (0) target = $region17
    $region16: #{forward.1} parent=1 // pred_region
      _
    $region17: #{forward.1} parent=1 // pred_fallthru
      _
    // Predicated region
    $region18: #{forward.1} parent=1 // pred_check
      _
    $region19: #{forward.1} parent=1 // pred_check_branch
      %27 = sbr.rel (0) target = $region21
    $region20: #{forward.1} parent=1 // pred_region
      _
    $region21: #{forward.1} parent=1 // pred_fallthru
      _
    // Predicated region
    $region22: #{forward.1} parent=1 // pred_check
      _
    $region23: #{forward.1} parent=1 // pred_check_branch
      %29 = sbr.rel (0) target = $region25
    $region24: #{forward.1} parent=1 // pred_region
      _
    $region25: #{forward.1} parent=1 // pred_fallthru
      _
    // Predicated region
    $region26: #{forward.1} parent=1 // pred_check
      _
    $region27: #{forward.1} parent=1 // pred_check_branch
      %31 = sbr.rel (0) target = $region29
    $region28: #{forward.1} parent=1 // pred_region
      %33 = vsyncadd [#allocation5], 0
      %s34 = sshll.u32 %s6, 4
      %s35 = int_to_ptr.hbm [resolvable:$true] %s34
      %s36 = sshll.u32 [#allocation4], 4
      %s37 = int_to_ptr.vmem [resolvable:$true] %s36
      %42 = dma.hbm_to_vmem [thread:$0]  %s35, 14336, %s37, [#allocation5], 896, 896, 56
    $region29: #{forward.1} parent=1 // pred_fallthru
      _
    // Predicated region
    $region30: #{forward.1} parent=1 // pred_check
      _
    $region31: #{forward.1} parent=1 // pred_check_branch
      %44 = sbr.rel (0) target = $region33
    $region32: #{forward.1} parent=1 // pred_region
      %46 = vsyncadd [#allocation7], 0
      %s47 = sshll.u32 %s7, 4
      %s48 = int_to_ptr.hbm [resolvable:$true] %s47
      %s49 = sshll.u32 [#allocation6], 4
      %s50 = int_to_ptr.vmem [resolvable:$true] %s49
      %55 = dma.hbm_to_vmem [thread:$0]  %s48, 24576, %s50, [#allocation7], 768, 768, 48
    $region33: #{forward.1} parent=1 // pred_fallthru
      _
    // Predicated region
    $region34: #{forward.1} parent=1 // pred_check
      _
    $region35: #{forward.1} parent=1 // pred_check_branch
      %57 = sbr.rel (0) target = $region37
    $region36: #{forward.1} parent=1 // pred_region
      _
    $region37: #{forward.1} parent=1 // pred_fallthru
      _
    // Predicated region
    $region38: #{forward.1} parent=1 // pred_check
      _
    $region39: #{forward.1} parent=1 // pred_check_branch
      %59 = sbr.rel (0) target = $region41
    $region40: #{forward.1} parent=1 // pred_region
      _
    $region41: #{forward.1} parent=1 // pred_fallthru
      _
    // Predicated region
    $region42: #{forward.1} parent=1 // pred_check
      _
    $region43: #{forward.1} parent=1 // pred_check_branch
      %61 = sbr.rel (0) target = $region45
    $region44: #{forward.1} parent=1 // pred_region
      %63 = dma.done [#allocation5], 14336
    $region45: #{forward.1} parent=1 // pred_fallthru
      _
    // Predicated region
    $region46: #{forward.1} parent=1 // pred_check
      _
    $region47: #{forward.1} parent=1 // pred_check_branch
      %65 = sbr.rel (0) target = $region49
    $region48: #{forward.1} parent=1 // pred_region
      %67 = dma.done [#allocation7], 24576
    $region49: #{forward.1} parent=1 // pred_fallthru
      _
    // Predicated region
    $region50: #{forward.1} parent=1 // pred_check
      _
    $region51: #{forward.1} parent=1 // pred_check_branch
      %70 = sbr.rel target = $region53
    $region52: #{forward.1} parent=1 // pred_region
      %71 = sst [smem:[#allocation10]] [#allocation9]
      %72 = sst [smem:[#allocation11]] [#allocation8]
    $region53: #{forward.1} parent=1 // pred_fallthru
      _
    %74 = shalt.err (0)
    %s76 = sshll.u32 %s10, 4
    %s77 = int_to_ptr.hbm [resolvable:$true] %s76
    %s78 = sshll.u32 [#allocation2], 4
    %s79 = int_to_ptr.vmem [resolvable:$true] %s78
    %81 = dma.hbm_to_vmem [thread:$0]  %s77, 20480, %s79, [#allocation3]
    %v82 = vld [vmem:[%s0] sm:$0xff]
    %v83 = vld [vmem:[%s1] sm:$0xff]
    %v84 = vld [vmem:[%s2] sm:$0xff]
    %v85 = vld [vmem:[%s3] sm:$0x1]
    %87 = vset.pattern.permute.xlu0 0
    %88 = vperm.xlu0 %87, %v83
    %v89 = vpop.permute.xlu0 %88
    %v92 = vperm.slane %v85, 0
    %v94 = vmul.f32 %v89, %v92
    %v95 = vld [vmem:[%s3 + $0x1] sm:$0x1]
    %v97 = vperm.slane %v95, 0
    %v99 = vadd.f32 %v94, %v97
    %v100 = vsub.f32 0.0, %v99
    %v101 = vmul.f32 %v100, 1.442695
    %v102 = vpow.pop %v101
    %v103 = vadd.f32 %v102, 1.0
    %v104 = vrcp.pop %v103
    %v105 = vmul.f32 %v99, %v104
    %v106 = vld [vmem:[%s3 + $0x2] sm:$0x1]
    %v108 = vperm.slane %v106, 0
    %v110 = vmul.f32 %v105, %v108
    %111 = vadd.xlane.f32.xlu0 %v110
    %v112 = vpop.xlane.xlu0 %111
    %v113 = vld [vmem:[%s3 + $0x3] sm:$0x1]
    %v115 = vperm.slane %v113, 0
    %v117 = vadd.f32 %v112, %v115
    %v118 = vsub.f32 0.0, %v117
    %v119 = vmul.f32 %v118, 1.442695
    %v120 = vpow.pop %v119
    %v121 = vadd.f32 %v120, 1.0
    %v122 = vrcp.pop %v121
    %v123 = vmul.f32 %v121, %v122
    %v124 = vsub.f32 1.0, %v123
    %v125 = vmul.f32 %v122, %v124
    %v126 = vadd.f32 %v122, %v125
    %vm127 = vweird.f32 %v121
    %vm128 = vweird.f32 %v122
    %vm129 = vmor %vm127, %vm128
    %v130 = vsel %vm129, %v122, %v126
    %v131 = vand.u32 2147483647, %v121
    %vm132 = vcmp.eq.f32.partialorder %v131, 8.507059e+37
    %v133 = vand.u32 %v121, 2147483648
    %v134 = vor.u32 1.1754944e-38, %v133
    %v135 = vsel %vm132, %v134, %v130
    %v136 = vmul.f32 1.0, %v135
    %v137 = vpack.c.bf16 %v82, %v82
    %v138 = vld [vmem:[#allocation4] sm:$0xff]
    %v139 = vld [vmem:[#allocation4 + $0x38] sm:$0xff]
    %v140 = vld [vmem:[#allocation4 + $0x70] sm:$0xff]
    %v141 = vld [vmem:[#allocation4 + $0xa8] sm:$0xff]
    %v142 = vld [vmem:[#allocation4 + $0xe0] sm:$0xff]
    %v143 = vld [vmem:[#allocation4 + $0x118] sm:$0xff]
    %v144 = vld [vmem:[#allocation4 + $0x150] sm:$0xff]
    %v145 = vld [vmem:[#allocation4 + $0x188] sm:$0xff]
    %v146 = vld [vmem:[#allocation4 + $0x1c0] sm:$0xff]
    %v147 = vld [vmem:[#allocation4 + $0x1f8] sm:$0xff]
    %v148 = vld [vmem:[#allocation4 + $0x230] sm:$0xff]
    %v149 = vld [vmem:[#allocation4 + $0x268] sm:$0xff]
    %v150 = vld [vmem:[#allocation4 + $0x2a0] sm:$0xff]
    %v151 = vld [vmem:[#allocation4 + $0x2d8] sm:$0xff]
    %v152 = vld [vmem:[#allocation4 + $0x310] sm:$0xff]
    %v153 = vld [vmem:[#allocation4 + $0x348] sm:$0xff]
    %v154 = vld [vmem:[%s3 + $0x4] sm:$0x3]
    %v156 = vperm.slane %v154, 0
    %v157 = vperm.slane %v154, 1
    %v176 = vunpack.c.l.b16 %v138
    %v177 = vunpack.c.h.b16 %v138
    %v178 = vunpack.c.l.b16 %v139
    %v179 = vunpack.c.h.b16 %v139
    %v180 = vunpack.c.l.b16 %v140
    %v181 = vunpack.c.h.b16 %v140
    %v182 = vunpack.c.l.b16 %v141
    %v183 = vunpack.c.h.b16 %v141
    %v184 = vunpack.c.l.b16 %v142
    %v185 = vunpack.c.h.b16 %v142
    %v186 = vunpack.c.l.b16 %v143
    %v187 = vunpack.c.h.b16 %v143
    %v188 = vunpack.c.l.b16 %v144
    %v189 = vunpack.c.h.b16 %v144
    %v190 = vunpack.c.l.b16 %v145
    %v191 = vunpack.c.h.b16 %v145
    %v192 = vunpack.c.l.b16 %v146
    %v193 = vunpack.c.h.b16 %v146
    %v194 = vunpack.c.l.b16 %v147
    %v195 = vunpack.c.h.b16 %v147
    %v196 = vunpack.c.l.b16 %v148
    %v197 = vunpack.c.h.b16 %v148
    %v198 = vunpack.c.l.b16 %v149
    %v199 = vunpack.c.h.b16 %v149
    %v200 = vunpack.c.l.b16 %v150
    %v201 = vunpack.c.h.b16 %v150
    %v202 = vunpack.c.l.b16 %v151
    %v203 = vunpack.c.h.b16 %v151
    %v204 = vunpack.c.l.b16 %v152
    %v205 = vunpack.c.h.b16 %v152
    %v206 = vunpack.c.l.b16 %v153
    %v207 = vunpack.c.h.b16 %v153
    %v208 = vpack.c.b16 %v178, %v176
    %v209 = vpack.c.b16 %v179, %v177
    %v210 = vpack.c.b16 %v182, %v180
    %v211 = vpack.c.b16 %v183, %v181
    %v212 = vpack.c.b16 %v186, %v184
    %v213 = vpack.c.b16 %v187, %v185
    %v214 = vpack.c.b16 %v190, %v188
    %v215 = vpack.c.b16 %v191, %v189
    %v216 = vpack.c.b16 %v194, %v192
    %v217 = vpack.c.b16 %v195, %v193
    %v218 = vpack.c.b16 %v198, %v196
    %v219 = vpack.c.b16 %v199, %v197
    %v220 = vpack.c.b16 %v202, %v200
    %v221 = vpack.c.b16 %v203, %v201
    %v222 = vpack.c.b16 %v206, %v204
    %v223 = vpack.c.b16 %v207, %v205
    %240 = vmatpush.bf16.msra.mxu0 %v222
    %241 = vmatpush.bf16.msra.mxu0 %v220
    %242 = vmatpush.bf16.msra.mxu0 %v218
    %243 = vmatpush.bf16.msra.mxu0 %v216
    %244 = vmatpush.bf16.msra.mxu0 %v214
    %245 = vmatpush.bf16.msra.mxu0 %v212
    %246 = vmatpush.bf16.msra.mxu0 %v210
    %247 = vmatpush.bf16.msra.mxu0 %v208
    %248 = vmatmul.bf16.gmra.mxu0 %v137
    %v249 = vpop.f32.mrf.mxu0
    %v250 = vadd.f32 %v156, %v249
    %v251 = vpop.f32.mrf.mxu0
    %252 = vdwg.mxu0
    %253 = vmatpush.bf16.msra.mxu0 %v223
    %254 = vmatpush.bf16.msra.mxu0 %v221
    %255 = vmatpush.bf16.msra.mxu0 %v219
    %256 = vmatpush.bf16.msra.mxu0 %v217
    %257 = vmatpush.bf16.msra.mxu0 %v215
    %258 = vmatpush.bf16.msra.mxu0 %v213
    %259 = vmatpush.bf16.msra.mxu0 %v211
    %260 = vmatpush.bf16.msra.mxu0 %v209
    %261 = vmatmul.bf16.gmra.mxu0 %v137
    %v262 = vpop.f32.mrf.mxu0
    %v263 = vadd.f32 %v157, %v262
    %v264 = vpop.f32.mrf.mxu0
    %265 = vdwg.mxu0
    %v266 = vsub.f32 0.0, %v250
    %v267 = vsub.f32 0.0, %v263
    %v268 = vmul.f32 %v266, 1.442695
    %v269 = vpow.pop %v268
    %v270 = vmul.f32 %v267, 1.442695
    %v271 = vpow.pop %v270
    %v272 = vadd.f32 %v269, 1.0
    %v273 = vadd.f32 %v271, 1.0
    %v274 = vrcp.pop %v272
    %v275 = vrcp.pop %v273
    %v276 = vmul.f32 %v250, %v274
    %v277 = vmul.f32 %v263, %v275
    %v278 = vpack.c.bf16 %v276, %v276
    %v279 = vpack.c.bf16 %v277, %v277
    %v280 = vld [vmem:[#allocation6] sm:$0xff]
    %v281 = vld [vmem:[#allocation6 + $0x30] sm:$0xff]
    %v282 = vld [vmem:[#allocation6 + $0x60] sm:$0xff]
    %v283 = vld [vmem:[#allocation6 + $0x90] sm:$0xff]
    %v284 = vld [vmem:[#allocation6 + $0xc0] sm:$0xff]
    %v285 = vld [vmem:[#allocation6 + $0xf0] sm:$0xff]
    %v286 = vld [vmem:[#allocation6 + $0x120] sm:$0xff]
    %v287 = vld [vmem:[#allocation6 + $0x150] sm:$0xff]
    %v288 = vld [vmem:[#allocation6 + $0x180] sm:$0xff]
    %v289 = vld [vmem:[#allocation6 + $0x1b0] sm:$0xff]
    %v290 = vld [vmem:[#allocation6 + $0x1e0] sm:$0xff]
    %v291 = vld [vmem:[#allocation6 + $0x210] sm:$0xff]
    %v292 = vld [vmem:[#allocation6 + $0x240] sm:$0xff]
    %v293 = vld [vmem:[#allocation6 + $0x270] sm:$0xff]
    %v294 = vld [vmem:[#allocation6 + $0x2a0] sm:$0xff]
    %v295 = vld [vmem:[#allocation6 + $0x2d0] sm:$0xff]
    %v296 = vld [vmem:[#allocation6 + $0x300] sm:$0xff]
    %v297 = vld [vmem:[#allocation6 + $0x330] sm:$0xff]
    %v298 = vld [vmem:[#allocation6 + $0x360] sm:$0xff]
    %v299 = vld [vmem:[#allocation6 + $0x390] sm:$0xff]
    %v300 = vld [vmem:[#allocation6 + $0x3c0] sm:$0xff]
    %v301 = vld [vmem:[#allocation6 + $0x3f0] sm:$0xff]
    %v302 = vld [vmem:[#allocation6 + $0x420] sm:$0xff]
    %v303 = vld [vmem:[#allocation6 + $0x450] sm:$0xff]
    %v304 = vld [vmem:[#allocation6 + $0x480] sm:$0xff]
    %v305 = vld [vmem:[#allocation6 + $0x4b0] sm:$0xff]
    %v306 = vld [vmem:[#allocation6 + $0x4e0] sm:$0xff]
    %v307 = vld [vmem:[#allocation6 + $0x510] sm:$0xff]
    %v308 = vld [vmem:[#allocation6 + $0x540] sm:$0xff]
    %v309 = vld [vmem:[#allocation6 + $0x570] sm:$0xff]
    %v310 = vld [vmem:[#allocation6 + $0x5a0] sm:$0xff]
    %v311 = vld [vmem:[#allocation6 + $0x5d0] sm:$0xff]
    %v312 = vld [vmem:[%s3 + $0x6] sm:$0x3]
    %v314 = vperm.slane %v312, 0
    %v315 = vperm.slane %v312, 1
    %v350 = vunpack.c.l.b16 %v280
    %v351 = vunpack.c.h.b16 %v280
    %v352 = vunpack.c.l.b16 %v281
    %v353 = vunpack.c.h.b16 %v281
    %v354 = vunpack.c.l.b16 %v282
    %v355 = vunpack.c.h.b16 %v282
    %v356 = vunpack.c.l.b16 %v283
    %v357 = vunpack.c.h.b16 %v283
    %v358 = vunpack.c.l.b16 %v284
    %v359 = vunpack.c.h.b16 %v284
    %v360 = vunpack.c.l.b16 %v285
    %v361 = vunpack.c.h.b16 %v285
    %v362 = vunpack.c.l.b16 %v286
    %v363 = vunpack.c.h.b16 %v286
    %v364 = vunpack.c.l.b16 %v287
    %v365 = vunpack.c.h.b16 %v287
    %v366 = vunpack.c.l.b16 %v288
    %v367 = vunpack.c.h.b16 %v288
    %v368 = vunpack.c.l.b16 %v289
    %v369 = vunpack.c.h.b16 %v289
    %v370 = vunpack.c.l.b16 %v290
    %v371 = vunpack.c.h.b16 %v290
    %v372 = vunpack.c.l.b16 %v291
    %v373 = vunpack.c.h.b16 %v291
    %v374 = vunpack.c.l.b16 %v292
    %v375 = vunpack.c.h.b16 %v292
    %v376 = vunpack.c.l.b16 %v293
    %v377 = vunpack.c.h.b16 %v293
    %v378 = vunpack.c.l.b16 %v294
    %v379 = vunpack.c.h.b16 %v294
    %v380 = vunpack.c.l.b16 %v295
    %v381 = vunpack.c.h.b16 %v295
    %v382 = vunpack.c.l.b16 %v296
    %v383 = vunpack.c.h.b16 %v296
    %v384 = vunpack.c.l.b16 %v297
    %v385 = vunpack.c.h.b16 %v297
    %v386 = vunpack.c.l.b16 %v298
    %v387 = vunpack.c.h.b16 %v298
    %v388 = vunpack.c.l.b16 %v299
    %v389 = vunpack.c.h.b16 %v299
    %v390 = vunpack.c.l.b16 %v300
    %v391 = vunpack.c.h.b16 %v300
    %v392 = vunpack.c.l.b16 %v301
    %v393 = vunpack.c.h.b16 %v301
    %v394 = vunpack.c.l.b16 %v302
    %v395 = vunpack.c.h.b16 %v302
    %v396 = vunpack.c.l.b16 %v303
    %v397 = vunpack.c.h.b16 %v303
    %v398 = vunpack.c.l.b16 %v304
    %v399 = vunpack.c.h.b16 %v304
    %v400 = vunpack.c.l.b16 %v305
    %v401 = vunpack.c.h.b16 %v305
    %v402 = vunpack.c.l.b16 %v306
    %v403 = vunpack.c.h.b16 %v306
    %v404 = vunpack.c.l.b16 %v307
    %v405 = vunpack.c.h.b16 %v307
    %v406 = vunpack.c.l.b16 %v308
    %v407 = vunpack.c.h.b16 %v308
    %v408 = vunpack.c.l.b16 %v309
    %v409 = vunpack.c.h.b16 %v309
    %v410 = vunpack.c.l.b16 %v310
    %v411 = vunpack.c.h.b16 %v310
    %v412 = vunpack.c.l.b16 %v311
    %v413 = vunpack.c.h.b16 %v311
    %v414 = vpack.c.b16 %v352, %v350
    %v415 = vpack.c.b16 %v353, %v351
    %v416 = vpack.c.b16 %v356, %v354
    %v417 = vpack.c.b16 %v357, %v355
    %v418 = vpack.c.b16 %v360, %v358
    %v419 = vpack.c.b16 %v361, %v359
    %v420 = vpack.c.b16 %v364, %v362
    %v421 = vpack.c.b16 %v365, %v363
    %v422 = vpack.c.b16 %v368, %v366
    %v423 = vpack.c.b16 %v369, %v367
    %v424 = vpack.c.b16 %v372, %v370
    %v425 = vpack.c.b16 %v373, %v371
    %v426 = vpack.c.b16 %v376, %v374
    %v427 = vpack.c.b16 %v377, %v375
    %v428 = vpack.c.b16 %v380, %v378
    %v429 = vpack.c.b16 %v381, %v379
    %v430 = vpack.c.b16 %v384, %v382
    %v431 = vpack.c.b16 %v385, %v383
    %v432 = vpack.c.b16 %v388, %v386
    %v433 = vpack.c.b16 %v389, %v387
    %v434 = vpack.c.b16 %v392, %v390
    %v435 = vpack.c.b16 %v393, %v391
    %v436 = vpack.c.b16 %v396, %v394
    %v437 = vpack.c.b16 %v397, %v395
    %v438 = vpack.c.b16 %v400, %v398
    %v439 = vpack.c.b16 %v401, %v399
    %v440 = vpack.c.b16 %v404, %v402
    %v441 = vpack.c.b16 %v405, %v403
    %v442 = vpack.c.b16 %v408, %v406
    %v443 = vpack.c.b16 %v409, %v407
    %v444 = vpack.c.b16 %v412, %v410
    %v445 = vpack.c.b16 %v413, %v411
    %478 = vmatpush.bf16.msra.mxu0 %v428
    %479 = vmatpush.bf16.msra.mxu0 %v426
    %480 = vmatpush.bf16.msra.mxu0 %v424
    %481 = vmatpush.bf16.msra.mxu0 %v422
    %482 = vmatpush.bf16.msra.mxu0 %v420
    %483 = vmatpush.bf16.msra.mxu0 %v418
    %484 = vmatpush.bf16.msra.mxu0 %v416
    %485 = vmatpush.bf16.msra.mxu0 %v414
    %486 = vmatmul.bf16.gmra.mxu0 %v278
    %v487 = vpop.f32.mrf.mxu0
    %v488 = vadd.f32 %v314, %v487
    %v489 = vpop.f32.mrf.mxu0
    %490 = vdwg.mxu0
    %491 = vmatpush.bf16.msra.mxu0 %v444
    %492 = vmatpush.bf16.msra.mxu0 %v442
    %493 = vmatpush.bf16.msra.mxu0 %v440
    %494 = vmatpush.bf16.msra.mxu0 %v438
    %495 = vmatpush.bf16.msra.mxu0 %v436
    %496 = vmatpush.bf16.msra.mxu0 %v434
    %497 = vmatpush.bf16.msra.mxu0 %v432
    %498 = vmatpush.bf16.msra.mxu0 %v430
    %499 = vmatmul.bf16.gmra.mxu0 %v279
    %v500 = vpop.f32.mrf.mxu0
    %v501 = vadd.f32 %v488, %v500
    %v502 = vpop.f32.mrf.mxu0
    %503 = vdwg.mxu0
    %504 = vmatpush.bf16.msra.mxu0 %v429
    %505 = vmatpush.bf16.msra.mxu0 %v427
    %506 = vmatpush.bf16.msra.mxu0 %v425
    %507 = vmatpush.bf16.msra.mxu0 %v423
    %508 = vmatpush.bf16.msra.mxu0 %v421
    %509 = vmatpush.bf16.msra.mxu0 %v419
    %510 = vmatpush.bf16.msra.mxu0 %v417
    %511 = vmatpush.bf16.msra.mxu0 %v415
    %512 = vmatmul.bf16.gmra.mxu0 %v278
    %v513 = vpop.f32.mrf.mxu0
    %v514 = vadd.f32 %v315, %v513
    %v515 = vpop.f32.mrf.mxu0
    %516 = vdwg.mxu0
    %517 = vmatpush.bf16.msra.mxu0 %v445
    %518 = vmatpush.bf16.msra.mxu0 %v443
    %519 = vmatpush.bf16.msra.mxu0 %v441
    %520 = vmatpush.bf16.msra.mxu0 %v439
    %521 = vmatpush.bf16.msra.mxu0 %v437
    %522 = vmatpush.bf16.msra.mxu0 %v435
    %523 = vmatpush.bf16.msra.mxu0 %v433
    %524 = vmatpush.bf16.msra.mxu0 %v431
    %525 = vmatmul.bf16.gmra.mxu0 %v279
    %v526 = vpop.f32.mrf.mxu0
    %v527 = vadd.f32 %v514, %v526
    %v528 = vpop.f32.mrf.mxu0
    %529 = vdwg.mxu0
    %v530 = vsub.f32 0.0, %v501
    %v531 = vsub.f32 0.0, %v527
    %v532 = vmul.f32 %v530, 1.442695
    %v533 = vpow.pop %v532
    %v534 = vmul.f32 %v531, 1.442695
    %v535 = vpow.pop %v534
    %v536 = vadd.f32 %v533, 1.0
    %v537 = vadd.f32 %v535, 1.0
    %v538 = vrcp.pop %v536
    %v539 = vrcp.pop %v537
    %v540 = vmul.f32 %v501, %v538
    %v541 = vmul.f32 %v527, %v539
    %v542 = vld [vmem:[%s8 + $0xc0] sm:$0xff]
    %v543 = vld [vmem:[%s8 + $0xc8] sm:$0xff]
    %v544 = vld [vmem:[%s8 + $0xd0] sm:$0xff]
    %v545 = vld [vmem:[%s8 + $0xd8] sm:$0xff]
    %v546 = vld [vmem:[%s8 + $0xe0] sm:$0xff]
    %v547 = vld [vmem:[%s8 + $0xe8] sm:$0xff]
    %v548 = vld [vmem:[%s8 + $0xf0] sm:$0xff]
    %v549 = vld [vmem:[%s8 + $0xf8] sm:$0xff]
    %v550 = vld [vmem:[%s8 + $0x100] sm:$0xff]
    %v551 = vld [vmem:[%s8 + $0x108] sm:$0xff]
    %v552 = vld [vmem:[%s8 + $0x110] sm:$0xff]
    %v553 = vld [vmem:[%s8 + $0x118] sm:$0xff]
    %v554 = vld [vmem:[%s8 + $0x120] sm:$0xff]
    %v555 = vld [vmem:[%s8 + $0x128] sm:$0xff]
    %v556 = vld [vmem:[%s8 + $0x130] sm:$0xff]
    %v557 = vld [vmem:[%s8 + $0x138] sm:$0xff]
    %v558 = vld [vmem:[%s8 + $0x140] sm:$0xff]
    %v559 = vld [vmem:[%s8 + $0x148] sm:$0xff]
    %v560 = vld [vmem:[%s8 + $0x150] sm:$0xff]
    %v561 = vld [vmem:[%s8 + $0x158] sm:$0xff]
    %v562 = vld [vmem:[%s8 + $0x160] sm:$0xff]
    %v563 = vld [vmem:[%s8 + $0x168] sm:$0xff]
    %v564 = vld [vmem:[%s8 + $0x170] sm:$0xff]
    %v565 = vld [vmem:[%s8 + $0x178] sm:$0xff]
    %v566 = vld [vmem:[%s8 + $0x180] sm:$0xff]
    %v567 = vld [vmem:[%s8 + $0x188] sm:$0xff]
    %v568 = vld [vmem:[%s8 + $0x190] sm:$0xff]
    %v569 = vld [vmem:[%s8 + $0x198] sm:$0xff]
    %v570 = vld [vmem:[%s8 + $0x1a0] sm:$0xff]
    %v571 = vld [vmem:[%s8 + $0x1a8] sm:$0xff]
    %v572 = vld [vmem:[%s8 + $0x1b0] sm:$0xff]
    %v573 = vld [vmem:[%s8 + $0x1b8] sm:$0xff]
    %v574 = vld [vmem:[%s9 + $0x10] sm:$0xff]
    %v575 = vld [vmem:[%s9 + $0x18] sm:$0xff]
    %v576 = vld [vmem:[%s9 + $0x30] sm:$0xff]
    %v577 = vld [vmem:[%s9 + $0x38] sm:$0xff]
    %v578 = vld [vmem:[%s9 + $0x50] sm:$0xff]
    %v579 = vld [vmem:[%s9 + $0x58] sm:$0xff]
    %v580 = vld [vmem:[%s9 + $0x70] sm:$0xff]
    %v581 = vld [vmem:[%s9 + $0x78] sm:$0xff]
    %582 = vmatpush.msra.mxu0 %v557
    %583 = vmatpush.msra.mxu0 %v556
    %584 = vmatpush.msra.mxu0 %v555
    %585 = vmatpush.msra.mxu0 %v554
    %586 = vmatpush.msra.mxu0 %v553
    %587 = vmatpush.msra.mxu0 %v552
    %588 = vmatpush.msra.mxu0 %v551
    %589 = vmatpush.msra.mxu0 %v550
    %590 = vmatpush.msra.mxu0 %v549
    %591 = vmatpush.msra.mxu0 %v548
    %592 = vmatpush.msra.mxu0 %v547
    %593 = vmatpush.msra.mxu0 %v546
    %594 = vmatpush.msra.mxu0 %v545
    %595 = vmatpush.msra.mxu0 %v544
    %596 = vmatpush.msra.mxu0 %v543
    %597 = vmatpush.msra.mxu0 %v542
    %598 = vmatmul.f32.gmra.mxu0 %v540
    %v599 = vpop.f32.mrf.mxu0
    %v600 = vadd.f32 0.0, %v599
    %601 = vdwg.mxu0
    %602 = vmatpush.msra.mxu0 %v573
    %603 = vmatpush.msra.mxu0 %v572
    %604 = vmatpush.msra.mxu0 %v571
    %605 = vmatpush.msra.mxu0 %v570
    %606 = vmatpush.msra.mxu0 %v569
    %607 = vmatpush.msra.mxu0 %v568
    %608 = vmatpush.msra.mxu0 %v567
    %609 = vmatpush.msra.mxu0 %v566
    %610 = vmatpush.msra.mxu0 %v565
    %611 = vmatpush.msra.mxu0 %v564
    %612 = vmatpush.msra.mxu0 %v563
    %613 = vmatpush.msra.mxu0 %v562
    %614 = vmatpush.msra.mxu0 %v561
    %615 = vmatpush.msra.mxu0 %v560
    %616 = vmatpush.msra.mxu0 %v559
    %617 = vmatpush.msra.mxu0 %v558
    %618 = vmatmul.f32.gmra.mxu0 %v541
    %v619 = vpop.f32.mrf.mxu0
    %v620 = vadd.f32 %v600, %v619
    %621 = vdwg.mxu0
    %vm622 = vcmask 261120
    %v624 = vsel %vm622, %v620, 0
    %626 = vmatpush.msra.mxu0 0.0
    %627 = vmatpush.msra.mxu0 0.0
    %628 = vmatpush.msra.mxu0 0.0
    %629 = vmatpush.msra.mxu0 0.0
    %630 = vmatpush.msra.mxu0 0.0
    %631 = vmatpush.msra.mxu0 0.0
    %632 = vmatpush.msra.mxu0 0.0
    %633 = vmatpush.msra.mxu0 0.0
    %634 = vmatpush.msra.mxu0 0.0
    %635 = vmatpush.msra.mxu0 0.0
    %636 = vmatpush.msra.mxu0 0.0
    %637 = vmatpush.msra.mxu0 0.0
    %638 = vmatpush.msra.mxu0 %v580
    %639 = vmatpush.msra.mxu0 %v578
    %640 = vmatpush.msra.mxu0 %v576
    %641 = vmatpush.msra.mxu0 %v574
    %642 = vmatmul.f32.gmra.mxu0 %v624
    %v643 = vpop.f32.mrf.mxu0
    %v644 = vadd.f32 0.0, %v643
    %645 = vdwg.mxu0
    %646 = vmatpush.msra.mxu0 0.0
    %647 = vmatpush.msra.mxu0 0.0
    %648 = vmatpush.msra.mxu0 0.0
    %649 = vmatpush.msra.mxu0 0.0
    %650 = vmatpush.msra.mxu0 0.0
    %651 = vmatpush.msra.mxu0 0.0
    %652 = vmatpush.msra.mxu0 0.0
    %653 = vmatpush.msra.mxu0 0.0
    %654 = vmatpush.msra.mxu0 0.0
    %655 = vmatpush.msra.mxu0 0.0
    %656 = vmatpush.msra.mxu0 0.0
    %657 = vmatpush.msra.mxu0 0.0
    %658 = vmatpush.msra.mxu0 %v581
    %659 = vmatpush.msra.mxu0 %v579
    %660 = vmatpush.msra.mxu0 %v577
    %661 = vmatpush.msra.mxu0 %v575
    %662 = vmatmul.f32.gmra.mxu0 %v624
    %v663 = vpop.f32.mrf.mxu0
    %v664 = vadd.f32 0.0, %v663
    %665 = vdwg.mxu0
    %v666 = vsub.f32 %v540, %v644
    %v667 = vsub.f32 %v541, %v664
    %v668 = vmul.f32 %v666, %v666
    %v669 = vmul.f32 %v667, %v667
    %670 = vmatpush.msra.mxu0 %v557
    %671 = vmatpush.msra.mxu0 %v556
    %672 = vmatpush.msra.mxu0 %v555
    %673 = vmatpush.msra.mxu0 %v554
    %674 = vmatpush.msra.mxu0 %v553
    %675 = vmatpush.msra.mxu0 %v552
    %676 = vmatpush.msra.mxu0 %v551
    %677 = vmatpush.msra.mxu0 %v550
    %678 = vmatpush.msra.mxu0 %v549
    %679 = vmatpush.msra.mxu0 %v548
    %680 = vmatpush.msra.mxu0 %v547
    %681 = vmatpush.msra.mxu0 %v546
    %682 = vmatpush.msra.mxu0 %v545
    %683 = vmatpush.msra.mxu0 %v544
    %684 = vmatpush.msra.mxu0 %v543
    %685 = vmatpush.msra.mxu0 %v542
    %686 = vmatmul.f32.gmra.mxu0 %v668
    %v687 = vpop.f32.mrf.mxu0
    %v688 = vadd.f32 0.0, %v687
    %689 = vdwg.mxu0
    %690 = vmatpush.msra.mxu0 %v573
    %691 = vmatpush.msra.mxu0 %v572
    %692 = vmatpush.msra.mxu0 %v571
    %693 = vmatpush.msra.mxu0 %v570
    %694 = vmatpush.msra.mxu0 %v569
    %695 = vmatpush.msra.mxu0 %v568
    %696 = vmatpush.msra.mxu0 %v567
    %697 = vmatpush.msra.mxu0 %v566
    %698 = vmatpush.msra.mxu0 %v565
    %699 = vmatpush.msra.mxu0 %v564
    %700 = vmatpush.msra.mxu0 %v563
    %701 = vmatpush.msra.mxu0 %v562
    %702 = vmatpush.msra.mxu0 %v561
    %703 = vmatpush.msra.mxu0 %v560
    %704 = vmatpush.msra.mxu0 %v559
    %705 = vmatpush.msra.mxu0 %v558
    %706 = vmatmul.f32.gmra.mxu0 %v669
    %v707 = vpop.f32.mrf.mxu0
    %v708 = vadd.f32 %v688, %v707
    %709 = vdwg.mxu0
    %v711 = vsel %vm622, %v708, 0
    %713 = vmatpush.msra.mxu0 0.0
    %714 = vmatpush.msra.mxu0 0.0
    %715 = vmatpush.msra.mxu0 0.0
    %716 = vmatpush.msra.mxu0 0.0
    %717 = vmatpush.msra.mxu0 0.0
    %718 = vmatpush.msra.mxu0 0.0
    %719 = vmatpush.msra.mxu0 0.0
    %720 = vmatpush.msra.mxu0 0.0
    %721 = vmatpush.msra.mxu0 0.0
    %722 = vmatpush.msra.mxu0 0.0
    %723 = vmatpush.msra.mxu0 0.0
    %724 = vmatpush.msra.mxu0 0.0
    %725 = vmatpush.msra.mxu0 %v580
    %726 = vmatpush.msra.mxu0 %v578
    %727 = vmatpush.msra.mxu0 %v576
    %728 = vmatpush.msra.mxu0 %v574
    %729 = vmatmul.f32.gmra.mxu0 %v711
    %v730 = vpop.f32.mrf.mxu0
    %v731 = vadd.f32 1e-05, %v730
    %732 = vdwg.mxu0
    %733 = vmatpush.msra.mxu0 0.0
    %734 = vmatpush.msra.mxu0 0.0
    %735 = vmatpush.msra.mxu0 0.0
    %736 = vmatpush.msra.mxu0 0.0
    %737 = vmatpush.msra.mxu0 0.0
    %738 = vmatpush.msra.mxu0 0.0
    %739 = vmatpush.msra.mxu0 0.0
    %740 = vmatpush.msra.mxu0 0.0
    %741 = vmatpush.msra.mxu0 0.0
    %742 = vmatpush.msra.mxu0 0.0
    %743 = vmatpush.msra.mxu0 0.0
    %744 = vmatpush.msra.mxu0 0.0
    %745 = vmatpush.msra.mxu0 %v581
    %746 = vmatpush.msra.mxu0 %v579
    %747 = vmatpush.msra.mxu0 %v577
    %748 = vmatpush.msra.mxu0 %v575
    %749 = vmatmul.f32.gmra.mxu0 %v711
    %v750 = vpop.f32.mrf.mxu0
    %v751 = vadd.f32 1e-05, %v750
    %752 = vdwg.mxu0
    %v753 = vrsqrt.pop %v731
    %v754 = vmul.f32 %v753, %v731
    %v755 = vmul.f32 %v754, %v753
    %v756 = vmul.f32 0.5, %v755
    %v757 = vsub.f32 1.5, %v756
    %v758 = vmul.f32 %v753, %v757
    %vm759 = vweird.f32 %v731
    %vm760 = vweird.f32 %v753
    %vm761 = vmor %vm759, %vm760
    %v762 = vsel %vm761, %v753, %v758
    %v763 = vrsqrt.pop %v751
    %v764 = vmul.f32 %v763, %v751
    %v765 = vmul.f32 %v764, %v763
    %v766 = vmul.f32 0.5, %v765
    %v767 = vsub.f32 1.5, %v766
    %v768 = vmul.f32 %v763, %v767
    %vm769 = vweird.f32 %v751
    %vm770 = vweird.f32 %v763
    %vm771 = vmor %vm769, %vm770
    %v772 = vsel %vm771, %v763, %v768
    %v773 = vmul.f32 %v666, %v762
    %v774 = vmul.f32 %v667, %v772
    %v775 = vld [vmem:[%s3 + $0xa] sm:$0x3]
    %v777 = vperm.slane %v775, 0
    %v778 = vperm.slane %v775, 1
    %v781 = vmul.f32 %v773, %v777
    %v782 = vmul.f32 %v774, %v778
    %v783 = vld [vmem:[%s3 + $0xc] sm:$0x3]
    %v785 = vperm.slane %v783, 0
    %v786 = vperm.slane %v783, 1
    %v789 = vadd.f32 %v781, %v785
    %v790 = vadd.f32 %v782, %v786
    %v791 = vpack.c.bf16 %v789, %v789
    %v792 = vpack.c.bf16 %v790, %v790
    %v793 = vld [vmem:[#allocation6 + $0x8] sm:$0xff]
    %v794 = vld [vmem:[#allocation6 + $0x38] sm:$0xff]
    %v795 = vld [vmem:[#allocation6 + $0x68] sm:$0xff]
    %v796 = vld [vmem:[#allocation6 + $0x98] sm:$0xff]
    %v797 = vld [vmem:[#allocation6 + $0xc8] sm:$0xff]
    %v798 = vld [vmem:[#allocation6 + $0xf8] sm:$0xff]
    %v799 = vld [vmem:[#allocation6 + $0x128] sm:$0xff]
    %v800 = vld [vmem:[#allocation6 + $0x158] sm:$0xff]
    %v801 = vld [vmem:[#allocation6 + $0x188] sm:$0xff]
    %v802 = vld [vmem:[#allocation6 + $0x1b8] sm:$0xff]
    %v803 = vld [vmem:[#allocation6 + $0x1e8] sm:$0xff]
    %v804 = vld [vmem:[#allocation6 + $0x218] sm:$0xff]
    %v805 = vld [vmem:[#allocation6 + $0x248] sm:$0xff]
    %v806 = vld [vmem:[#allocation6 + $0x278] sm:$0xff]
    %v807 = vld [vmem:[#allocation6 + $0x2a8] sm:$0xff]
    %v808 = vld [vmem:[#allocation6 + $0x2d8] sm:$0xff]
    %v809 = vld [vmem:[#allocation6 + $0x308] sm:$0xff]
    %v810 = vld [vmem:[#allocation6 + $0x338] sm:$0xff]
    %v811 = vld [vmem:[#allocation6 + $0x368] sm:$0xff]
    %v812 = vld [vmem:[#allocation6 + $0x398] sm:$0xff]
    %v813 = vld [vmem:[#allocation6 + $0x3c8] sm:$0xff]
    %v814 = vld [vmem:[#allocation6 + $0x3f8] sm:$0xff]
    %v815 = vld [vmem:[#allocation6 + $0x428] sm:$0xff]
    %v816 = vld [vmem:[#allocation6 + $0x458] sm:$0xff]
    %v817 = vld [vmem:[#allocation6 + $0x488] sm:$0xff]
    %v818 = vld [vmem:[#allocation6 + $0x4b8] sm:$0xff]
    %v819 = vld [vmem:[#allocation6 + $0x4e8] sm:$0xff]
    %v820 = vld [vmem:[#allocation6 + $0x518] sm:$0xff]
    %v821 = vld [vmem:[#allocation6 + $0x548] sm:$0xff]
    %v822 = vld [vmem:[#allocation6 + $0x578] sm:$0xff]
    %v823 = vld [vmem:[#allocation6 + $0x5a8] sm:$0xff]
    %v824 = vld [vmem:[#allocation6 + $0x5d8] sm:$0xff]
    %v825 = vld [vmem:[%s3 + $0x8] sm:$0x3]
    %v827 = vperm.slane %v825, 0
    %v828 = vperm.slane %v825, 1
    %v863 = vunpack.c.l.b16 %v793
    %v864 = vunpack.c.h.b16 %v793
    %v865 = vunpack.c.l.b16 %v794
    %v866 = vunpack.c.h.b16 %v794
    %v867 = vunpack.c.l.b16 %v795
    %v868 = vunpack.c.h.b16 %v795
    %v869 = vunpack.c.l.b16 %v796
    %v870 = vunpack.c.h.b16 %v796
    %v871 = vunpack.c.l.b16 %v797
    %v872 = vunpack.c.h.b16 %v797
    %v873 = vunpack.c.l.b16 %v798
    %v874 = vunpack.c.h.b16 %v798
    %v875 = vunpack.c.l.b16 %v799
    %v876 = vunpack.c.h.b16 %v799
    %v877 = vunpack.c.l.b16 %v800
    %v878 = vunpack.c.h.b16 %v800
    %v879 = vunpack.c.l.b16 %v801
    %v880 = vunpack.c.h.b16 %v801
    %v881 = vunpack.c.l.b16 %v802
    %v882 = vunpack.c.h.b16 %v802
    %v883 = vunpack.c.l.b16 %v803
    %v884 = vunpack.c.h.b16 %v803
    %v885 = vunpack.c.l.b16 %v804
    %v886 = vunpack.c.h.b16 %v804
    %v887 = vunpack.c.l.b16 %v805
    %v888 = vunpack.c.h.b16 %v805
    %v889 = vunpack.c.l.b16 %v806
    %v890 = vunpack.c.h.b16 %v806
    %v891 = vunpack.c.l.b16 %v807
    %v892 = vunpack.c.h.b16 %v807
    %v893 = vunpack.c.l.b16 %v808
    %v894 = vunpack.c.h.b16 %v808
    %v895 = vunpack.c.l.b16 %v809
    %v896 = vunpack.c.h.b16 %v809
    %v897 = vunpack.c.l.b16 %v810
    %v898 = vunpack.c.h.b16 %v810
    %v899 = vunpack.c.l.b16 %v811
    %v900 = vunpack.c.h.b16 %v811
    %v901 = vunpack.c.l.b16 %v812
    %v902 = vunpack.c.h.b16 %v812
    %v903 = vunpack.c.l.b16 %v813
    %v904 = vunpack.c.h.b16 %v813
    %v905 = vunpack.c.l.b16 %v814
    %v906 = vunpack.c.h.b16 %v814
    %v907 = vunpack.c.l.b16 %v815
    %v908 = vunpack.c.h.b16 %v815
    %v909 = vunpack.c.l.b16 %v816
    %v910 = vunpack.c.h.b16 %v816
    %v911 = vunpack.c.l.b16 %v817
    %v912 = vunpack.c.h.b16 %v817
    %v913 = vunpack.c.l.b16 %v818
    %v914 = vunpack.c.h.b16 %v818
    %v915 = vunpack.c.l.b16 %v819
    %v916 = vunpack.c.h.b16 %v819
    %v917 = vunpack.c.l.b16 %v820
    %v918 = vunpack.c.h.b16 %v820
    %v919 = vunpack.c.l.b16 %v821
    %v920 = vunpack.c.h.b16 %v821
    %v921 = vunpack.c.l.b16 %v822
    %v922 = vunpack.c.h.b16 %v822
    %v923 = vunpack.c.l.b16 %v823
    %v924 = vunpack.c.h.b16 %v823
    %v925 = vunpack.c.l.b16 %v824
    %v926 = vunpack.c.h.b16 %v824
    %v927 = vpack.c.b16 %v865, %v863
    %v928 = vpack.c.b16 %v866, %v864
    %v929 = vpack.c.b16 %v869, %v867
    %v930 = vpack.c.b16 %v870, %v868
    %v931 = vpack.c.b16 %v873, %v871
    %v932 = vpack.c.b16 %v874, %v872
    %v933 = vpack.c.b16 %v877, %v875
    %v934 = vpack.c.b16 %v878, %v876
    %v935 = vpack.c.b16 %v881, %v879
    %v936 = vpack.c.b16 %v882, %v880
    %v937 = vpack.c.b16 %v885, %v883
    %v938 = vpack.c.b16 %v886, %v884
    %v939 = vpack.c.b16 %v889, %v887
    %v940 = vpack.c.b16 %v890, %v888
    %v941 = vpack.c.b16 %v893, %v891
    %v942 = vpack.c.b16 %v894, %v892
    %v943 = vpack.c.b16 %v897, %v895
    %v944 = vpack.c.b16 %v898, %v896
    %v945 = vpack.c.b16 %v901, %v899
    %v946 = vpack.c.b16 %v902, %v900
    %v947 = vpack.c.b16 %v905, %v903
    %v948 = vpack.c.b16 %v906, %v904
    %v949 = vpack.c.b16 %v909, %v907
    %v950 = vpack.c.b16 %v910, %v908
    %v951 = vpack.c.b16 %v913, %v911
    %v952 = vpack.c.b16 %v914, %v912
    %v953 = vpack.c.b16 %v917, %v915
    %v954 = vpack.c.b16 %v918, %v916
    %v955 = vpack.c.b16 %v921, %v919
    %v956 = vpack.c.b16 %v922, %v920
    %v957 = vpack.c.b16 %v925, %v923
    %v958 = vpack.c.b16 %v926, %v924
    %991 = vmatpush.bf16.msra.mxu0 %v941
    %992 = vmatpush.bf16.msra.mxu0 %v939
    %993 = vmatpush.bf16.msra.mxu0 %v937
    %994 = vmatpush.bf16.msra.mxu0 %v935
    %995 = vmatpush.bf16.msra.mxu0 %v933
    %996 = vmatpush.bf16.msra.mxu0 %v931
    %997 = vmatpush.bf16.msra.mxu0 %v929
    %998 = vmatpush.bf16.msra.mxu0 %v927
    %999 = vmatmul.bf16.gmra.mxu0 %v791
    %v1000 = vpop.f32.mrf.mxu0
    %v1001 = vadd.f32 %v827, %v1000
    %v1002 = vpop.f32.mrf.mxu0
    %1003 = vdwg.mxu0
    %1004 = vmatpush.bf16.msra.mxu0 %v957
    %1005 = vmatpush.bf16.msra.mxu0 %v955
    %1006 = vmatpush.bf16.msra.mxu0 %v953
    %1007 = vmatpush.bf16.msra.mxu0 %v951
    %1008 = vmatpush.bf16.msra.mxu0 %v949
    %1009 = vmatpush.bf16.msra.mxu0 %v947
    %1010 = vmatpush.bf16.msra.mxu0 %v945
    %1011 = vmatpush.bf16.msra.mxu0 %v943
    %1012 = vmatmul.bf16.gmra.mxu0 %v792
    %v1013 = vpop.f32.mrf.mxu0
    %v1014 = vadd.f32 %v1001, %v1013
    %v1015 = vpop.f32.mrf.mxu0
    %1016 = vdwg.mxu0
    %1017 = vmatpush.bf16.msra.mxu0 %v942
    %1018 = vmatpush.bf16.msra.mxu0 %v940
    %1019 = vmatpush.bf16.msra.mxu0 %v938
    %1020 = vmatpush.bf16.msra.mxu0 %v936
    %1021 = vmatpush.bf16.msra.mxu0 %v934
    %1022 = vmatpush.bf16.msra.mxu0 %v932
    %1023 = vmatpush.bf16.msra.mxu0 %v930
    %1024 = vmatpush.bf16.msra.mxu0 %v928
    %1025 = vmatmul.bf16.gmra.mxu0 %v791
    %v1026 = vpop.f32.mrf.mxu0
    %v1027 = vadd.f32 %v828, %v1026
    %v1028 = vpop.f32.mrf.mxu0
    %1029 = vdwg.mxu0
    %1030 = vmatpush.bf16.msra.mxu0 %v958
    %1031 = vmatpush.bf16.msra.mxu0 %v956
    %1032 = vmatpush.bf16.msra.mxu0 %v954
    %1033 = vmatpush.bf16.msra.mxu0 %v952
    %1034 = vmatpush.bf16.msra.mxu0 %v950
    %1035 = vmatpush.bf16.msra.mxu0 %v948
    %1036 = vmatpush.bf16.msra.mxu0 %v946
    %1037 = vmatpush.bf16.msra.mxu0 %v944
    %1038 = vmatmul.bf16.gmra.mxu0 %v792
    %v1039 = vpop.f32.mrf.mxu0
    %v1040 = vadd.f32 %v1027, %v1039
    %v1041 = vpop.f32.mrf.mxu0
    %1042 = vdwg.mxu0
    %v1043 = vsub.f32 0.0, %v1014
    %v1044 = vsub.f32 0.0, %v1040
    %v1045 = vmul.f32 %v1043, 1.442695
    %v1046 = vpow.pop %v1045
    %v1047 = vmul.f32 %v1044, 1.442695
    %v1048 = vpow.pop %v1047
    %v1049 = vadd.f32 %v1046, 1.0
    %v1050 = vadd.f32 %v1048, 1.0
    %v1051 = vrcp.pop %v1049
    %v1052 = vrcp.pop %v1050
    %v1053 = vmul.f32 %v1014, %v1051
    %v1054 = vmul.f32 %v1040, %v1052
    %v1055 = vadd.f32 %v276, %v1053
    %v1056 = vadd.f32 %v277, %v1054
    %v1057 = vpack.c.bf16 %v1055, %v1055
    %v1058 = vpack.c.bf16 %v1056, %v1056
    %v1059 = vld [vmem:[#allocation6 + $0x10] sm:$0xf]
    %v1060 = vld [vmem:[#allocation6 + $0x40] sm:$0xf]
    %v1061 = vld [vmem:[#allocation6 + $0x70] sm:$0xf]
    %v1062 = vld [vmem:[#allocation6 + $0xa0] sm:$0xf]
    %v1063 = vld [vmem:[#allocation6 + $0xd0] sm:$0xf]
    %v1064 = vld [vmem:[#allocation6 + $0x100] sm:$0xf]
    %v1065 = vld [vmem:[#allocation6 + $0x130] sm:$0xf]
    %v1066 = vld [vmem:[#allocation6 + $0x160] sm:$0xf]
    %v1067 = vld [vmem:[#allocation6 + $0x190] sm:$0xf]
    %v1068 = vld [vmem:[#allocation6 + $0x1c0] sm:$0xf]
    %v1069 = vld [vmem:[#allocation6 + $0x1f0] sm:$0xf]
    %v1070 = vld [vmem:[#allocation6 + $0x220] sm:$0xf]
    %v1071 = vld [vmem:[#allocation6 + $0x250] sm:$0xf]
    %v1072 = vld [vmem:[#allocation6 + $0x280] sm:$0xf]
    %v1073 = vld [vmem:[#allocation6 + $0x2b0] sm:$0xf]
    %v1074 = vld [vmem:[#allocation6 + $0x2e0] sm:$0xf]
    %v1075 = vld [vmem:[#allocation6 + $0x310] sm:$0xf]
    %v1076 = vld [vmem:[#allocation6 + $0x340] sm:$0xf]
    %v1077 = vld [vmem:[#allocation6 + $0x370] sm:$0xf]
    %v1078 = vld [vmem:[#allocation6 + $0x3a0] sm:$0xf]
    %v1079 = vld [vmem:[#allocation6 + $0x3d0] sm:$0xf]
    %v1080 = vld [vmem:[#allocation6 + $0x400] sm:$0xf]
    %v1081 = vld [vmem:[#allocation6 + $0x430] sm:$0xf]
    %v1082 = vld [vmem:[#allocation6 + $0x460] sm:$0xf]
    %v1083 = vld [vmem:[#allocation6 + $0x490] sm:$0xf]
    %v1084 = vld [vmem:[#allocation6 + $0x4c0] sm:$0xf]
    %v1085 = vld [vmem:[#allocation6 + $0x4f0] sm:$0xf]
    %v1086 = vld [vmem:[#allocation6 + $0x520] sm:$0xf]
    %v1087 = vld [vmem:[#allocation6 + $0x550] sm:$0xf]
    %v1088 = vld [vmem:[#allocation6 + $0x580] sm:$0xf]
    %v1089 = vld [vmem:[#allocation6 + $0x5b0] sm:$0xf]
    %v1090 = vld [vmem:[#allocation6 + $0x5e0] sm:$0xf]
    %v1091 = vld [vmem:[%s3 + $0xe] sm:$0x1]
    %v1093 = vperm.slane %v1091, 0
    %v1127 = vunpack.c.l.b16 %v1059
    %v1128 = vunpack.c.l.b16 %v1060
    %v1129 = vunpack.c.l.b16 %v1061
    %v1130 = vunpack.c.l.b16 %v1062
    %v1131 = vunpack.c.l.b16 %v1063
    %v1132 = vunpack.c.l.b16 %v1064
    %v1133 = vunpack.c.l.b16 %v1065
    %v1134 = vunpack.c.l.b16 %v1066
    %v1135 = vunpack.c.l.b16 %v1067
    %v1136 = vunpack.c.l.b16 %v1068
    %v1137 = vunpack.c.l.b16 %v1069
    %v1138 = vunpack.c.l.b16 %v1070
    %v1139 = vunpack.c.l.b16 %v1071
    %v1140 = vunpack.c.l.b16 %v1072
    %v1141 = vunpack.c.l.b16 %v1073
    %v1142 = vunpack.c.l.b16 %v1074
    %v1143 = vunpack.c.l.b16 %v1075
    %v1144 = vunpack.c.l.b16 %v1076
    %v1145 = vunpack.c.l.b16 %v1077
    %v1146 = vunpack.c.l.b16 %v1078
    %v1147 = vunpack.c.l.b16 %v1079
    %v1148 = vunpack.c.l.b16 %v1080
    %v1149 = vunpack.c.l.b16 %v1081
    %v1150 = vunpack.c.l.b16 %v1082
    %v1151 = vunpack.c.l.b16 %v1083
    %v1152 = vunpack.c.l.b16 %v1084
    %v1153 = vunpack.c.l.b16 %v1085
    %v1154 = vunpack.c.l.b16 %v1086
    %v1155 = vunpack.c.l.b16 %v1087
    %v1156 = vunpack.c.l.b16 %v1088
    %v1157 = vunpack.c.l.b16 %v1089
    %v1158 = vunpack.c.l.b16 %v1090
    %v1159 = vpack.c.b16 %v1128, %v1127
    %v1160 = vpack.c.b16 %v1130, %v1129
    %v1161 = vpack.c.b16 %v1132, %v1131
    %v1162 = vpack.c.b16 %v1134, %v1133
    %v1163 = vpack.c.b16 %v1136, %v1135
    %v1164 = vpack.c.b16 %v1138, %v1137
    %v1165 = vpack.c.b16 %v1140, %v1139
    %v1166 = vpack.c.b16 %v1142, %v1141
    %v1167 = vpack.c.b16 %v1144, %v1143
    %v1168 = vpack.c.b16 %v1146, %v1145
    %v1169 = vpack.c.b16 %v1148, %v1147
    %v1170 = vpack.c.b16 %v1150, %v1149
    %v1171 = vpack.c.b16 %v1152, %v1151
    %v1172 = vpack.c.b16 %v1154, %v1153
    %v1173 = vpack.c.b16 %v1156, %v1155
    %v1174 = vpack.c.b16 %v1158, %v1157
    %1191 = vmatpush.bf16.msra.mxu0 %v1166
    %1192 = vmatpush.bf16.msra.mxu0 %v1165
    %1193 = vmatpush.bf16.msra.mxu0 %v1164
    %1194 = vmatpush.bf16.msra.mxu0 %v1163
    %1195 = vmatpush.bf16.msra.mxu0 %v1162
    %1196 = vmatpush.bf16.msra.mxu0 %v1161
    %1197 = vmatpush.bf16.msra.mxu0 %v1160
    %1198 = vmatpush.bf16.msra.mxu0 %v1159
    %1199 = vmatmul.bf16.gmra.mxu0 %v1057
    %v1200 = vpop.f32.mrf.mxu0
    %v1201 = vadd.f32 %v1093, %v1200
    %v1202 = vpop.f32.mrf.mxu0
    %1203 = vdwg.mxu0
    %1204 = vmatpush.bf16.msra.mxu0 %v1174
    %1205 = vmatpush.bf16.msra.mxu0 %v1173
    %1206 = vmatpush.bf16.msra.mxu0 %v1172
    %1207 = vmatpush.bf16.msra.mxu0 %v1171
    %1208 = vmatpush.bf16.msra.mxu0 %v1170
    %1209 = vmatpush.bf16.msra.mxu0 %v1169
    %1210 = vmatpush.bf16.msra.mxu0 %v1168
    %1211 = vmatpush.bf16.msra.mxu0 %v1167
    %1212 = vmatmul.bf16.gmra.mxu0 %v1058
    %v1213 = vpop.f32.mrf.mxu0
    %v1214 = vadd.f32 %v1201, %v1213
    %v1215 = vpop.f32.mrf.mxu0
    %1216 = vdwg.mxu0
    %v1217 = vsub.f32 0.0, %v1214
    %v1218 = vmul.f32 %v1217, 1.442695
    %v1219 = vpow.pop %v1218
    %v1220 = vadd.f32 %v1219, 1.0
    %v1221 = vrcp.pop %v1220
    %v1222 = vmul.f32 %v1214, %v1221
    %v1223 = vpack.c.bf16 %v1222, %v1222
    %v1224 = vld [vmem:[#allocation4 + $0x8] sm:$0xf]
    %v1225 = vld [vmem:[#allocation4 + $0x40] sm:$0xf]
    %v1226 = vld [vmem:[#allocation4 + $0x78] sm:$0xf]
    %v1227 = vld [vmem:[#allocation4 + $0xb0] sm:$0xf]
    %v1228 = vld [vmem:[#allocation4 + $0xe8] sm:$0xf]
    %v1229 = vld [vmem:[#allocation4 + $0x120] sm:$0xf]
    %v1230 = vld [vmem:[#allocation4 + $0x158] sm:$0xf]
    %v1231 = vld [vmem:[#allocation4 + $0x190] sm:$0xf]
    %v1232 = vld [vmem:[#allocation4 + $0x1c8] sm:$0xf]
    %v1233 = vld [vmem:[#allocation4 + $0x200] sm:$0xf]
    %v1234 = vld [vmem:[#allocation4 + $0x238] sm:$0xf]
    %v1235 = vld [vmem:[#allocation4 + $0x270] sm:$0xf]
    %v1236 = vld [vmem:[#allocation4 + $0x2a8] sm:$0xf]
    %v1237 = vld [vmem:[#allocation4 + $0x2e0] sm:$0xf]
    %v1238 = vld [vmem:[#allocation4 + $0x318] sm:$0xf]
    %v1239 = vld [vmem:[#allocation4 + $0x350] sm:$0xf]
    %v1240 = vld [vmem:[%s3 + $0xf] sm:$0x1]
    %v1242 = vperm.slane %v1240, 0
    %v1260 = vunpack.c.l.b16 %v1224
    %v1261 = vunpack.c.l.b16 %v1225
    %v1262 = vunpack.c.l.b16 %v1226
    %v1263 = vunpack.c.l.b16 %v1227
    %v1264 = vunpack.c.l.b16 %v1228
    %v1265 = vunpack.c.l.b16 %v1229
    %v1266 = vunpack.c.l.b16 %v1230
    %v1267 = vunpack.c.l.b16 %v1231
    %v1268 = vunpack.c.l.b16 %v1232
    %v1269 = vunpack.c.l.b16 %v1233
    %v1270 = vunpack.c.l.b16 %v1234
    %v1271 = vunpack.c.l.b16 %v1235
    %v1272 = vunpack.c.l.b16 %v1236
    %v1273 = vunpack.c.l.b16 %v1237
    %v1274 = vunpack.c.l.b16 %v1238
    %v1275 = vunpack.c.l.b16 %v1239
    %v1276 = vpack.c.b16 %v1261, %v1260
    %v1277 = vpack.c.b16 %v1263, %v1262
    %v1278 = vpack.c.b16 %v1265, %v1264
    %v1279 = vpack.c.b16 %v1267, %v1266
    %v1280 = vpack.c.b16 %v1269, %v1268
    %v1281 = vpack.c.b16 %v1271, %v1270
    %v1282 = vpack.c.b16 %v1273, %v1272
    %v1283 = vpack.c.b16 %v1275, %v1274
    %1292 = vmatpush.bf16.msra.mxu0 %v1283
    %1293 = vmatpush.bf16.msra.mxu0 %v1282
    %1294 = vmatpush.bf16.msra.mxu0 %v1281
    %1295 = vmatpush.bf16.msra.mxu0 %v1280
    %1296 = vmatpush.bf16.msra.mxu0 %v1279
    %1297 = vmatpush.bf16.msra.mxu0 %v1278
    %1298 = vmatpush.bf16.msra.mxu0 %v1277
    %1299 = vmatpush.bf16.msra.mxu0 %v1276
    %1300 = vmatmul.bf16.gmra.mxu0 %v1223
    %v1301 = vpop.f32.mrf.mxu0
    %v1302 = vadd.f32 %v1242, %v1301
    %v1303 = vpop.f32.mrf.mxu0
    %1304 = vdwg.mxu0
    %v1305 = vsub.f32 0.0, %v1302
    %v1306 = vmul.f32 %v1305, 1.442695
    %v1307 = vpow.pop %v1306
    %v1308 = vadd.f32 %v1307, 1.0
    %v1309 = vrcp.pop %v1308
    %v1310 = vmul.f32 %v1302, %v1309
    %v1311 = vld [vmem:[%s8 + $0x40] sm:$0xff]
    %v1312 = vld [vmem:[%s8 + $0x48] sm:$0xff]
    %v1313 = vld [vmem:[%s8 + $0x50] sm:$0xff]
    %v1314 = vld [vmem:[%s8 + $0x58] sm:$0xff]
    %v1315 = vld [vmem:[%s8 + $0x60] sm:$0xff]
    %v1316 = vld [vmem:[%s8 + $0x68] sm:$0xff]
    %v1317 = vld [vmem:[%s8 + $0x70] sm:$0xff]
    %v1318 = vld [vmem:[%s8 + $0x78] sm:$0xff]
    %v1319 = vld [vmem:[%s8 + $0x80] sm:$0xff]
    %v1320 = vld [vmem:[%s8 + $0x88] sm:$0xff]
    %v1321 = vld [vmem:[%s8 + $0x90] sm:$0xff]
    %v1322 = vld [vmem:[%s8 + $0x98] sm:$0xff]
    %v1323 = vld [vmem:[%s8 + $0xa0] sm:$0xff]
    %v1324 = vld [vmem:[%s8 + $0xa8] sm:$0xff]
    %v1325 = vld [vmem:[%s8 + $0xb0] sm:$0xff]
    %v1326 = vld [vmem:[%s8 + $0xb8] sm:$0xff]
    %v1327 = vld [vmem:[%s9 + $0x8] sm:$0xff]
    %v1328 = vld [vmem:[%s9 + $0x28] sm:$0xff]
    %v1329 = vld [vmem:[%s9 + $0x48] sm:$0xff]
    %v1330 = vld [vmem:[%s9 + $0x68] sm:$0xff]
    %1331 = vmatpush.msra.mxu0 %v1326
    %1332 = vmatpush.msra.mxu0 %v1325
    %1333 = vmatpush.msra.mxu0 %v1324
    %1334 = vmatpush.msra.mxu0 %v1323
    %1335 = vmatpush.msra.mxu0 %v1322
    %1336 = vmatpush.msra.mxu0 %v1321
    %1337 = vmatpush.msra.mxu0 %v1320
    %1338 = vmatpush.msra.mxu0 %v1319
    %1339 = vmatpush.msra.mxu0 %v1318
    %1340 = vmatpush.msra.mxu0 %v1317
    %1341 = vmatpush.msra.mxu0 %v1316
    %1342 = vmatpush.msra.mxu0 %v1315
    %1343 = vmatpush.msra.mxu0 %v1314
    %1344 = vmatpush.msra.mxu0 %v1313
    %1345 = vmatpush.msra.mxu0 %v1312
    %1346 = vmatpush.msra.mxu0 %v1311
    %1347 = vmatmul.f32.gmra.mxu0 %v1310
    %v1348 = vpop.f32.mrf.mxu0
    %v1349 = vadd.f32 0.0, %v1348
    %1350 = vdwg.mxu0
    %v1352 = vsel %vm622, %v1349, 0
    %1354 = vmatpush.msra.mxu0 0.0
    %1355 = vmatpush.msra.mxu0 0.0
    %1356 = vmatpush.msra.mxu0 0.0
    %1357 = vmatpush.msra.mxu0 0.0
    %1358 = vmatpush.msra.mxu0 0.0
    %1359 = vmatpush.msra.mxu0 0.0
    %1360 = vmatpush.msra.mxu0 0.0
    %1361 = vmatpush.msra.mxu0 0.0
    %1362 = vmatpush.msra.mxu0 0.0
    %1363 = vmatpush.msra.mxu0 0.0
    %1364 = vmatpush.msra.mxu0 0.0
    %1365 = vmatpush.msra.mxu0 0.0
    %1366 = vmatpush.msra.mxu0 %v1330
    %1367 = vmatpush.msra.mxu0 %v1329
    %1368 = vmatpush.msra.mxu0 %v1328
    %1369 = vmatpush.msra.mxu0 %v1327
    %1370 = vmatmul.f32.gmra.mxu0 %v1352
    %v1371 = vpop.f32.mrf.mxu0
    %v1372 = vadd.f32 0.0, %v1371
    %1373 = vdwg.mxu0
    %v1374 = vsub.f32 %v1310, %v1372
    %v1375 = vmul.f32 %v1374, %v1374
    %1376 = vmatpush.msra.mxu0 %v1326
    %1377 = vmatpush.msra.mxu0 %v1325
    %1378 = vmatpush.msra.mxu0 %v1324
    %1379 = vmatpush.msra.mxu0 %v1323
    %1380 = vmatpush.msra.mxu0 %v1322
    %1381 = vmatpush.msra.mxu0 %v1321
    %1382 = vmatpush.msra.mxu0 %v1320
    %1383 = vmatpush.msra.mxu0 %v1319
    %1384 = vmatpush.msra.mxu0 %v1318
    %1385 = vmatpush.msra.mxu0 %v1317
    %1386 = vmatpush.msra.mxu0 %v1316
    %1387 = vmatpush.msra.mxu0 %v1315
    %1388 = vmatpush.msra.mxu0 %v1314
    %1389 = vmatpush.msra.mxu0 %v1313
    %1390 = vmatpush.msra.mxu0 %v1312
    %1391 = vmatpush.msra.mxu0 %v1311
    %1392 = vmatmul.f32.gmra.mxu0 %v1375
    %v1393 = vpop.f32.mrf.mxu0
    %v1394 = vadd.f32 0.0, %v1393
    %1395 = vdwg.mxu0
    %v1397 = vsel %vm622, %v1394, 0
    %1399 = vmatpush.msra.mxu0 0.0
    %1400 = vmatpush.msra.mxu0 0.0
    %1401 = vmatpush.msra.mxu0 0.0
    %1402 = vmatpush.msra.mxu0 0.0
    %1403 = vmatpush.msra.mxu0 0.0
    %1404 = vmatpush.msra.mxu0 0.0
    %1405 = vmatpush.msra.mxu0 0.0
    %1406 = vmatpush.msra.mxu0 0.0
    %1407 = vmatpush.msra.mxu0 0.0
    %1408 = vmatpush.msra.mxu0 0.0
    %1409 = vmatpush.msra.mxu0 0.0
    %1410 = vmatpush.msra.mxu0 0.0
    %1411 = vmatpush.msra.mxu0 %v1330
    %1412 = vmatpush.msra.mxu0 %v1329
    %1413 = vmatpush.msra.mxu0 %v1328
    %1414 = vmatpush.msra.mxu0 %v1327
    %1415 = vmatmul.f32.gmra.mxu0 %v1397
    %v1416 = vpop.f32.mrf.mxu0
    %v1417 = vadd.f32 1e-05, %v1416
    %1418 = vdwg.mxu0
    %v1419 = vrsqrt.pop %v1417
    %v1420 = vmul.f32 %v1419, %v1417
    %v1421 = vmul.f32 %v1420, %v1419
    %v1422 = vmul.f32 0.5, %v1421
    %v1423 = vsub.f32 1.5, %v1422
    %v1424 = vmul.f32 %v1419, %v1423
    %vm1425 = vweird.f32 %v1417
    %vm1426 = vweird.f32 %v1419
    %vm1427 = vmor %vm1425, %vm1426
    %v1428 = vsel %vm1427, %v1419, %v1424
    %v1429 = vmul.f32 %v1374, %v1428
    %v1430 = vld [vmem:[%s3 + $0x11] sm:$0x1]
    %v1432 = vperm.slane %v1430, 0
    %v1434 = vmul.f32 %v1429, %v1432
    %v1435 = vld [vmem:[%s3 + $0x12] sm:$0x1]
    %v1437 = vperm.slane %v1435, 0
    %v1439 = vadd.f32 %v1434, %v1437
    %v1440 = vpack.c.bf16 %v1439, %v1439
    %v1441 = vld [vmem:[#allocation4 + $0xc] sm:$0xf]
    %v1442 = vld [vmem:[#allocation4 + $0x44] sm:$0xf]
    %v1443 = vld [vmem:[#allocation4 + $0x7c] sm:$0xf]
    %v1444 = vld [vmem:[#allocation4 + $0xb4] sm:$0xf]
    %v1445 = vld [vmem:[#allocation4 + $0xec] sm:$0xf]
    %v1446 = vld [vmem:[#allocation4 + $0x124] sm:$0xf]
    %v1447 = vld [vmem:[#allocation4 + $0x15c] sm:$0xf]
    %v1448 = vld [vmem:[#allocation4 + $0x194] sm:$0xf]
    %v1449 = vld [vmem:[#allocation4 + $0x1cc] sm:$0xf]
    %v1450 = vld [vmem:[#allocation4 + $0x204] sm:$0xf]
    %v1451 = vld [vmem:[#allocation4 + $0x23c] sm:$0xf]
    %v1452 = vld [vmem:[#allocation4 + $0x274] sm:$0xf]
    %v1453 = vld [vmem:[#allocation4 + $0x2ac] sm:$0xf]
    %v1454 = vld [vmem:[#allocation4 + $0x2e4] sm:$0xf]
    %v1455 = vld [vmem:[#allocation4 + $0x31c] sm:$0xf]
    %v1456 = vld [vmem:[#allocation4 + $0x354] sm:$0xf]
    %v1457 = vld [vmem:[%s3 + $0x10] sm:$0x1]
    %v1459 = vperm.slane %v1457, 0
    %v1477 = vunpack.c.l.b16 %v1441
    %v1478 = vunpack.c.l.b16 %v1442
    %v1479 = vunpack.c.l.b16 %v1443
    %v1480 = vunpack.c.l.b16 %v1444
    %v1481 = vunpack.c.l.b16 %v1445
    %v1482 = vunpack.c.l.b16 %v1446
    %v1483 = vunpack.c.l.b16 %v1447
    %v1484 = vunpack.c.l.b16 %v1448
    %v1485 = vunpack.c.l.b16 %v1449
    %v1486 = vunpack.c.l.b16 %v1450
    %v1487 = vunpack.c.l.b16 %v1451
    %v1488 = vunpack.c.l.b16 %v1452
    %v1489 = vunpack.c.l.b16 %v1453
    %v1490 = vunpack.c.l.b16 %v1454
    %v1491 = vunpack.c.l.b16 %v1455
    %v1492 = vunpack.c.l.b16 %v1456
    %v1493 = vpack.c.b16 %v1478, %v1477
    %v1494 = vpack.c.b16 %v1480, %v1479
    %v1495 = vpack.c.b16 %v1482, %v1481
    %v1496 = vpack.c.b16 %v1484, %v1483
    %v1497 = vpack.c.b16 %v1486, %v1485
    %v1498 = vpack.c.b16 %v1488, %v1487
    %v1499 = vpack.c.b16 %v1490, %v1489
    %v1500 = vpack.c.b16 %v1492, %v1491
    %1509 = vmatpush.bf16.msra.mxu0 %v1500
    %1510 = vmatpush.bf16.msra.mxu0 %v1499
    %1511 = vmatpush.bf16.msra.mxu0 %v1498
    %1512 = vmatpush.bf16.msra.mxu0 %v1497
    %1513 = vmatpush.bf16.msra.mxu0 %v1496
    %1514 = vmatpush.bf16.msra.mxu0 %v1495
    %1515 = vmatpush.bf16.msra.mxu0 %v1494
    %1516 = vmatpush.bf16.msra.mxu0 %v1493
    %1517 = vmatmul.bf16.gmra.mxu0 %v1440
    %v1518 = vpop.f32.mrf.mxu0
    %v1519 = vadd.f32 %v1459, %v1518
    %v1520 = vpop.f32.mrf.mxu0
    %1521 = vdwg.mxu0
    %v1522 = vsub.f32 0.0, %v1519
    %v1523 = vmul.f32 %v1522, 1.442695
    %v1524 = vpow.pop %v1523
    %v1525 = vadd.f32 %v1524, 1.0
    %v1526 = vrcp.pop %v1525
    %v1527 = vmul.f32 %v1519, %v1526
    %v1528 = vadd.f32 %v1222, %v1527
    %v1529 = vpack.c.bf16 %v1528, %v1528
    %v1530 = vld [vmem:[#allocation4 + $0x10] sm:$0xf]
    %v1531 = vld [vmem:[#allocation4 + $0x48] sm:$0xf]
    %v1532 = vld [vmem:[#allocation4 + $0x80] sm:$0xf]
    %v1533 = vld [vmem:[#allocation4 + $0xb8] sm:$0xf]
    %v1534 = vld [vmem:[#allocation4 + $0xf0] sm:$0xf]
    %v1535 = vld [vmem:[#allocation4 + $0x128] sm:$0xf]
    %v1536 = vld [vmem:[#allocation4 + $0x160] sm:$0xf]
    %v1537 = vld [vmem:[#allocation4 + $0x198] sm:$0xf]
    %v1538 = vld [vmem:[#allocation4 + $0x1d0] sm:$0xf]
    %v1539 = vld [vmem:[#allocation4 + $0x208] sm:$0xf]
    %v1540 = vld [vmem:[#allocation4 + $0x240] sm:$0xf]
    %v1541 = vld [vmem:[#allocation4 + $0x278] sm:$0xf]
    %v1542 = vld [vmem:[#allocation4 + $0x2b0] sm:$0xf]
    %v1543 = vld [vmem:[#allocation4 + $0x2e8] sm:$0xf]
    %v1544 = vld [vmem:[#allocation4 + $0x320] sm:$0xf]
    %v1545 = vld [vmem:[#allocation4 + $0x358] sm:$0xf]
    %v1546 = vld [vmem:[%s3 + $0x13] sm:$0x1]
    %v1548 = vperm.slane %v1546, 0
    %v1566 = vunpack.c.l.b16 %v1530
    %v1567 = vunpack.c.l.b16 %v1531
    %v1568 = vunpack.c.l.b16 %v1532
    %v1569 = vunpack.c.l.b16 %v1533
    %v1570 = vunpack.c.l.b16 %v1534
    %v1571 = vunpack.c.l.b16 %v1535
    %v1572 = vunpack.c.l.b16 %v1536
    %v1573 = vunpack.c.l.b16 %v1537
    %v1574 = vunpack.c.l.b16 %v1538
    %v1575 = vunpack.c.l.b16 %v1539
    %v1576 = vunpack.c.l.b16 %v1540
    %v1577 = vunpack.c.l.b16 %v1541
    %v1578 = vunpack.c.l.b16 %v1542
    %v1579 = vunpack.c.l.b16 %v1543
    %v1580 = vunpack.c.l.b16 %v1544
    %v1581 = vunpack.c.l.b16 %v1545
    %v1582 = vpack.c.b16 %v1567, %v1566
    %v1583 = vpack.c.b16 %v1569, %v1568
    %v1584 = vpack.c.b16 %v1571, %v1570
    %v1585 = vpack.c.b16 %v1573, %v1572
    %v1586 = vpack.c.b16 %v1575, %v1574
    %v1587 = vpack.c.b16 %v1577, %v1576
    %v1588 = vpack.c.b16 %v1579, %v1578
    %v1589 = vpack.c.b16 %v1581, %v1580
    %1598 = vmatpush.bf16.msra.mxu0 %v1589
    %1599 = vmatpush.bf16.msra.mxu0 %v1588
    %1600 = vmatpush.bf16.msra.mxu0 %v1587
    %1601 = vmatpush.bf16.msra.mxu0 %v1586
    %1602 = vmatpush.bf16.msra.mxu0 %v1585
    %1603 = vmatpush.bf16.msra.mxu0 %v1584
    %1604 = vmatpush.bf16.msra.mxu0 %v1583
    %1605 = vmatpush.bf16.msra.mxu0 %v1582
    %1606 = vmatmul.bf16.gmra.mxu0 %v1529
    %v1607 = vpop.f32.mrf.mxu0
    %v1608 = vadd.f32 %v1548, %v1607
    %v1609 = vpop.f32.mrf.mxu0
    %1610 = vdwg.mxu0
    %v1611 = vld [vmem:[%s8] sm:$0xff]
    %v1612 = vld [vmem:[%s8 + $0x8] sm:$0xff]
    %v1613 = vld [vmem:[%s8 + $0x10] sm:$0xff]
    %v1614 = vld [vmem:[%s8 + $0x18] sm:$0xff]
    %v1615 = vld [vmem:[%s8 + $0x20] sm:$0xff]
    %v1616 = vld [vmem:[%s8 + $0x28] sm:$0xff]
    %v1617 = vld [vmem:[%s8 + $0x30] sm:$0xff]
    %v1618 = vld [vmem:[%s8 + $0x38] sm:$0xff]
    %v1619 = vld [vmem:[%s9] sm:$0xff]
    %v1620 = vld [vmem:[%s9 + $0x20] sm:$0xff]
    %v1621 = vld [vmem:[%s9 + $0x40] sm:$0xff]
    %v1622 = vld [vmem:[%s9 + $0x60] sm:$0xff]
    %vm1623 = vcmask 523264
    %v1625 = vsel %vm1623, %v1608, 0
    %1627 = vmatpush.msra.mxu0 0.0
    %1628 = vmatpush.msra.mxu0 0.0
    %1629 = vmatpush.msra.mxu0 0.0
    %1630 = vmatpush.msra.mxu0 0.0
    %1631 = vmatpush.msra.mxu0 0.0
    %1632 = vmatpush.msra.mxu0 0.0
    %1633 = vmatpush.msra.mxu0 0.0
    %1634 = vmatpush.msra.mxu0 0.0
    %1635 = vmatpush.msra.mxu0 %v1618
    %1636 = vmatpush.msra.mxu0 %v1617
    %1637 = vmatpush.msra.mxu0 %v1616
    %1638 = vmatpush.msra.mxu0 %v1615
    %1639 = vmatpush.msra.mxu0 %v1614
    %1640 = vmatpush.msra.mxu0 %v1613
    %1641 = vmatpush.msra.mxu0 %v1612
    %1642 = vmatpush.msra.mxu0 %v1611
    %1643 = vmatmul.f32.gmra.mxu0 %v1625
    %v1644 = vpop.f32.mrf.mxu0
    %v1645 = vadd.f32 0.0, %v1644
    %1646 = vdwg.mxu0
    %v1648 = vsel %vm622, %v1645, 0
    %1650 = vmatpush.msra.mxu0 0.0
    %1651 = vmatpush.msra.mxu0 0.0
    %1652 = vmatpush.msra.mxu0 0.0
    %1653 = vmatpush.msra.mxu0 0.0
    %1654 = vmatpush.msra.mxu0 0.0
    %1655 = vmatpush.msra.mxu0 0.0
    %1656 = vmatpush.msra.mxu0 0.0
    %1657 = vmatpush.msra.mxu0 0.0
    %1658 = vmatpush.msra.mxu0 0.0
    %1659 = vmatpush.msra.mxu0 0.0
    %1660 = vmatpush.msra.mxu0 0.0
    %1661 = vmatpush.msra.mxu0 0.0
    %1662 = vmatpush.msra.mxu0 %v1622
    %1663 = vmatpush.msra.mxu0 %v1621
    %1664 = vmatpush.msra.mxu0 %v1620
    %1665 = vmatpush.msra.mxu0 %v1619
    %1666 = vmatmul.f32.gmra.mxu0 %v1648
    %v1667 = vpop.f32.mrf.mxu0
    %v1668 = vadd.f32 0.0, %v1667
    %1669 = vdwg.mxu0
    %v1670 = vsub.f32 %v1608, %v1668
    %v1671 = vmul.f32 %v1670, %v1670
    %v1673 = vsel %vm1623, %v1671, 0
    %1675 = vmatpush.msra.mxu0 0.0
    %1676 = vmatpush.msra.mxu0 0.0
    %1677 = vmatpush.msra.mxu0 0.0
    %1678 = vmatpush.msra.mxu0 0.0
    %1679 = vmatpush.msra.mxu0 0.0
    %1680 = vmatpush.msra.mxu0 0.0
    %1681 = vmatpush.msra.mxu0 0.0
    %1682 = vmatpush.msra.mxu0 0.0
    %1683 = vmatpush.msra.mxu0 %v1618
    %1684 = vmatpush.msra.mxu0 %v1617
    %1685 = vmatpush.msra.mxu0 %v1616
    %1686 = vmatpush.msra.mxu0 %v1615
    %1687 = vmatpush.msra.mxu0 %v1614
    %1688 = vmatpush.msra.mxu0 %v1613
    %1689 = vmatpush.msra.mxu0 %v1612
    %1690 = vmatpush.msra.mxu0 %v1611
    %1691 = vmatmul.f32.gmra.mxu0 %v1673
    %v1692 = vpop.f32.mrf.mxu0
    %v1693 = vadd.f32 0.0, %v1692
    %1694 = vdwg.mxu0
    %v1696 = vsel %vm622, %v1693, 0
    %1698 = vmatpush.msra.mxu0 0.0
    %1699 = vmatpush.msra.mxu0 0.0
    %1700 = vmatpush.msra.mxu0 0.0
    %1701 = vmatpush.msra.mxu0 0.0
    %1702 = vmatpush.msra.mxu0 0.0
    %1703 = vmatpush.msra.mxu0 0.0
    %1704 = vmatpush.msra.mxu0 0.0
    %1705 = vmatpush.msra.mxu0 0.0
    %1706 = vmatpush.msra.mxu0 0.0
    %1707 = vmatpush.msra.mxu0 0.0
    %1708 = vmatpush.msra.mxu0 0.0
    %1709 = vmatpush.msra.mxu0 0.0
    %1710 = vmatpush.msra.mxu0 %v1622
    %1711 = vmatpush.msra.mxu0 %v1621
    %1712 = vmatpush.msra.mxu0 %v1620
    %1713 = vmatpush.msra.mxu0 %v1619
    %1714 = vmatmul.f32.gmra.mxu0 %v1696
    %v1715 = vpop.f32.mrf.mxu0
    %v1716 = vadd.f32 1e-05, %v1715
    %1717 = vdwg.mxu0
    %v1718 = vrsqrt.pop %v1716
    %v1719 = vmul.f32 %v1718, %v1716
    %v1720 = vmul.f32 %v1719, %v1718
    %v1721 = vmul.f32 0.5, %v1720
    %v1722 = vsub.f32 1.5, %v1721
    %v1723 = vmul.f32 %v1718, %v1722
    %vm1724 = vweird.f32 %v1716
    %vm1725 = vweird.f32 %v1718
    %vm1726 = vmor %vm1724, %vm1725
    %v1727 = vsel %vm1726, %v1718, %v1723
    %v1728 = vmul.f32 %v1670, %v1727
    %v1729 = vld [vmem:[%s3 + $0x14] sm:$0x1]
    %v1731 = vperm.slane %v1729, 0
    %v1733 = vmul.f32 %v1728, %v1731
    %v1734 = vld [vmem:[%s3 + $0x15] sm:$0x1]
    %v1736 = vperm.slane %v1734, 0
    %v1738 = vadd.f32 %v1733, %v1736
    %v1739 = vsub.f32 0.0, %v1738
    %v1740 = vmul.f32 %v1739, 1.442695
    %v1741 = vpow.pop %v1740
    %v1742 = vadd.f32 %v1741, 1.0
    %v1743 = vrcp.pop %v1742
    %v1744 = vmul.f32 %v1738, %v1743
    %v1745 = vpack.c.bf16 %v1744, %v1744
    %v1746 = vld [vmem:[%s5] sm:$0xf]
    %v1747 = vld [vmem:[%s5 + $0x8] sm:$0xf]
    %v1748 = vld [vmem:[%s5 + $0x10] sm:$0xf]
    %v1749 = vld [vmem:[%s5 + $0x18] sm:$0xf]
    %v1750 = vld [vmem:[%s5 + $0x20] sm:$0xf]
    %v1751 = vld [vmem:[%s5 + $0x28] sm:$0xf]
    %v1752 = vld [vmem:[%s5 + $0x30] sm:$0xf]
    %v1753 = vld [vmem:[%s5 + $0x38] sm:$0xf]
    %v1754 = vld [vmem:[%s3 + $0x16] sm:$0x1]
    %v1756 = vperm.slane %v1754, 0
    %v1766 = vunpack.c.l.b16 %v1746
    %v1767 = vunpack.c.l.b16 %v1747
    %v1768 = vunpack.c.l.b16 %v1748
    %v1769 = vunpack.c.l.b16 %v1749
    %v1770 = vunpack.c.l.b16 %v1750
    %v1771 = vunpack.c.l.b16 %v1751
    %v1772 = vunpack.c.l.b16 %v1752
    %v1773 = vunpack.c.l.b16 %v1753
    %v1774 = vpack.c.b16 %v1767, %v1766
    %v1775 = vpack.c.b16 %v1769, %v1768
    %v1776 = vpack.c.b16 %v1771, %v1770
    %v1777 = vpack.c.b16 %v1773, %v1772
    %v1783 = vsel %vm1623, %v1745, 0
    %1785 = vmatpush.bf16.msra.mxu0 0
    %1786 = vmatpush.bf16.msra.mxu0 0
    %1787 = vmatpush.bf16.msra.mxu0 0
    %1788 = vmatpush.bf16.msra.mxu0 0
    %1789 = vmatpush.bf16.msra.mxu0 %v1777
    %1790 = vmatpush.bf16.msra.mxu0 %v1776
    %1791 = vmatpush.bf16.msra.mxu0 %v1775
    %1792 = vmatpush.bf16.msra.mxu0 %v1774
    %1793 = vmatmul.bf16.gmra.mxu0 %v1783
    %v1794 = vpop.f32.mrf.mxu0
    %v1795 = vadd.f32 %v1756, %v1794
    %v1796 = vpop.f32.mrf.mxu0
    %1797 = vdwg.mxu0
    %v1798 = vsub.f32 0.0, %v1795
    %v1799 = vmul.f32 %v1798, 1.442695
    %v1800 = vpow.pop %v1799
    %v1801 = vadd.f32 %v1800, 1.0
    %v1802 = vrcp.pop %v1801
    %v1803 = vmul.f32 %v1795, %v1802
    %v1804 = vpack.c.bf16 %v1803, %v1803
    %v1805 = vld [vmem:[%s5 + $0x4] sm:$0xf]
    %v1806 = vld [vmem:[%s5 + $0xc] sm:$0xf]
    %v1807 = vld [vmem:[%s5 + $0x14] sm:$0xf]
    %v1808 = vld [vmem:[%s5 + $0x1c] sm:$0xf]
    %v1809 = vld [vmem:[%s5 + $0x24] sm:$0xf]
    %v1810 = vld [vmem:[%s5 + $0x2c] sm:$0xf]
    %v1811 = vld [vmem:[%s5 + $0x34] sm:$0xf]
    %v1812 = vld [vmem:[%s5 + $0x3c] sm:$0xf]
    %v1813 = vld [vmem:[%s3 + $0x17] sm:$0x1]
    %v1815 = vperm.slane %v1813, 0
    %v1825 = vunpack.c.l.b16 %v1805
    %v1826 = vunpack.c.l.b16 %v1806
    %v1827 = vunpack.c.l.b16 %v1807
    %v1828 = vunpack.c.l.b16 %v1808
    %v1829 = vunpack.c.l.b16 %v1809
    %v1830 = vunpack.c.l.b16 %v1810
    %v1831 = vunpack.c.l.b16 %v1811
    %v1832 = vunpack.c.l.b16 %v1812
    %v1833 = vpack.c.b16 %v1826, %v1825
    %v1834 = vpack.c.b16 %v1828, %v1827
    %v1835 = vpack.c.b16 %v1830, %v1829
    %v1836 = vpack.c.b16 %v1832, %v1831
    %v1842 = vsel %vm1623, %v1804, 0
    %1844 = vmatpush.bf16.msra.mxu0 0
    %1845 = vmatpush.bf16.msra.mxu0 0
    %1846 = vmatpush.bf16.msra.mxu0 0
    %1847 = vmatpush.bf16.msra.mxu0 0
    %1848 = vmatpush.bf16.msra.mxu0 %v1836
    %1849 = vmatpush.bf16.msra.mxu0 %v1835
    %1850 = vmatpush.bf16.msra.mxu0 %v1834
    %1851 = vmatpush.bf16.msra.mxu0 %v1833
    %1852 = vmatmul.bf16.gmra.mxu0 %v1842
    %v1853 = vpop.f32.mrf.mxu0
    %v1854 = vadd.f32 %v1815, %v1853
    %v1855 = vpop.f32.mrf.mxu0
    %1856 = vdwg.mxu0
    %v1857 = vsub.f32 0.0, %v1854
    %v1858 = vmul.f32 %v1857, 1.442695
    %v1859 = vpow.pop %v1858
    %v1860 = vadd.f32 %v1859, 1.0
    %v1861 = vrcp.pop %v1860
    %v1862 = vmul.f32 %v1854, %v1861
    %1863 = vmatpush.msra.mxu0 %v1326
    %1864 = vmatpush.msra.mxu0 %v1325
    %1865 = vmatpush.msra.mxu0 %v1324
    %1866 = vmatpush.msra.mxu0 %v1323
    %1867 = vmatpush.msra.mxu0 %v1322
    %1868 = vmatpush.msra.mxu0 %v1321
    %1869 = vmatpush.msra.mxu0 %v1320
    %1870 = vmatpush.msra.mxu0 %v1319
    %1871 = vmatpush.msra.mxu0 %v1318
    %1872 = vmatpush.msra.mxu0 %v1317
    %1873 = vmatpush.msra.mxu0 %v1316
    %1874 = vmatpush.msra.mxu0 %v1315
    %1875 = vmatpush.msra.mxu0 %v1314
    %1876 = vmatpush.msra.mxu0 %v1313
    %1877 = vmatpush.msra.mxu0 %v1312
    %1878 = vmatpush.msra.mxu0 %v1311
    %1879 = vmatmul.f32.gmra.mxu0 %v1862
    %v1880 = vpop.f32.mrf.mxu0
    %v1881 = vadd.f32 0.0, %v1880
    %1882 = vdwg.mxu0
    %v1884 = vsel %vm622, %v1881, 0
    %1886 = vmatpush.msra.mxu0 0.0
    %1887 = vmatpush.msra.mxu0 0.0
    %1888 = vmatpush.msra.mxu0 0.0
    %1889 = vmatpush.msra.mxu0 0.0
    %1890 = vmatpush.msra.mxu0 0.0
    %1891 = vmatpush.msra.mxu0 0.0
    %1892 = vmatpush.msra.mxu0 0.0
    %1893 = vmatpush.msra.mxu0 0.0
    %1894 = vmatpush.msra.mxu0 0.0
    %1895 = vmatpush.msra.mxu0 0.0
    %1896 = vmatpush.msra.mxu0 0.0
    %1897 = vmatpush.msra.mxu0 0.0
    %1898 = vmatpush.msra.mxu0 %v1330
    %1899 = vmatpush.msra.mxu0 %v1329
    %1900 = vmatpush.msra.mxu0 %v1328
    %1901 = vmatpush.msra.mxu0 %v1327
    %1902 = vmatmul.f32.gmra.mxu0 %v1884
    %v1903 = vpop.f32.mrf.mxu0
    %v1904 = vadd.f32 0.0, %v1903
    %1905 = vdwg.mxu0
    %v1906 = vsub.f32 %v1862, %v1904
    %v1907 = vmul.f32 %v1906, %v1906
    %1908 = vmatpush.msra.mxu0 %v1326
    %1909 = vmatpush.msra.mxu0 %v1325
    %1910 = vmatpush.msra.mxu0 %v1324
    %1911 = vmatpush.msra.mxu0 %v1323
    %1912 = vmatpush.msra.mxu0 %v1322
    %1913 = vmatpush.msra.mxu0 %v1321
    %1914 = vmatpush.msra.mxu0 %v1320
    %1915 = vmatpush.msra.mxu0 %v1319
    %1916 = vmatpush.msra.mxu0 %v1318
    %1917 = vmatpush.msra.mxu0 %v1317
    %1918 = vmatpush.msra.mxu0 %v1316
    %1919 = vmatpush.msra.mxu0 %v1315
    %1920 = vmatpush.msra.mxu0 %v1314
    %1921 = vmatpush.msra.mxu0 %v1313
    %1922 = vmatpush.msra.mxu0 %v1312
    %1923 = vmatpush.msra.mxu0 %v1311
    %1924 = vmatmul.f32.gmra.mxu0 %v1907
    %v1925 = vpop.f32.mrf.mxu0
    %v1926 = vadd.f32 0.0, %v1925
    %1927 = vdwg.mxu0
    %v1929 = vsel %vm622, %v1926, 0
    %1931 = vmatpush.msra.mxu0 0.0
    %1932 = vmatpush.msra.mxu0 0.0
    %1933 = vmatpush.msra.mxu0 0.0
    %1934 = vmatpush.msra.mxu0 0.0
    %1935 = vmatpush.msra.mxu0 0.0
    %1936 = vmatpush.msra.mxu0 0.0
    %1937 = vmatpush.msra.mxu0 0.0
    %1938 = vmatpush.msra.mxu0 0.0
    %1939 = vmatpush.msra.mxu0 0.0
    %1940 = vmatpush.msra.mxu0 0.0
    %1941 = vmatpush.msra.mxu0 0.0
    %1942 = vmatpush.msra.mxu0 0.0
    %1943 = vmatpush.msra.mxu0 %v1330
    %1944 = vmatpush.msra.mxu0 %v1329
    %1945 = vmatpush.msra.mxu0 %v1328
    %1946 = vmatpush.msra.mxu0 %v1327
    %1947 = vmatmul.f32.gmra.mxu0 %v1929
    %v1948 = vpop.f32.mrf.mxu0
    %v1949 = vadd.f32 1e-05, %v1948
    %1950 = vdwg.mxu0
    %v1951 = vrsqrt.pop %v1949
    %v1952 = vmul.f32 %v1951, %v1949
    %v1953 = vmul.f32 %v1952, %v1951
    %v1954 = vmul.f32 0.5, %v1953
    %v1955 = vsub.f32 1.5, %v1954
    %v1956 = vmul.f32 %v1951, %v1955
    %vm1957 = vweird.f32 %v1949
    %vm1958 = vweird.f32 %v1951
    %vm1959 = vmor %vm1957, %vm1958
    %v1960 = vsel %vm1959, %v1951, %v1956
    %v1961 = vmul.f32 %v1906, %v1960
    %v1962 = vld [vmem:[%s3 + $0x1a] sm:$0x1]
    %v1964 = vperm.slane %v1962, 0
    %v1966 = vmul.f32 %v1961, %v1964
    %v1967 = vld [vmem:[%s3 + $0x1b] sm:$0x1]
    %v1969 = vperm.slane %v1967, 0
    %v1971 = vadd.f32 %v1966, %v1969
    %v1972 = vpack.c.bf16 %v1971, %v1971
    %v1973 = vld [vmem:[#allocation4 + $0x14] sm:$0xf]
    %v1974 = vld [vmem:[#allocation4 + $0x4c] sm:$0xf]
    %v1975 = vld [vmem:[#allocation4 + $0x84] sm:$0xf]
    %v1976 = vld [vmem:[#allocation4 + $0xbc] sm:$0xf]
    %v1977 = vld [vmem:[#allocation4 + $0xf4] sm:$0xf]
    %v1978 = vld [vmem:[#allocation4 + $0x12c] sm:$0xf]
    %v1979 = vld [vmem:[#allocation4 + $0x164] sm:$0xf]
    %v1980 = vld [vmem:[#allocation4 + $0x19c] sm:$0xf]
    %v1981 = vld [vmem:[#allocation4 + $0x1d4] sm:$0xf]
    %v1982 = vld [vmem:[#allocation4 + $0x20c] sm:$0xf]
    %v1983 = vld [vmem:[#allocation4 + $0x244] sm:$0xf]
    %v1984 = vld [vmem:[#allocation4 + $0x27c] sm:$0xf]
    %v1985 = vld [vmem:[#allocation4 + $0x2b4] sm:$0xf]
    %v1986 = vld [vmem:[#allocation4 + $0x2ec] sm:$0xf]
    %v1987 = vld [vmem:[#allocation4 + $0x324] sm:$0xf]
    %v1988 = vld [vmem:[#allocation4 + $0x35c] sm:$0xf]
    %v1989 = vpack.c.bf16 %v1310, %v1310
    %v1990 = vld [vmem:[#allocation4 + $0x18] sm:$0xf]
    %v1991 = vld [vmem:[#allocation4 + $0x50] sm:$0xf]
    %v1992 = vld [vmem:[#allocation4 + $0x88] sm:$0xf]
    %v1993 = vld [vmem:[#allocation4 + $0xc0] sm:$0xf]
    %v1994 = vld [vmem:[#allocation4 + $0xf8] sm:$0xf]
    %v1995 = vld [vmem:[#allocation4 + $0x130] sm:$0xf]
    %v1996 = vld [vmem:[#allocation4 + $0x168] sm:$0xf]
    %v1997 = vld [vmem:[#allocation4 + $0x1a0] sm:$0xf]
    %v1998 = vld [vmem:[#allocation4 + $0x1d8] sm:$0xf]
    %v1999 = vld [vmem:[#allocation4 + $0x210] sm:$0xf]
    %v2000 = vld [vmem:[#allocation4 + $0x248] sm:$0xf]
    %v2001 = vld [vmem:[#allocation4 + $0x280] sm:$0xf]
    %v2002 = vld [vmem:[#allocation4 + $0x2b8] sm:$0xf]
    %v2003 = vld [vmem:[#allocation4 + $0x2f0] sm:$0xf]
    %v2004 = vld [vmem:[#allocation4 + $0x328] sm:$0xf]
    %v2005 = vld [vmem:[#allocation4 + $0x360] sm:$0xf]
    %v2022 = vunpack.c.l.b16 %v1990
    %v2023 = vunpack.c.l.b16 %v1991
    %v2024 = vunpack.c.l.b16 %v1992
    %v2025 = vunpack.c.l.b16 %v1993
    %v2026 = vunpack.c.l.b16 %v1994
    %v2027 = vunpack.c.l.b16 %v1995
    %v2028 = vunpack.c.l.b16 %v1996
    %v2029 = vunpack.c.l.b16 %v1997
    %v2030 = vunpack.c.l.b16 %v1998
    %v2031 = vunpack.c.l.b16 %v1999
    %v2032 = vunpack.c.l.b16 %v2000
    %v2033 = vunpack.c.l.b16 %v2001
    %v2034 = vunpack.c.l.b16 %v2002
    %v2035 = vunpack.c.l.b16 %v2003
    %v2036 = vunpack.c.l.b16 %v2004
    %v2037 = vunpack.c.l.b16 %v2005
    %v2038 = vpack.c.b16 %v2023, %v2022
    %v2039 = vpack.c.b16 %v2025, %v2024
    %v2040 = vpack.c.b16 %v2027, %v2026
    %v2041 = vpack.c.b16 %v2029, %v2028
    %v2042 = vpack.c.b16 %v2031, %v2030
    %v2043 = vpack.c.b16 %v2033, %v2032
    %v2044 = vpack.c.b16 %v2035, %v2034
    %v2045 = vpack.c.b16 %v2037, %v2036
    %2054 = vmatpush.bf16.msra.mxu0 %v2045
    %2055 = vmatpush.bf16.msra.mxu0 %v2044
    %2056 = vmatpush.bf16.msra.mxu0 %v2043
    %2057 = vmatpush.bf16.msra.mxu0 %v2042
    %2058 = vmatpush.bf16.msra.mxu0 %v2041
    %2059 = vmatpush.bf16.msra.mxu0 %v2040
    %2060 = vmatpush.bf16.msra.mxu0 %v2039
    %2061 = vmatpush.bf16.msra.mxu0 %v2038
    %2062 = vmatmul.bf16.gmra.mxu0 %v1989
    %v2063 = vpop.f32.mrf.mxu0
    %v2064 = vadd.f32 0.0, %v2063
    %v2065 = vpop.f32.mrf.mxu0
    %2066 = vdwg.mxu0
    %v2083 = vunpack.c.l.b16 %v1973
    %v2084 = vunpack.c.l.b16 %v1974
    %v2085 = vunpack.c.l.b16 %v1975
    %v2086 = vunpack.c.l.b16 %v1976
    %v2087 = vunpack.c.l.b16 %v1977
    %v2088 = vunpack.c.l.b16 %v1978
    %v2089 = vunpack.c.l.b16 %v1979
    %v2090 = vunpack.c.l.b16 %v1980
    %v2091 = vunpack.c.l.b16 %v1981
    %v2092 = vunpack.c.l.b16 %v1982
    %v2093 = vunpack.c.l.b16 %v1983
    %v2094 = vunpack.c.l.b16 %v1984
    %v2095 = vunpack.c.l.b16 %v1985
    %v2096 = vunpack.c.l.b16 %v1986
    %v2097 = vunpack.c.l.b16 %v1987
    %v2098 = vunpack.c.l.b16 %v1988
    %v2099 = vpack.c.b16 %v2084, %v2083
    %v2100 = vpack.c.b16 %v2086, %v2085
    %v2101 = vpack.c.b16 %v2088, %v2087
    %v2102 = vpack.c.b16 %v2090, %v2089
    %v2103 = vpack.c.b16 %v2092, %v2091
    %v2104 = vpack.c.b16 %v2094, %v2093
    %v2105 = vpack.c.b16 %v2096, %v2095
    %v2106 = vpack.c.b16 %v2098, %v2097
    %2115 = vmatpush.bf16.msra.mxu0 %v2106
    %2116 = vmatpush.bf16.msra.mxu0 %v2105
    %2117 = vmatpush.bf16.msra.mxu0 %v2104
    %2118 = vmatpush.bf16.msra.mxu0 %v2103
    %2119 = vmatpush.bf16.msra.mxu0 %v2102
    %2120 = vmatpush.bf16.msra.mxu0 %v2101
    %2121 = vmatpush.bf16.msra.mxu0 %v2100
    %2122 = vmatpush.bf16.msra.mxu0 %v2099
    %2123 = vmatmul.bf16.gmra.mxu0 %v1972
    %v2124 = vpop.f32.mrf.mxu0
    %v2125 = vadd.f32 %v2064, %v2124
    %v2126 = vpop.f32.mrf.mxu0
    %2127 = vdwg.mxu0
    %v2128 = vld [vmem:[%s3 + $0x18] sm:$0x1]
    %v2130 = vperm.slane %v2128, 0
    %v2132 = vadd.f32 %v2125, %v2130
    %v2133 = vsub.f32 0.0, %v2132
    %v2134 = vmul.f32 %v2133, 1.442695
    %v2135 = vpow.pop %v2134
    %v2136 = vadd.f32 %v2135, 1.0
    %v2137 = vrcp.pop %v2136
    %v2138 = vmul.f32 %v2132, %v2137
    %v2139 = vld [vmem:[%s3 + $0x1c] sm:$0x1]
    %v2141 = vperm.slane %v2139, 0
    %v2143 = vmul.f32 %v89, %v2141
    %v2144 = vld [vmem:[%s3 + $0x1d] sm:$0x1]
    %v2146 = vperm.slane %v2144, 0
    %v2148 = vadd.f32 %v2143, %v2146
    %v2149 = vpack.c.bf16 %v84, %v84
    %v2150 = vld [vmem:[%s4] sm:$0xf]
    %v2151 = vld [vmem:[%s4 + $0x1c] sm:$0xf]
    %v2152 = vld [vmem:[%s3 + $0x1e] sm:$0x1]
    %v2154 = vperm.slane %v2152, 0
    %v2158 = vunpack.c.l.b16 %v2150
    %v2159 = vunpack.c.l.b16 %v2151
    %v2160 = vpack.c.b16 %v2159, %v2158
    %vm2162 = vcmask 130048
    %v2164 = vsel %vm2162, %v2149, 0
    %2166 = vmatpush.bf16.msra.mxu0 0
    %2167 = vmatpush.bf16.msra.mxu0 0
    %2168 = vmatpush.bf16.msra.mxu0 0
    %2169 = vmatpush.bf16.msra.mxu0 0
    %2170 = vmatpush.bf16.msra.mxu0 0
    %2171 = vmatpush.bf16.msra.mxu0 0
    %2172 = vmatpush.bf16.msra.mxu0 0
    %2173 = vmatpush.bf16.msra.mxu0 %v2160
    %2174 = vmatmul.bf16.gmra.mxu0 %v2164
    %v2175 = vpop.f32.mrf.mxu0
    %v2176 = vadd.f32 %v2154, %v2175
    %v2177 = vpop.f32.mrf.mxu0
    %2178 = vdwg.mxu0
    %v2179 = vmul.f32 %v2138, %v2176
    %v2180 = vadd.f32 %v2179, %v2148
    %v2181 = vpack.c.bf16 %v2180, %v2180
    %v2182 = vld [vmem:[#allocation4 + $0x1c] sm:$0xf]
    %v2183 = vld [vmem:[#allocation4 + $0x54] sm:$0xf]
    %v2184 = vld [vmem:[#allocation4 + $0x8c] sm:$0xf]
    %v2185 = vld [vmem:[#allocation4 + $0xc4] sm:$0xf]
    %v2186 = vld [vmem:[#allocation4 + $0xfc] sm:$0xf]
    %v2187 = vld [vmem:[#allocation4 + $0x134] sm:$0xf]
    %v2188 = vld [vmem:[#allocation4 + $0x16c] sm:$0xf]
    %v2189 = vld [vmem:[#allocation4 + $0x1a4] sm:$0xf]
    %v2190 = vld [vmem:[#allocation4 + $0x1dc] sm:$0xf]
    %v2191 = vld [vmem:[#allocation4 + $0x214] sm:$0xf]
    %v2192 = vld [vmem:[#allocation4 + $0x24c] sm:$0xf]
    %v2193 = vld [vmem:[#allocation4 + $0x284] sm:$0xf]
    %v2194 = vld [vmem:[#allocation4 + $0x2bc] sm:$0xf]
    %v2195 = vld [vmem:[#allocation4 + $0x2f4] sm:$0xf]
    %v2196 = vld [vmem:[#allocation4 + $0x32c] sm:$0xf]
    %v2197 = vld [vmem:[#allocation4 + $0x364] sm:$0xf]
    %v2198 = vld [vmem:[%s3 + $0x19] sm:$0x1]
    %v2200 = vperm.slane %v2198, 0
    %v2218 = vunpack.c.l.b16 %v2182
    %v2219 = vunpack.c.l.b16 %v2183
    %v2220 = vunpack.c.l.b16 %v2184
    %v2221 = vunpack.c.l.b16 %v2185
    %v2222 = vunpack.c.l.b16 %v2186
    %v2223 = vunpack.c.l.b16 %v2187
    %v2224 = vunpack.c.l.b16 %v2188
    %v2225 = vunpack.c.l.b16 %v2189
    %v2226 = vunpack.c.l.b16 %v2190
    %v2227 = vunpack.c.l.b16 %v2191
    %v2228 = vunpack.c.l.b16 %v2192
    %v2229 = vunpack.c.l.b16 %v2193
    %v2230 = vunpack.c.l.b16 %v2194
    %v2231 = vunpack.c.l.b16 %v2195
    %v2232 = vunpack.c.l.b16 %v2196
    %v2233 = vunpack.c.l.b16 %v2197
    %v2234 = vpack.c.b16 %v2219, %v2218
    %v2235 = vpack.c.b16 %v2221, %v2220
    %v2236 = vpack.c.b16 %v2223, %v2222
    %v2237 = vpack.c.b16 %v2225, %v2224
    %v2238 = vpack.c.b16 %v2227, %v2226
    %v2239 = vpack.c.b16 %v2229, %v2228
    %v2240 = vpack.c.b16 %v2231, %v2230
    %v2241 = vpack.c.b16 %v2233, %v2232
    %2250 = vmatpush.bf16.msra.mxu0 %v2241
    %2251 = vmatpush.bf16.msra.mxu0 %v2240
    %2252 = vmatpush.bf16.msra.mxu0 %v2239
    %2253 = vmatpush.bf16.msra.mxu0 %v2238
    %2254 = vmatpush.bf16.msra.mxu0 %v2237
    %2255 = vmatpush.bf16.msra.mxu0 %v2236
    %2256 = vmatpush.bf16.msra.mxu0 %v2235
    %2257 = vmatpush.bf16.msra.mxu0 %v2234
    %2258 = vmatmul.bf16.gmra.mxu0 %v2181
    %v2259 = vpop.f32.mrf.mxu0
    %v2260 = vadd.f32 %v2200, %v2259
    %v2261 = vpop.f32.mrf.mxu0
    %2262 = vdwg.mxu0
    %v2263 = vsub.f32 0.0, %v2260
    %v2264 = vmul.f32 %v2263, 1.442695
    %v2265 = vpow.pop %v2264
    %v2266 = vadd.f32 %v2265, 1.0
    %v2267 = vrcp.pop %v2266
    %v2268 = vmul.f32 %v2260, %v2267
    %v2269 = vadd.f32 %v2268, %v1862
    %v2270 = vpack.c.bf16 %v2269, %v2269
    %v2271 = vld [vmem:[#allocation4 + $0x20] sm:$0xff]
    %v2272 = vld [vmem:[#allocation4 + $0x58] sm:$0xff]
    %v2273 = vld [vmem:[#allocation4 + $0x90] sm:$0xff]
    %v2274 = vld [vmem:[#allocation4 + $0xc8] sm:$0xff]
    %v2275 = vld [vmem:[#allocation4 + $0x100] sm:$0xff]
    %v2276 = vld [vmem:[#allocation4 + $0x138] sm:$0xff]
    %v2277 = vld [vmem:[#allocation4 + $0x170] sm:$0xff]
    %v2278 = vld [vmem:[#allocation4 + $0x1a8] sm:$0xff]
    %v2279 = vld [vmem:[#allocation4 + $0x1e0] sm:$0xff]
    %v2280 = vld [vmem:[#allocation4 + $0x218] sm:$0xff]
    %v2281 = vld [vmem:[#allocation4 + $0x250] sm:$0xff]
    %v2282 = vld [vmem:[#allocation4 + $0x288] sm:$0xff]
    %v2283 = vld [vmem:[#allocation4 + $0x2c0] sm:$0xff]
    %v2284 = vld [vmem:[#allocation4 + $0x2f8] sm:$0xff]
    %v2285 = vld [vmem:[#allocation4 + $0x330] sm:$0xff]
    %v2286 = vld [vmem:[#allocation4 + $0x368] sm:$0xff]
    %v2287 = vld [vmem:[%s3 + $0x1f] sm:$0x3]
    %v2289 = vperm.slane %v2287, 0
    %v2290 = vperm.slane %v2287, 1
    %v2309 = vunpack.c.l.b16 %v2271
    %v2310 = vunpack.c.h.b16 %v2271
    %v2311 = vunpack.c.l.b16 %v2272
    %v2312 = vunpack.c.h.b16 %v2272
    %v2313 = vunpack.c.l.b16 %v2273
    %v2314 = vunpack.c.h.b16 %v2273
    %v2315 = vunpack.c.l.b16 %v2274
    %v2316 = vunpack.c.h.b16 %v2274
    %v2317 = vunpack.c.l.b16 %v2275
    %v2318 = vunpack.c.h.b16 %v2275
    %v2319 = vunpack.c.l.b16 %v2276
    %v2320 = vunpack.c.h.b16 %v2276
    %v2321 = vunpack.c.l.b16 %v2277
    %v2322 = vunpack.c.h.b16 %v2277
    %v2323 = vunpack.c.l.b16 %v2278
    %v2324 = vunpack.c.h.b16 %v2278
    %v2325 = vunpack.c.l.b16 %v2279
    %v2326 = vunpack.c.h.b16 %v2279
    %v2327 = vunpack.c.l.b16 %v2280
    %v2328 = vunpack.c.h.b16 %v2280
    %v2329 = vunpack.c.l.b16 %v2281
    %v2330 = vunpack.c.h.b16 %v2281
    %v2331 = vunpack.c.l.b16 %v2282
    %v2332 = vunpack.c.h.b16 %v2282
    %v2333 = vunpack.c.l.b16 %v2283
    %v2334 = vunpack.c.h.b16 %v2283
    %v2335 = vunpack.c.l.b16 %v2284
    %v2336 = vunpack.c.h.b16 %v2284
    %v2337 = vunpack.c.l.b16 %v2285
    %v2338 = vunpack.c.h.b16 %v2285
    %v2339 = vunpack.c.l.b16 %v2286
    %v2340 = vunpack.c.h.b16 %v2286
    %v2341 = vpack.c.b16 %v2311, %v2309
    %v2342 = vpack.c.b16 %v2312, %v2310
    %v2343 = vpack.c.b16 %v2315, %v2313
    %v2344 = vpack.c.b16 %v2316, %v2314
    %v2345 = vpack.c.b16 %v2319, %v2317
    %v2346 = vpack.c.b16 %v2320, %v2318
    %v2347 = vpack.c.b16 %v2323, %v2321
    %v2348 = vpack.c.b16 %v2324, %v2322
    %v2349 = vpack.c.b16 %v2327, %v2325
    %v2350 = vpack.c.b16 %v2328, %v2326
    %v2351 = vpack.c.b16 %v2331, %v2329
    %v2352 = vpack.c.b16 %v2332, %v2330
    %v2353 = vpack.c.b16 %v2335, %v2333
    %v2354 = vpack.c.b16 %v2336, %v2334
    %v2355 = vpack.c.b16 %v2339, %v2337
    %v2356 = vpack.c.b16 %v2340, %v2338
    %2373 = vmatpush.bf16.msra.mxu0 %v2355
    %2374 = vmatpush.bf16.msra.mxu0 %v2353
    %2375 = vmatpush.bf16.msra.mxu0 %v2351
    %2376 = vmatpush.bf16.msra.mxu0 %v2349
    %2377 = vmatpush.bf16.msra.mxu0 %v2347
    %2378 = vmatpush.bf16.msra.mxu0 %v2345
    %2379 = vmatpush.bf16.msra.mxu0 %v2343
    %2380 = vmatpush.bf16.msra.mxu0 %v2341
    %2381 = vmatmul.bf16.gmra.mxu0 %v2270
    %v2382 = vpop.f32.mrf.mxu0
    %v2383 = vadd.f32 %v2289, %v2382
    %v2384 = vpop.f32.mrf.mxu0
    %2385 = vdwg.mxu0
    %2386 = vmatpush.bf16.msra.mxu0 %v2356
    %2387 = vmatpush.bf16.msra.mxu0 %v2354
    %2388 = vmatpush.bf16.msra.mxu0 %v2352
    %2389 = vmatpush.bf16.msra.mxu0 %v2350
    %2390 = vmatpush.bf16.msra.mxu0 %v2348
    %2391 = vmatpush.bf16.msra.mxu0 %v2346
    %2392 = vmatpush.bf16.msra.mxu0 %v2344
    %2393 = vmatpush.bf16.msra.mxu0 %v2342
    %2394 = vmatmul.bf16.gmra.mxu0 %v2270
    %v2395 = vpop.f32.mrf.mxu0
    %v2396 = vadd.f32 %v2290, %v2395
    %v2397 = vpop.f32.mrf.mxu0
    %2398 = vdwg.mxu0
    %v2399 = vsub.f32 0.0, %v2383
    %v2400 = vsub.f32 0.0, %v2396
    %v2401 = vmul.f32 %v2399, 1.442695
    %v2402 = vpow.pop %v2401
    %v2403 = vmul.f32 %v2400, 1.442695
    %v2404 = vpow.pop %v2403
    %v2405 = vadd.f32 %v2402, 1.0
    %v2406 = vadd.f32 %v2404, 1.0
    %v2407 = vrcp.pop %v2405
    %v2408 = vrcp.pop %v2406
    %v2409 = vmul.f32 %v2383, %v2407
    %v2410 = vmul.f32 %v2396, %v2408
    %2411 = vmatpush.msra.mxu0 %v557
    %2412 = vmatpush.msra.mxu0 %v556
    %2413 = vmatpush.msra.mxu0 %v555
    %2414 = vmatpush.msra.mxu0 %v554
    %2415 = vmatpush.msra.mxu0 %v553
    %2416 = vmatpush.msra.mxu0 %v552
    %2417 = vmatpush.msra.mxu0 %v551
    %2418 = vmatpush.msra.mxu0 %v550
    %2419 = vmatpush.msra.mxu0 %v549
    %2420 = vmatpush.msra.mxu0 %v548
    %2421 = vmatpush.msra.mxu0 %v547
    %2422 = vmatpush.msra.mxu0 %v546
    %2423 = vmatpush.msra.mxu0 %v545
    %2424 = vmatpush.msra.mxu0 %v544
    %2425 = vmatpush.msra.mxu0 %v543
    %2426 = vmatpush.msra.mxu0 %v542
    %2427 = vmatmul.f32.gmra.mxu0 %v2409
    %v2428 = vpop.f32.mrf.mxu0
    %v2429 = vadd.f32 0.0, %v2428
    %2430 = vdwg.mxu0
    %2431 = vmatpush.msra.mxu0 %v573
    %2432 = vmatpush.msra.mxu0 %v572
    %2433 = vmatpush.msra.mxu0 %v571
    %2434 = vmatpush.msra.mxu0 %v570
    %2435 = vmatpush.msra.mxu0 %v569
    %2436 = vmatpush.msra.mxu0 %v568
    %2437 = vmatpush.msra.mxu0 %v567
    %2438 = vmatpush.msra.mxu0 %v566
    %2439 = vmatpush.msra.mxu0 %v565
    %2440 = vmatpush.msra.mxu0 %v564
    %2441 = vmatpush.msra.mxu0 %v563
    %2442 = vmatpush.msra.mxu0 %v562
    %2443 = vmatpush.msra.mxu0 %v561
    %2444 = vmatpush.msra.mxu0 %v560
    %2445 = vmatpush.msra.mxu0 %v559
    %2446 = vmatpush.msra.mxu0 %v558
    %2447 = vmatmul.f32.gmra.mxu0 %v2410
    %v2448 = vpop.f32.mrf.mxu0
    %v2449 = vadd.f32 %v2429, %v2448
    %2450 = vdwg.mxu0
    %v2452 = vsel %vm622, %v2449, 0
    %2454 = vmatpush.msra.mxu0 0.0
    %2455 = vmatpush.msra.mxu0 0.0
    %2456 = vmatpush.msra.mxu0 0.0
    %2457 = vmatpush.msra.mxu0 0.0
    %2458 = vmatpush.msra.mxu0 0.0
    %2459 = vmatpush.msra.mxu0 0.0
    %2460 = vmatpush.msra.mxu0 0.0
    %2461 = vmatpush.msra.mxu0 0.0
    %2462 = vmatpush.msra.mxu0 0.0
    %2463 = vmatpush.msra.mxu0 0.0
    %2464 = vmatpush.msra.mxu0 0.0
    %2465 = vmatpush.msra.mxu0 0.0
    %2466 = vmatpush.msra.mxu0 %v580
    %2467 = vmatpush.msra.mxu0 %v578
    %2468 = vmatpush.msra.mxu0 %v576
    %2469 = vmatpush.msra.mxu0 %v574
    %2470 = vmatmul.f32.gmra.mxu0 %v2452
    %v2471 = vpop.f32.mrf.mxu0
    %v2472 = vadd.f32 0.0, %v2471
    %2473 = vdwg.mxu0
    %2474 = vmatpush.msra.mxu0 0.0
    %2475 = vmatpush.msra.mxu0 0.0
    %2476 = vmatpush.msra.mxu0 0.0
    %2477 = vmatpush.msra.mxu0 0.0
    %2478 = vmatpush.msra.mxu0 0.0
    %2479 = vmatpush.msra.mxu0 0.0
    %2480 = vmatpush.msra.mxu0 0.0
    %2481 = vmatpush.msra.mxu0 0.0
    %2482 = vmatpush.msra.mxu0 0.0
    %2483 = vmatpush.msra.mxu0 0.0
    %2484 = vmatpush.msra.mxu0 0.0
    %2485 = vmatpush.msra.mxu0 0.0
    %2486 = vmatpush.msra.mxu0 %v581
    %2487 = vmatpush.msra.mxu0 %v579
    %2488 = vmatpush.msra.mxu0 %v577
    %2489 = vmatpush.msra.mxu0 %v575
    %2490 = vmatmul.f32.gmra.mxu0 %v2452
    %v2491 = vpop.f32.mrf.mxu0
    %v2492 = vadd.f32 0.0, %v2491
    %2493 = vdwg.mxu0
    %v2494 = vsub.f32 %v2409, %v2472
    %v2495 = vsub.f32 %v2410, %v2492
    %v2496 = vmul.f32 %v2494, %v2494
    %v2497 = vmul.f32 %v2495, %v2495
    %2498 = vmatpush.msra.mxu0 %v557
    %2499 = vmatpush.msra.mxu0 %v556
    %2500 = vmatpush.msra.mxu0 %v555
    %2501 = vmatpush.msra.mxu0 %v554
    %2502 = vmatpush.msra.mxu0 %v553
    %2503 = vmatpush.msra.mxu0 %v552
    %2504 = vmatpush.msra.mxu0 %v551
    %2505 = vmatpush.msra.mxu0 %v550
    %2506 = vmatpush.msra.mxu0 %v549
    %2507 = vmatpush.msra.mxu0 %v548
    %2508 = vmatpush.msra.mxu0 %v547
    %2509 = vmatpush.msra.mxu0 %v546
    %2510 = vmatpush.msra.mxu0 %v545
    %2511 = vmatpush.msra.mxu0 %v544
    %2512 = vmatpush.msra.mxu0 %v543
    %2513 = vmatpush.msra.mxu0 %v542
    %2514 = vmatmul.f32.gmra.mxu0 %v2496
    %v2515 = vpop.f32.mrf.mxu0
    %v2516 = vadd.f32 0.0, %v2515
    %2517 = vdwg.mxu0
    %2518 = vmatpush.msra.mxu0 %v573
    %2519 = vmatpush.msra.mxu0 %v572
    %2520 = vmatpush.msra.mxu0 %v571
    %2521 = vmatpush.msra.mxu0 %v570
    %2522 = vmatpush.msra.mxu0 %v569
    %2523 = vmatpush.msra.mxu0 %v568
    %2524 = vmatpush.msra.mxu0 %v567
    %2525 = vmatpush.msra.mxu0 %v566
    %2526 = vmatpush.msra.mxu0 %v565
    %2527 = vmatpush.msra.mxu0 %v564
    %2528 = vmatpush.msra.mxu0 %v563
    %2529 = vmatpush.msra.mxu0 %v562
    %2530 = vmatpush.msra.mxu0 %v561
    %2531 = vmatpush.msra.mxu0 %v560
    %2532 = vmatpush.msra.mxu0 %v559
    %2533 = vmatpush.msra.mxu0 %v558
    %2534 = vmatmul.f32.gmra.mxu0 %v2497
    %v2535 = vpop.f32.mrf.mxu0
    %v2536 = vadd.f32 %v2516, %v2535
    %2537 = vdwg.mxu0
    %v2539 = vsel %vm622, %v2536, 0
    %2541 = vmatpush.msra.mxu0 0.0
    %2542 = vmatpush.msra.mxu0 0.0
    %2543 = vmatpush.msra.mxu0 0.0
    %2544 = vmatpush.msra.mxu0 0.0
    %2545 = vmatpush.msra.mxu0 0.0
    %2546 = vmatpush.msra.mxu0 0.0
    %2547 = vmatpush.msra.mxu0 0.0
    %2548 = vmatpush.msra.mxu0 0.0
    %2549 = vmatpush.msra.mxu0 0.0
    %2550 = vmatpush.msra.mxu0 0.0
    %2551 = vmatpush.msra.mxu0 0.0
    %2552 = vmatpush.msra.mxu0 0.0
    %2553 = vmatpush.msra.mxu0 %v580
    %2554 = vmatpush.msra.mxu0 %v578
    %2555 = vmatpush.msra.mxu0 %v576
    %2556 = vmatpush.msra.mxu0 %v574
    %2557 = vmatmul.f32.gmra.mxu0 %v2539
    %v2558 = vpop.f32.mrf.mxu0
    %v2559 = vadd.f32 1e-05, %v2558
    %2560 = vdwg.mxu0
    %2561 = vmatpush.msra.mxu0 0.0
    %2562 = vmatpush.msra.mxu0 0.0
    %2563 = vmatpush.msra.mxu0 0.0
    %2564 = vmatpush.msra.mxu0 0.0
    %2565 = vmatpush.msra.mxu0 0.0
    %2566 = vmatpush.msra.mxu0 0.0
    %2567 = vmatpush.msra.mxu0 0.0
    %2568 = vmatpush.msra.mxu0 0.0
    %2569 = vmatpush.msra.mxu0 0.0
    %2570 = vmatpush.msra.mxu0 0.0
    %2571 = vmatpush.msra.mxu0 0.0
    %2572 = vmatpush.msra.mxu0 0.0
    %2573 = vmatpush.msra.mxu0 %v581
    %2574 = vmatpush.msra.mxu0 %v579
    %2575 = vmatpush.msra.mxu0 %v577
    %2576 = vmatpush.msra.mxu0 %v575
    %2577 = vmatmul.f32.gmra.mxu0 %v2539
    %v2578 = vpop.f32.mrf.mxu0
    %v2579 = vadd.f32 1e-05, %v2578
    %2580 = vdwg.mxu0
    %v2581 = vrsqrt.pop %v2559
    %v2582 = vmul.f32 %v2581, %v2559
    %v2583 = vmul.f32 %v2582, %v2581
    %v2584 = vmul.f32 0.5, %v2583
    %v2585 = vsub.f32 1.5, %v2584
    %v2586 = vmul.f32 %v2581, %v2585
    %vm2587 = vweird.f32 %v2559
    %vm2588 = vweird.f32 %v2581
    %vm2589 = vmor %vm2587, %vm2588
    %v2590 = vsel %vm2589, %v2581, %v2586
    %v2591 = vrsqrt.pop %v2579
    %v2592 = vmul.f32 %v2591, %v2579
    %v2593 = vmul.f32 %v2592, %v2591
    %v2594 = vmul.f32 0.5, %v2593
    %v2595 = vsub.f32 1.5, %v2594
    %v2596 = vmul.f32 %v2591, %v2595
    %vm2597 = vweird.f32 %v2579
    %vm2598 = vweird.f32 %v2591
    %vm2599 = vmor %vm2597, %vm2598
    %v2600 = vsel %vm2599, %v2591, %v2596
    %v2601 = vmul.f32 %v2494, %v2590
    %v2602 = vmul.f32 %v2495, %v2600
    %v2603 = vld [vmem:[%s3 + $0x25] sm:$0x3]
    %v2605 = vperm.slane %v2603, 0
    %v2606 = vperm.slane %v2603, 1
    %v2609 = vmul.f32 %v2601, %v2605
    %v2610 = vmul.f32 %v2602, %v2606
    %v2611 = vld [vmem:[%s3 + $0x27] sm:$0x3]
    %v2613 = vperm.slane %v2611, 0
    %v2614 = vperm.slane %v2611, 1
    %v2617 = vadd.f32 %v2609, %v2613
    %v2618 = vadd.f32 %v2610, %v2614
    %v2619 = vpack.c.bf16 %v2617, %v2617
    %v2620 = vpack.c.bf16 %v2618, %v2618
    %v2621 = vld [vmem:[#allocation6 + $0x14] sm:$0xff]
    %v2622 = vld [vmem:[#allocation6 + $0x44] sm:$0xff]
    %v2623 = vld [vmem:[#allocation6 + $0x74] sm:$0xff]
    %v2624 = vld [vmem:[#allocation6 + $0xa4] sm:$0xff]
    %v2625 = vld [vmem:[#allocation6 + $0xd4] sm:$0xff]
    %v2626 = vld [vmem:[#allocation6 + $0x104] sm:$0xff]
    %v2627 = vld [vmem:[#allocation6 + $0x134] sm:$0xff]
    %v2628 = vld [vmem:[#allocation6 + $0x164] sm:$0xff]
    %v2629 = vld [vmem:[#allocation6 + $0x194] sm:$0xff]
    %v2630 = vld [vmem:[#allocation6 + $0x1c4] sm:$0xff]
    %v2631 = vld [vmem:[#allocation6 + $0x1f4] sm:$0xff]
    %v2632 = vld [vmem:[#allocation6 + $0x224] sm:$0xff]
    %v2633 = vld [vmem:[#allocation6 + $0x254] sm:$0xff]
    %v2634 = vld [vmem:[#allocation6 + $0x284] sm:$0xff]
    %v2635 = vld [vmem:[#allocation6 + $0x2b4] sm:$0xff]
    %v2636 = vld [vmem:[#allocation6 + $0x2e4] sm:$0xff]
    %v2637 = vld [vmem:[#allocation6 + $0x314] sm:$0xff]
    %v2638 = vld [vmem:[#allocation6 + $0x344] sm:$0xff]
    %v2639 = vld [vmem:[#allocation6 + $0x374] sm:$0xff]
    %v2640 = vld [vmem:[#allocation6 + $0x3a4] sm:$0xff]
    %v2641 = vld [vmem:[#allocation6 + $0x3d4] sm:$0xff]
    %v2642 = vld [vmem:[#allocation6 + $0x404] sm:$0xff]
    %v2643 = vld [vmem:[#allocation6 + $0x434] sm:$0xff]
    %v2644 = vld [vmem:[#allocation6 + $0x464] sm:$0xff]
    %v2645 = vld [vmem:[#allocation6 + $0x494] sm:$0xff]
    %v2646 = vld [vmem:[#allocation6 + $0x4c4] sm:$0xff]
    %v2647 = vld [vmem:[#allocation6 + $0x4f4] sm:$0xff]
    %v2648 = vld [vmem:[#allocation6 + $0x524] sm:$0xff]
    %v2649 = vld [vmem:[#allocation6 + $0x554] sm:$0xff]
    %v2650 = vld [vmem:[#allocation6 + $0x584] sm:$0xff]
    %v2651 = vld [vmem:[#allocation6 + $0x5b4] sm:$0xff]
    %v2652 = vld [vmem:[#allocation6 + $0x5e4] sm:$0xff]
    %v2653 = vpack.c.bf16 %v540, %v540
    %v2654 = vpack.c.bf16 %v541, %v541
    %v2655 = vld [vmem:[#allocation6 + $0x1c] sm:$0xff]
    %v2656 = vld [vmem:[#allocation6 + $0x4c] sm:$0xff]
    %v2657 = vld [vmem:[#allocation6 + $0x7c] sm:$0xff]
    %v2658 = vld [vmem:[#allocation6 + $0xac] sm:$0xff]
    %v2659 = vld [vmem:[#allocation6 + $0xdc] sm:$0xff]
    %v2660 = vld [vmem:[#allocation6 + $0x10c] sm:$0xff]
    %v2661 = vld [vmem:[#allocation6 + $0x13c] sm:$0xff]
    %v2662 = vld [vmem:[#allocation6 + $0x16c] sm:$0xff]
    %v2663 = vld [vmem:[#allocation6 + $0x19c] sm:$0xff]
    %v2664 = vld [vmem:[#allocation6 + $0x1cc] sm:$0xff]
    %v2665 = vld [vmem:[#allocation6 + $0x1fc] sm:$0xff]
    %v2666 = vld [vmem:[#allocation6 + $0x22c] sm:$0xff]
    %v2667 = vld [vmem:[#allocation6 + $0x25c] sm:$0xff]
    %v2668 = vld [vmem:[#allocation6 + $0x28c] sm:$0xff]
    %v2669 = vld [vmem:[#allocation6 + $0x2bc] sm:$0xff]
    %v2670 = vld [vmem:[#allocation6 + $0x2ec] sm:$0xff]
    %v2671 = vld [vmem:[#allocation6 + $0x31c] sm:$0xff]
    %v2672 = vld [vmem:[#allocation6 + $0x34c] sm:$0xff]
    %v2673 = vld [vmem:[#allocation6 + $0x37c] sm:$0xff]
    %v2674 = vld [vmem:[#allocation6 + $0x3ac] sm:$0xff]
    %v2675 = vld [vmem:[#allocation6 + $0x3dc] sm:$0xff]
    %v2676 = vld [vmem:[#allocation6 + $0x40c] sm:$0xff]
    %v2677 = vld [vmem:[#allocation6 + $0x43c] sm:$0xff]
    %v2678 = vld [vmem:[#allocation6 + $0x46c] sm:$0xff]
    %v2679 = vld [vmem:[#allocation6 + $0x49c] sm:$0xff]
    %v2680 = vld [vmem:[#allocation6 + $0x4cc] sm:$0xff]
    %v2681 = vld [vmem:[#allocation6 + $0x4fc] sm:$0xff]
    %v2682 = vld [vmem:[#allocation6 + $0x52c] sm:$0xff]
    %v2683 = vld [vmem:[#allocation6 + $0x55c] sm:$0xff]
    %v2684 = vld [vmem:[#allocation6 + $0x58c] sm:$0xff]
    %v2685 = vld [vmem:[#allocation6 + $0x5bc] sm:$0xff]
    %v2686 = vld [vmem:[#allocation6 + $0x5ec] sm:$0xff]
    %v2719 = vunpack.c.l.b16 %v2655
    %v2720 = vunpack.c.h.b16 %v2655
    %v2721 = vunpack.c.l.b16 %v2656
    %v2722 = vunpack.c.h.b16 %v2656
    %v2723 = vunpack.c.l.b16 %v2657
    %v2724 = vunpack.c.h.b16 %v2657
    %v2725 = vunpack.c.l.b16 %v2658
    %v2726 = vunpack.c.h.b16 %v2658
    %v2727 = vunpack.c.l.b16 %v2659
    %v2728 = vunpack.c.h.b16 %v2659
    %v2729 = vunpack.c.l.b16 %v2660
    %v2730 = vunpack.c.h.b16 %v2660
    %v2731 = vunpack.c.l.b16 %v2661
    %v2732 = vunpack.c.h.b16 %v2661
    %v2733 = vunpack.c.l.b16 %v2662
    %v2734 = vunpack.c.h.b16 %v2662
    %v2735 = vunpack.c.l.b16 %v2663
    %v2736 = vunpack.c.h.b16 %v2663
    %v2737 = vunpack.c.l.b16 %v2664
    %v2738 = vunpack.c.h.b16 %v2664
    %v2739 = vunpack.c.l.b16 %v2665
    %v2740 = vunpack.c.h.b16 %v2665
    %v2741 = vunpack.c.l.b16 %v2666
    %v2742 = vunpack.c.h.b16 %v2666
    %v2743 = vunpack.c.l.b16 %v2667
    %v2744 = vunpack.c.h.b16 %v2667
    %v2745 = vunpack.c.l.b16 %v2668
    %v2746 = vunpack.c.h.b16 %v2668
    %v2747 = vunpack.c.l.b16 %v2669
    %v2748 = vunpack.c.h.b16 %v2669
    %v2749 = vunpack.c.l.b16 %v2670
    %v2750 = vunpack.c.h.b16 %v2670
    %v2751 = vunpack.c.l.b16 %v2671
    %v2752 = vunpack.c.h.b16 %v2671
    %v2753 = vunpack.c.l.b16 %v2672
    %v2754 = vunpack.c.h.b16 %v2672
    %v2755 = vunpack.c.l.b16 %v2673
    %v2756 = vunpack.c.h.b16 %v2673
    %v2757 = vunpack.c.l.b16 %v2674
    %v2758 = vunpack.c.h.b16 %v2674
    %v2759 = vunpack.c.l.b16 %v2675
    %v2760 = vunpack.c.h.b16 %v2675
    %v2761 = vunpack.c.l.b16 %v2676
    %v2762 = vunpack.c.h.b16 %v2676
    %v2763 = vunpack.c.l.b16 %v2677
    %v2764 = vunpack.c.h.b16 %v2677
    %v2765 = vunpack.c.l.b16 %v2678
    %v2766 = vunpack.c.h.b16 %v2678
    %v2767 = vunpack.c.l.b16 %v2679
    %v2768 = vunpack.c.h.b16 %v2679
    %v2769 = vunpack.c.l.b16 %v2680
    %v2770 = vunpack.c.h.b16 %v2680
    %v2771 = vunpack.c.l.b16 %v2681
    %v2772 = vunpack.c.h.b16 %v2681
    %v2773 = vunpack.c.l.b16 %v2682
    %v2774 = vunpack.c.h.b16 %v2682
    %v2775 = vunpack.c.l.b16 %v2683
    %v2776 = vunpack.c.h.b16 %v2683
    %v2777 = vunpack.c.l.b16 %v2684
    %v2778 = vunpack.c.h.b16 %v2684
    %v2779 = vunpack.c.l.b16 %v2685
    %v2780 = vunpack.c.h.b16 %v2685
    %v2781 = vunpack.c.l.b16 %v2686
    %v2782 = vunpack.c.h.b16 %v2686
    %v2783 = vpack.c.b16 %v2721, %v2719
    %v2784 = vpack.c.b16 %v2722, %v2720
    %v2785 = vpack.c.b16 %v2725, %v2723
    %v2786 = vpack.c.b16 %v2726, %v2724
    %v2787 = vpack.c.b16 %v2729, %v2727
    %v2788 = vpack.c.b16 %v2730, %v2728
    %v2789 = vpack.c.b16 %v2733, %v2731
    %v2790 = vpack.c.b16 %v2734, %v2732
    %v2791 = vpack.c.b16 %v2737, %v2735
    %v2792 = vpack.c.b16 %v2738, %v2736
    %v2793 = vpack.c.b16 %v2741, %v2739
    %v2794 = vpack.c.b16 %v2742, %v2740
    %v2795 = vpack.c.b16 %v2745, %v2743
    %v2796 = vpack.c.b16 %v2746, %v2744
    %v2797 = vpack.c.b16 %v2749, %v2747
    %v2798 = vpack.c.b16 %v2750, %v2748
    %v2799 = vpack.c.b16 %v2753, %v2751
    %v2800 = vpack.c.b16 %v2754, %v2752
    %v2801 = vpack.c.b16 %v2757, %v2755
    %v2802 = vpack.c.b16 %v2758, %v2756
    %v2803 = vpack.c.b16 %v2761, %v2759
    %v2804 = vpack.c.b16 %v2762, %v2760
    %v2805 = vpack.c.b16 %v2765, %v2763
    %v2806 = vpack.c.b16 %v2766, %v2764
    %v2807 = vpack.c.b16 %v2769, %v2767
    %v2808 = vpack.c.b16 %v2770, %v2768
    %v2809 = vpack.c.b16 %v2773, %v2771
    %v2810 = vpack.c.b16 %v2774, %v2772
    %v2811 = vpack.c.b16 %v2777, %v2775
    %v2812 = vpack.c.b16 %v2778, %v2776
    %v2813 = vpack.c.b16 %v2781, %v2779
    %v2814 = vpack.c.b16 %v2782, %v2780
    %2847 = vmatpush.bf16.msra.mxu0 %v2797
    %2848 = vmatpush.bf16.msra.mxu0 %v2795
    %2849 = vmatpush.bf16.msra.mxu0 %v2793
    %2850 = vmatpush.bf16.msra.mxu0 %v2791
    %2851 = vmatpush.bf16.msra.mxu0 %v2789
    %2852 = vmatpush.bf16.msra.mxu0 %v2787
    %2853 = vmatpush.bf16.msra.mxu0 %v2785
    %2854 = vmatpush.bf16.msra.mxu0 %v2783
    %2855 = vmatmul.bf16.gmra.mxu0 %v2653
    %v2856 = vpop.f32.mrf.mxu0
    %v2857 = vadd.f32 0.0, %v2856
    %v2858 = vpop.f32.mrf.mxu0
    %2859 = vdwg.mxu0
    %2860 = vmatpush.bf16.msra.mxu0 %v2813
    %2861 = vmatpush.bf16.msra.mxu0 %v2811
    %2862 = vmatpush.bf16.msra.mxu0 %v2809
    %2863 = vmatpush.bf16.msra.mxu0 %v2807
    %2864 = vmatpush.bf16.msra.mxu0 %v2805
    %2865 = vmatpush.bf16.msra.mxu0 %v2803
    %2866 = vmatpush.bf16.msra.mxu0 %v2801
    %2867 = vmatpush.bf16.msra.mxu0 %v2799
    %2868 = vmatmul.bf16.gmra.mxu0 %v2654
    %v2869 = vpop.f32.mrf.mxu0
    %v2870 = vadd.f32 %v2857, %v2869
    %v2871 = vpop.f32.mrf.mxu0
    %2872 = vdwg.mxu0
    %2873 = vmatpush.bf16.msra.mxu0 %v2798
    %2874 = vmatpush.bf16.msra.mxu0 %v2796
    %2875 = vmatpush.bf16.msra.mxu0 %v2794
    %2876 = vmatpush.bf16.msra.mxu0 %v2792
    %2877 = vmatpush.bf16.msra.mxu0 %v2790
    %2878 = vmatpush.bf16.msra.mxu0 %v2788
    %2879 = vmatpush.bf16.msra.mxu0 %v2786
    %2880 = vmatpush.bf16.msra.mxu0 %v2784
    %2881 = vmatmul.bf16.gmra.mxu0 %v2653
    %v2882 = vpop.f32.mrf.mxu0
    %v2883 = vadd.f32 0.0, %v2882
    %v2884 = vpop.f32.mrf.mxu0
    %2885 = vdwg.mxu0
    %2886 = vmatpush.bf16.msra.mxu0 %v2814
    %2887 = vmatpush.bf16.msra.mxu0 %v2812
    %2888 = vmatpush.bf16.msra.mxu0 %v2810
    %2889 = vmatpush.bf16.msra.mxu0 %v2808
    %2890 = vmatpush.bf16.msra.mxu0 %v2806
    %2891 = vmatpush.bf16.msra.mxu0 %v2804
    %2892 = vmatpush.bf16.msra.mxu0 %v2802
    %2893 = vmatpush.bf16.msra.mxu0 %v2800
    %2894 = vmatmul.bf16.gmra.mxu0 %v2654
    %v2895 = vpop.f32.mrf.mxu0
    %v2896 = vadd.f32 %v2883, %v2895
    %v2897 = vpop.f32.mrf.mxu0
    %2898 = vdwg.mxu0
    %v2931 = vunpack.c.l.b16 %v2621
    %v2932 = vunpack.c.h.b16 %v2621
    %v2933 = vunpack.c.l.b16 %v2622
    %v2934 = vunpack.c.h.b16 %v2622
    %v2935 = vunpack.c.l.b16 %v2623
    %v2936 = vunpack.c.h.b16 %v2623
    %v2937 = vunpack.c.l.b16 %v2624
    %v2938 = vunpack.c.h.b16 %v2624
    %v2939 = vunpack.c.l.b16 %v2625
    %v2940 = vunpack.c.h.b16 %v2625
    %v2941 = vunpack.c.l.b16 %v2626
    %v2942 = vunpack.c.h.b16 %v2626
    %v2943 = vunpack.c.l.b16 %v2627
    %v2944 = vunpack.c.h.b16 %v2627
    %v2945 = vunpack.c.l.b16 %v2628
    %v2946 = vunpack.c.h.b16 %v2628
    %v2947 = vunpack.c.l.b16 %v2629
    %v2948 = vunpack.c.h.b16 %v2629
    %v2949 = vunpack.c.l.b16 %v2630
    %v2950 = vunpack.c.h.b16 %v2630
    %v2951 = vunpack.c.l.b16 %v2631
    %v2952 = vunpack.c.h.b16 %v2631
    %v2953 = vunpack.c.l.b16 %v2632
    %v2954 = vunpack.c.h.b16 %v2632
    %v2955 = vunpack.c.l.b16 %v2633
    %v2956 = vunpack.c.h.b16 %v2633
    %v2957 = vunpack.c.l.b16 %v2634
    %v2958 = vunpack.c.h.b16 %v2634
    %v2959 = vunpack.c.l.b16 %v2635
    %v2960 = vunpack.c.h.b16 %v2635
    %v2961 = vunpack.c.l.b16 %v2636
    %v2962 = vunpack.c.h.b16 %v2636
    %v2963 = vunpack.c.l.b16 %v2637
    %v2964 = vunpack.c.h.b16 %v2637
    %v2965 = vunpack.c.l.b16 %v2638
    %v2966 = vunpack.c.h.b16 %v2638
    %v2967 = vunpack.c.l.b16 %v2639
    %v2968 = vunpack.c.h.b16 %v2639
    %v2969 = vunpack.c.l.b16 %v2640
    %v2970 = vunpack.c.h.b16 %v2640
    %v2971 = vunpack.c.l.b16 %v2641
    %v2972 = vunpack.c.h.b16 %v2641
    %v2973 = vunpack.c.l.b16 %v2642
    %v2974 = vunpack.c.h.b16 %v2642
    %v2975 = vunpack.c.l.b16 %v2643
    %v2976 = vunpack.c.h.b16 %v2643
    %v2977 = vunpack.c.l.b16 %v2644
    %v2978 = vunpack.c.h.b16 %v2644
    %v2979 = vunpack.c.l.b16 %v2645
    %v2980 = vunpack.c.h.b16 %v2645
    %v2981 = vunpack.c.l.b16 %v2646
    %v2982 = vunpack.c.h.b16 %v2646
    %v2983 = vunpack.c.l.b16 %v2647
    %v2984 = vunpack.c.h.b16 %v2647
    %v2985 = vunpack.c.l.b16 %v2648
    %v2986 = vunpack.c.h.b16 %v2648
    %v2987 = vunpack.c.l.b16 %v2649
    %v2988 = vunpack.c.h.b16 %v2649
    %v2989 = vunpack.c.l.b16 %v2650
    %v2990 = vunpack.c.h.b16 %v2650
    %v2991 = vunpack.c.l.b16 %v2651
    %v2992 = vunpack.c.h.b16 %v2651
    %v2993 = vunpack.c.l.b16 %v2652
    %v2994 = vunpack.c.h.b16 %v2652
    %v2995 = vpack.c.b16 %v2933, %v2931
    %v2996 = vpack.c.b16 %v2934, %v2932
    %v2997 = vpack.c.b16 %v2937, %v2935
    %v2998 = vpack.c.b16 %v2938, %v2936
    %v2999 = vpack.c.b16 %v2941, %v2939
    %v3000 = vpack.c.b16 %v2942, %v2940
    %v3001 = vpack.c.b16 %v2945, %v2943
    %v3002 = vpack.c.b16 %v2946, %v2944
    %v3003 = vpack.c.b16 %v2949, %v2947
    %v3004 = vpack.c.b16 %v2950, %v2948
    %v3005 = vpack.c.b16 %v2953, %v2951
    %v3006 = vpack.c.b16 %v2954, %v2952
    %v3007 = vpack.c.b16 %v2957, %v2955
    %v3008 = vpack.c.b16 %v2958, %v2956
    %v3009 = vpack.c.b16 %v2961, %v2959
    %v3010 = vpack.c.b16 %v2962, %v2960
    %v3011 = vpack.c.b16 %v2965, %v2963
    %v3012 = vpack.c.b16 %v2966, %v2964
    %v3013 = vpack.c.b16 %v2969, %v2967
    %v3014 = vpack.c.b16 %v2970, %v2968
    %v3015 = vpack.c.b16 %v2973, %v2971
    %v3016 = vpack.c.b16 %v2974, %v2972
    %v3017 = vpack.c.b16 %v2977, %v2975
    %v3018 = vpack.c.b16 %v2978, %v2976
    %v3019 = vpack.c.b16 %v2981, %v2979
    %v3020 = vpack.c.b16 %v2982, %v2980
    %v3021 = vpack.c.b16 %v2985, %v2983
    %v3022 = vpack.c.b16 %v2986, %v2984
    %v3023 = vpack.c.b16 %v2989, %v2987
    %v3024 = vpack.c.b16 %v2990, %v2988
    %v3025 = vpack.c.b16 %v2993, %v2991
    %v3026 = vpack.c.b16 %v2994, %v2992
    %3059 = vmatpush.bf16.msra.mxu0 %v3009
    %3060 = vmatpush.bf16.msra.mxu0 %v3007
    %3061 = vmatpush.bf16.msra.mxu0 %v3005
    %3062 = vmatpush.bf16.msra.mxu0 %v3003
    %3063 = vmatpush.bf16.msra.mxu0 %v3001
    %3064 = vmatpush.bf16.msra.mxu0 %v2999
    %3065 = vmatpush.bf16.msra.mxu0 %v2997
    %3066 = vmatpush.bf16.msra.mxu0 %v2995
    %3067 = vmatmul.bf16.gmra.mxu0 %v2619
    %v3068 = vpop.f32.mrf.mxu0
    %v3069 = vadd.f32 %v2870, %v3068
    %v3070 = vpop.f32.mrf.mxu0
    %3071 = vdwg.mxu0
    %3072 = vmatpush.bf16.msra.mxu0 %v3025
    %3073 = vmatpush.bf16.msra.mxu0 %v3023
    %3074 = vmatpush.bf16.msra.mxu0 %v3021
    %3075 = vmatpush.bf16.msra.mxu0 %v3019
    %3076 = vmatpush.bf16.msra.mxu0 %v3017
    %3077 = vmatpush.bf16.msra.mxu0 %v3015
    %3078 = vmatpush.bf16.msra.mxu0 %v3013
    %3079 = vmatpush.bf16.msra.mxu0 %v3011
    %3080 = vmatmul.bf16.gmra.mxu0 %v2620
    %v3081 = vpop.f32.mrf.mxu0
    %v3082 = vadd.f32 %v3069, %v3081
    %v3083 = vpop.f32.mrf.mxu0
    %3084 = vdwg.mxu0
    %3085 = vmatpush.bf16.msra.mxu0 %v3010
    %3086 = vmatpush.bf16.msra.mxu0 %v3008
    %3087 = vmatpush.bf16.msra.mxu0 %v3006
    %3088 = vmatpush.bf16.msra.mxu0 %v3004
    %3089 = vmatpush.bf16.msra.mxu0 %v3002
    %3090 = vmatpush.bf16.msra.mxu0 %v3000
    %3091 = vmatpush.bf16.msra.mxu0 %v2998
    %3092 = vmatpush.bf16.msra.mxu0 %v2996
    %3093 = vmatmul.bf16.gmra.mxu0 %v2619
    %v3094 = vpop.f32.mrf.mxu0
    %v3095 = vadd.f32 %v2896, %v3094
    %v3096 = vpop.f32.mrf.mxu0
    %3097 = vdwg.mxu0
    %3098 = vmatpush.bf16.msra.mxu0 %v3026
    %3099 = vmatpush.bf16.msra.mxu0 %v3024
    %3100 = vmatpush.bf16.msra.mxu0 %v3022
    %3101 = vmatpush.bf16.msra.mxu0 %v3020
    %3102 = vmatpush.bf16.msra.mxu0 %v3018
    %3103 = vmatpush.bf16.msra.mxu0 %v3016
    %3104 = vmatpush.bf16.msra.mxu0 %v3014
    %3105 = vmatpush.bf16.msra.mxu0 %v3012
    %3106 = vmatmul.bf16.gmra.mxu0 %v2620
    %v3107 = vpop.f32.mrf.mxu0
    %v3108 = vadd.f32 %v3095, %v3107
    %v3109 = vpop.f32.mrf.mxu0
    %3110 = vdwg.mxu0
    %v3111 = vld [vmem:[%s3 + $0x21] sm:$0x3]
    %v3113 = vperm.slane %v3111, 0
    %v3114 = vperm.slane %v3111, 1
    %v3117 = vadd.f32 %v3082, %v3113
    %v3118 = vadd.f32 %v3108, %v3114
    %v3119 = vsub.f32 0.0, %v3117
    %v3120 = vsub.f32 0.0, %v3118
    %v3121 = vmul.f32 %v3119, 1.442695
    %v3122 = vpow.pop %v3121
    %v3123 = vmul.f32 %v3120, 1.442695
    %v3124 = vpow.pop %v3123
    %v3125 = vadd.f32 %v3122, 1.0
    %v3126 = vadd.f32 %v3124, 1.0
    %v3127 = vrcp.pop %v3125
    %v3128 = vrcp.pop %v3126
    %v3129 = vmul.f32 %v3117, %v3127
    %v3130 = vmul.f32 %v3118, %v3128
    %v3131 = vld [vmem:[%s3 + $0x29] sm:$0x3]
    %v3133 = vperm.slane %v3131, 0
    %v3134 = vperm.slane %v3131, 1
    %v3137 = vmul.f32 %v89, %v3133
    %v3138 = vmul.f32 %v89, %v3134
    %v3139 = vld [vmem:[%s3 + $0x2b] sm:$0x3]
    %v3141 = vperm.slane %v3139, 0
    %v3142 = vperm.slane %v3139, 1
    %v3145 = vadd.f32 %v3137, %v3141
    %v3146 = vadd.f32 %v3138, %v3142
    %v3147 = vld [vmem:[%s4 + $0x4] sm:$0xff]
    %v3148 = vld [vmem:[%s4 + $0x20] sm:$0xff]
    %v3149 = vld [vmem:[%s3 + $0x2d] sm:$0x3]
    %v3151 = vperm.slane %v3149, 0
    %v3152 = vperm.slane %v3149, 1
    %v3157 = vunpack.c.l.b16 %v3147
    %v3158 = vunpack.c.h.b16 %v3147
    %v3159 = vunpack.c.l.b16 %v3148
    %v3160 = vunpack.c.h.b16 %v3148
    %v3161 = vpack.c.b16 %v3159, %v3157
    %v3162 = vpack.c.b16 %v3160, %v3158
    %3165 = vmatpush.bf16.msra.mxu0 0
    %3166 = vmatpush.bf16.msra.mxu0 0
    %3167 = vmatpush.bf16.msra.mxu0 0
    %3168 = vmatpush.bf16.msra.mxu0 0
    %3169 = vmatpush.bf16.msra.mxu0 0
    %3170 = vmatpush.bf16.msra.mxu0 0
    %3171 = vmatpush.bf16.msra.mxu0 0
    %3172 = vmatpush.bf16.msra.mxu0 %v3161
    %3173 = vmatmul.bf16.gmra.mxu0 %v2164
    %v3174 = vpop.f32.mrf.mxu0
    %v3175 = vadd.f32 %v3151, %v3174
    %v3176 = vpop.f32.mrf.mxu0
    %3177 = vdwg.mxu0
    %3178 = vmatpush.bf16.msra.mxu0 0
    %3179 = vmatpush.bf16.msra.mxu0 0
    %3180 = vmatpush.bf16.msra.mxu0 0
    %3181 = vmatpush.bf16.msra.mxu0 0
    %3182 = vmatpush.bf16.msra.mxu0 0
    %3183 = vmatpush.bf16.msra.mxu0 0
    %3184 = vmatpush.bf16.msra.mxu0 0
    %3185 = vmatpush.bf16.msra.mxu0 %v3162
    %3186 = vmatmul.bf16.gmra.mxu0 %v2164
    %v3187 = vpop.f32.mrf.mxu0
    %v3188 = vadd.f32 %v3152, %v3187
    %v3189 = vpop.f32.mrf.mxu0
    %3190 = vdwg.mxu0
    %v3191 = vmul.f32 %v3129, %v3175
    %v3192 = vmul.f32 %v3130, %v3188
    %v3193 = vadd.f32 %v3191, %v3145
    %v3194 = vadd.f32 %v3192, %v3146
    %v3195 = vpack.c.bf16 %v3193, %v3193
    %v3196 = vpack.c.bf16 %v3194, %v3194
    %v3197 = vld [vmem:[#allocation6 + $0x24] sm:$0xff]
    %v3198 = vld [vmem:[#allocation6 + $0x54] sm:$0xff]
    %v3199 = vld [vmem:[#allocation6 + $0x84] sm:$0xff]
    %v3200 = vld [vmem:[#allocation6 + $0xb4] sm:$0xff]
    %v3201 = vld [vmem:[#allocation6 + $0xe4] sm:$0xff]
    %v3202 = vld [vmem:[#allocation6 + $0x114] sm:$0xff]
    %v3203 = vld [vmem:[#allocation6 + $0x144] sm:$0xff]
    %v3204 = vld [vmem:[#allocation6 + $0x174] sm:$0xff]
    %v3205 = vld [vmem:[#allocation6 + $0x1a4] sm:$0xff]
    %v3206 = vld [vmem:[#allocation6 + $0x1d4] sm:$0xff]
    %v3207 = vld [vmem:[#allocation6 + $0x204] sm:$0xff]
    %v3208 = vld [vmem:[#allocation6 + $0x234] sm:$0xff]
    %v3209 = vld [vmem:[#allocation6 + $0x264] sm:$0xff]
    %v3210 = vld [vmem:[#allocation6 + $0x294] sm:$0xff]
    %v3211 = vld [vmem:[#allocation6 + $0x2c4] sm:$0xff]
    %v3212 = vld [vmem:[#allocation6 + $0x2f4] sm:$0xff]
    %v3213 = vld [vmem:[#allocation6 + $0x324] sm:$0xff]
    %v3214 = vld [vmem:[#allocation6 + $0x354] sm:$0xff]
    %v3215 = vld [vmem:[#allocation6 + $0x384] sm:$0xff]
    %v3216 = vld [vmem:[#allocation6 + $0x3b4] sm:$0xff]
    %v3217 = vld [vmem:[#allocation6 + $0x3e4] sm:$0xff]
    %v3218 = vld [vmem:[#allocation6 + $0x414] sm:$0xff]
    %v3219 = vld [vmem:[#allocation6 + $0x444] sm:$0xff]
    %v3220 = vld [vmem:[#allocation6 + $0x474] sm:$0xff]
    %v3221 = vld [vmem:[#allocation6 + $0x4a4] sm:$0xff]
    %v3222 = vld [vmem:[#allocation6 + $0x4d4] sm:$0xff]
    %v3223 = vld [vmem:[#allocation6 + $0x504] sm:$0xff]
    %v3224 = vld [vmem:[#allocation6 + $0x534] sm:$0xff]
    %v3225 = vld [vmem:[#allocation6 + $0x564] sm:$0xff]
    %v3226 = vld [vmem:[#allocation6 + $0x594] sm:$0xff]
    %v3227 = vld [vmem:[#allocation6 + $0x5c4] sm:$0xff]
    %v3228 = vld [vmem:[#allocation6 + $0x5f4] sm:$0xff]
    %v3229 = vld [vmem:[%s3 + $0x23] sm:$0x3]
    %v3231 = vperm.slane %v3229, 0
    %v3232 = vperm.slane %v3229, 1
    %v3267 = vunpack.c.l.b16 %v3197
    %v3268 = vunpack.c.h.b16 %v3197
    %v3269 = vunpack.c.l.b16 %v3198
    %v3270 = vunpack.c.h.b16 %v3198
    %v3271 = vunpack.c.l.b16 %v3199
    %v3272 = vunpack.c.h.b16 %v3199
    %v3273 = vunpack.c.l.b16 %v3200
    %v3274 = vunpack.c.h.b16 %v3200
    %v3275 = vunpack.c.l.b16 %v3201
    %v3276 = vunpack.c.h.b16 %v3201
    %v3277 = vunpack.c.l.b16 %v3202
    %v3278 = vunpack.c.h.b16 %v3202
    %v3279 = vunpack.c.l.b16 %v3203
    %v3280 = vunpack.c.h.b16 %v3203
    %v3281 = vunpack.c.l.b16 %v3204
    %v3282 = vunpack.c.h.b16 %v3204
    %v3283 = vunpack.c.l.b16 %v3205
    %v3284 = vunpack.c.h.b16 %v3205
    %v3285 = vunpack.c.l.b16 %v3206
    %v3286 = vunpack.c.h.b16 %v3206
    %v3287 = vunpack.c.l.b16 %v3207
    %v3288 = vunpack.c.h.b16 %v3207
    %v3289 = vunpack.c.l.b16 %v3208
    %v3290 = vunpack.c.h.b16 %v3208
    %v3291 = vunpack.c.l.b16 %v3209
    %v3292 = vunpack.c.h.b16 %v3209
    %v3293 = vunpack.c.l.b16 %v3210
    %v3294 = vunpack.c.h.b16 %v3210
    %v3295 = vunpack.c.l.b16 %v3211
    %v3296 = vunpack.c.h.b16 %v3211
    %v3297 = vunpack.c.l.b16 %v3212
    %v3298 = vunpack.c.h.b16 %v3212
    %v3299 = vunpack.c.l.b16 %v3213
    %v3300 = vunpack.c.h.b16 %v3213
    %v3301 = vunpack.c.l.b16 %v3214
    %v3302 = vunpack.c.h.b16 %v3214
    %v3303 = vunpack.c.l.b16 %v3215
    %v3304 = vunpack.c.h.b16 %v3215
    %v3305 = vunpack.c.l.b16 %v3216
    %v3306 = vunpack.c.h.b16 %v3216
    %v3307 = vunpack.c.l.b16 %v3217
    %v3308 = vunpack.c.h.b16 %v3217
    %v3309 = vunpack.c.l.b16 %v3218
    %v3310 = vunpack.c.h.b16 %v3218
    %v3311 = vunpack.c.l.b16 %v3219
    %v3312 = vunpack.c.h.b16 %v3219
    %v3313 = vunpack.c.l.b16 %v3220
    %v3314 = vunpack.c.h.b16 %v3220
    %v3315 = vunpack.c.l.b16 %v3221
    %v3316 = vunpack.c.h.b16 %v3221
    %v3317 = vunpack.c.l.b16 %v3222
    %v3318 = vunpack.c.h.b16 %v3222
    %v3319 = vunpack.c.l.b16 %v3223
    %v3320 = vunpack.c.h.b16 %v3223
    %v3321 = vunpack.c.l.b16 %v3224
    %v3322 = vunpack.c.h.b16 %v3224
    %v3323 = vunpack.c.l.b16 %v3225
    %v3324 = vunpack.c.h.b16 %v3225
    %v3325 = vunpack.c.l.b16 %v3226
    %v3326 = vunpack.c.h.b16 %v3226
    %v3327 = vunpack.c.l.b16 %v3227
    %v3328 = vunpack.c.h.b16 %v3227
    %v3329 = vunpack.c.l.b16 %v3228
    %v3330 = vunpack.c.h.b16 %v3228
    %v3331 = vpack.c.b16 %v3269, %v3267
    %v3332 = vpack.c.b16 %v3270, %v3268
    %v3333 = vpack.c.b16 %v3273, %v3271
    %v3334 = vpack.c.b16 %v3274, %v3272
    %v3335 = vpack.c.b16 %v3277, %v3275
    %v3336 = vpack.c.b16 %v3278, %v3276
    %v3337 = vpack.c.b16 %v3281, %v3279
    %v3338 = vpack.c.b16 %v3282, %v3280
    %v3339 = vpack.c.b16 %v3285, %v3283
    %v3340 = vpack.c.b16 %v3286, %v3284
    %v3341 = vpack.c.b16 %v3289, %v3287
    %v3342 = vpack.c.b16 %v3290, %v3288
    %v3343 = vpack.c.b16 %v3293, %v3291
    %v3344 = vpack.c.b16 %v3294, %v3292
    %v3345 = vpack.c.b16 %v3297, %v3295
    %v3346 = vpack.c.b16 %v3298, %v3296
    %v3347 = vpack.c.b16 %v3301, %v3299
    %v3348 = vpack.c.b16 %v3302, %v3300
    %v3349 = vpack.c.b16 %v3305, %v3303
    %v3350 = vpack.c.b16 %v3306, %v3304
    %v3351 = vpack.c.b16 %v3309, %v3307
    %v3352 = vpack.c.b16 %v3310, %v3308
    %v3353 = vpack.c.b16 %v3313, %v3311
    %v3354 = vpack.c.b16 %v3314, %v3312
    %v3355 = vpack.c.b16 %v3317, %v3315
    %v3356 = vpack.c.b16 %v3318, %v3316
    %v3357 = vpack.c.b16 %v3321, %v3319
    %v3358 = vpack.c.b16 %v3322, %v3320
    %v3359 = vpack.c.b16 %v3325, %v3323
    %v3360 = vpack.c.b16 %v3326, %v3324
    %v3361 = vpack.c.b16 %v3329, %v3327
    %v3362 = vpack.c.b16 %v3330, %v3328
    %3395 = vmatpush.bf16.msra.mxu0 %v3345
    %3396 = vmatpush.bf16.msra.mxu0 %v3343
    %3397 = vmatpush.bf16.msra.mxu0 %v3341
    %3398 = vmatpush.bf16.msra.mxu0 %v3339
    %3399 = vmatpush.bf16.msra.mxu0 %v3337
    %3400 = vmatpush.bf16.msra.mxu0 %v3335
    %3401 = vmatpush.bf16.msra.mxu0 %v3333
    %3402 = vmatpush.bf16.msra.mxu0 %v3331
    %3403 = vmatmul.bf16.gmra.mxu0 %v3195
    %v3404 = vpop.f32.mrf.mxu0
    %v3405 = vadd.f32 %v3231, %v3404
    %v3406 = vpop.f32.mrf.mxu0
    %3407 = vdwg.mxu0
    %3408 = vmatpush.bf16.msra.mxu0 %v3361
    %3409 = vmatpush.bf16.msra.mxu0 %v3359
    %3410 = vmatpush.bf16.msra.mxu0 %v3357
    %3411 = vmatpush.bf16.msra.mxu0 %v3355
    %3412 = vmatpush.bf16.msra.mxu0 %v3353
    %3413 = vmatpush.bf16.msra.mxu0 %v3351
    %3414 = vmatpush.bf16.msra.mxu0 %v3349
    %3415 = vmatpush.bf16.msra.mxu0 %v3347
    %3416 = vmatmul.bf16.gmra.mxu0 %v3196
    %v3417 = vpop.f32.mrf.mxu0
    %v3418 = vadd.f32 %v3405, %v3417
    %v3419 = vpop.f32.mrf.mxu0
    %3420 = vdwg.mxu0
    %3421 = vmatpush.bf16.msra.mxu0 %v3346
    %3422 = vmatpush.bf16.msra.mxu0 %v3344
    %3423 = vmatpush.bf16.msra.mxu0 %v3342
    %3424 = vmatpush.bf16.msra.mxu0 %v3340
    %3425 = vmatpush.bf16.msra.mxu0 %v3338
    %3426 = vmatpush.bf16.msra.mxu0 %v3336
    %3427 = vmatpush.bf16.msra.mxu0 %v3334
    %3428 = vmatpush.bf16.msra.mxu0 %v3332
    %3429 = vmatmul.bf16.gmra.mxu0 %v3195
    %v3430 = vpop.f32.mrf.mxu0
    %v3431 = vadd.f32 %v3232, %v3430
    %v3432 = vpop.f32.mrf.mxu0
    %3433 = vdwg.mxu0
    %3434 = vmatpush.bf16.msra.mxu0 %v3362
    %3435 = vmatpush.bf16.msra.mxu0 %v3360
    %3436 = vmatpush.bf16.msra.mxu0 %v3358
    %3437 = vmatpush.bf16.msra.mxu0 %v3356
    %3438 = vmatpush.bf16.msra.mxu0 %v3354
    %3439 = vmatpush.bf16.msra.mxu0 %v3352
    %3440 = vmatpush.bf16.msra.mxu0 %v3350
    %3441 = vmatpush.bf16.msra.mxu0 %v3348
    %3442 = vmatmul.bf16.gmra.mxu0 %v3196
    %v3443 = vpop.f32.mrf.mxu0
    %v3444 = vadd.f32 %v3431, %v3443
    %v3445 = vpop.f32.mrf.mxu0
    %3446 = vdwg.mxu0
    %v3447 = vsub.f32 0.0, %v3418
    %v3448 = vsub.f32 0.0, %v3444
    %v3449 = vmul.f32 %v3447, 1.442695
    %v3450 = vpow.pop %v3449
    %v3451 = vmul.f32 %v3448, 1.442695
    %v3452 = vpow.pop %v3451
    %v3453 = vadd.f32 %v3450, 1.0
    %v3454 = vadd.f32 %v3452, 1.0
    %v3455 = vrcp.pop %v3453
    %v3456 = vrcp.pop %v3454
    %v3457 = vmul.f32 %v3418, %v3455
    %v3458 = vmul.f32 %v3444, %v3456
    %v3459 = vadd.f32 %v3457, %v2409
    %v3460 = vadd.f32 %v3458, %v2410
    %3461 = vmatpush.msra.mxu0 %v557
    %3462 = vmatpush.msra.mxu0 %v556
    %3463 = vmatpush.msra.mxu0 %v555
    %3464 = vmatpush.msra.mxu0 %v554
    %3465 = vmatpush.msra.mxu0 %v553
    %3466 = vmatpush.msra.mxu0 %v552
    %3467 = vmatpush.msra.mxu0 %v551
    %3468 = vmatpush.msra.mxu0 %v550
    %3469 = vmatpush.msra.mxu0 %v549
    %3470 = vmatpush.msra.mxu0 %v548
    %3471 = vmatpush.msra.mxu0 %v547
    %3472 = vmatpush.msra.mxu0 %v546
    %3473 = vmatpush.msra.mxu0 %v545
    %3474 = vmatpush.msra.mxu0 %v544
    %3475 = vmatpush.msra.mxu0 %v543
    %3476 = vmatpush.msra.mxu0 %v542
    %3477 = vmatmul.f32.gmra.mxu0 %v3459
    %v3478 = vpop.f32.mrf.mxu0
    %v3479 = vadd.f32 0.0, %v3478
    %3480 = vdwg.mxu0
    %3481 = vmatpush.msra.mxu0 %v573
    %3482 = vmatpush.msra.mxu0 %v572
    %3483 = vmatpush.msra.mxu0 %v571
    %3484 = vmatpush.msra.mxu0 %v570
    %3485 = vmatpush.msra.mxu0 %v569
    %3486 = vmatpush.msra.mxu0 %v568
    %3487 = vmatpush.msra.mxu0 %v567
    %3488 = vmatpush.msra.mxu0 %v566
    %3489 = vmatpush.msra.mxu0 %v565
    %3490 = vmatpush.msra.mxu0 %v564
    %3491 = vmatpush.msra.mxu0 %v563
    %3492 = vmatpush.msra.mxu0 %v562
    %3493 = vmatpush.msra.mxu0 %v561
    %3494 = vmatpush.msra.mxu0 %v560
    %3495 = vmatpush.msra.mxu0 %v559
    %3496 = vmatpush.msra.mxu0 %v558
    %3497 = vmatmul.f32.gmra.mxu0 %v3460
    %v3498 = vpop.f32.mrf.mxu0
    %v3499 = vadd.f32 %v3479, %v3498
    %3500 = vdwg.mxu0
    %v3502 = vsel %vm622, %v3499, 0
    %3504 = vmatpush.msra.mxu0 0.0
    %3505 = vmatpush.msra.mxu0 0.0
    %3506 = vmatpush.msra.mxu0 0.0
    %3507 = vmatpush.msra.mxu0 0.0
    %3508 = vmatpush.msra.mxu0 0.0
    %3509 = vmatpush.msra.mxu0 0.0
    %3510 = vmatpush.msra.mxu0 0.0
    %3511 = vmatpush.msra.mxu0 0.0
    %3512 = vmatpush.msra.mxu0 0.0
    %3513 = vmatpush.msra.mxu0 0.0
    %3514 = vmatpush.msra.mxu0 0.0
    %3515 = vmatpush.msra.mxu0 0.0
    %3516 = vmatpush.msra.mxu0 %v580
    %3517 = vmatpush.msra.mxu0 %v578
    %3518 = vmatpush.msra.mxu0 %v576
    %3519 = vmatpush.msra.mxu0 %v574
    %3520 = vmatmul.f32.gmra.mxu0 %v3502
    %v3521 = vpop.f32.mrf.mxu0
    %v3522 = vadd.f32 0.0, %v3521
    %3523 = vdwg.mxu0
    %3524 = vmatpush.msra.mxu0 0.0
    %3525 = vmatpush.msra.mxu0 0.0
    %3526 = vmatpush.msra.mxu0 0.0
    %3527 = vmatpush.msra.mxu0 0.0
    %3528 = vmatpush.msra.mxu0 0.0
    %3529 = vmatpush.msra.mxu0 0.0
    %3530 = vmatpush.msra.mxu0 0.0
    %3531 = vmatpush.msra.mxu0 0.0
    %3532 = vmatpush.msra.mxu0 0.0
    %3533 = vmatpush.msra.mxu0 0.0
    %3534 = vmatpush.msra.mxu0 0.0
    %3535 = vmatpush.msra.mxu0 0.0
    %3536 = vmatpush.msra.mxu0 %v581
    %3537 = vmatpush.msra.mxu0 %v579
    %3538 = vmatpush.msra.mxu0 %v577
    %3539 = vmatpush.msra.mxu0 %v575
    %3540 = vmatmul.f32.gmra.mxu0 %v3502
    %v3541 = vpop.f32.mrf.mxu0
    %v3542 = vadd.f32 0.0, %v3541
    %3543 = vdwg.mxu0
    %v3544 = vsub.f32 %v3459, %v3522
    %v3545 = vsub.f32 %v3460, %v3542
    %v3546 = vmul.f32 %v3544, %v3544
    %v3547 = vmul.f32 %v3545, %v3545
    %3548 = vmatpush.msra.mxu0 %v557
    %3549 = vmatpush.msra.mxu0 %v556
    %3550 = vmatpush.msra.mxu0 %v555
    %3551 = vmatpush.msra.mxu0 %v554
    %3552 = vmatpush.msra.mxu0 %v553
    %3553 = vmatpush.msra.mxu0 %v552
    %3554 = vmatpush.msra.mxu0 %v551
    %3555 = vmatpush.msra.mxu0 %v550
    %3556 = vmatpush.msra.mxu0 %v549
    %3557 = vmatpush.msra.mxu0 %v548
    %3558 = vmatpush.msra.mxu0 %v547
    %3559 = vmatpush.msra.mxu0 %v546
    %3560 = vmatpush.msra.mxu0 %v545
    %3561 = vmatpush.msra.mxu0 %v544
    %3562 = vmatpush.msra.mxu0 %v543
    %3563 = vmatpush.msra.mxu0 %v542
    %3564 = vmatmul.f32.gmra.mxu0 %v3546
    %v3565 = vpop.f32.mrf.mxu0
    %v3566 = vadd.f32 0.0, %v3565
    %3567 = vdwg.mxu0
    %3568 = vmatpush.msra.mxu0 %v573
    %3569 = vmatpush.msra.mxu0 %v572
    %3570 = vmatpush.msra.mxu0 %v571
    %3571 = vmatpush.msra.mxu0 %v570
    %3572 = vmatpush.msra.mxu0 %v569
    %3573 = vmatpush.msra.mxu0 %v568
    %3574 = vmatpush.msra.mxu0 %v567
    %3575 = vmatpush.msra.mxu0 %v566
    %3576 = vmatpush.msra.mxu0 %v565
    %3577 = vmatpush.msra.mxu0 %v564
    %3578 = vmatpush.msra.mxu0 %v563
    %3579 = vmatpush.msra.mxu0 %v562
    %3580 = vmatpush.msra.mxu0 %v561
    %3581 = vmatpush.msra.mxu0 %v560
    %3582 = vmatpush.msra.mxu0 %v559
    %3583 = vmatpush.msra.mxu0 %v558
    %3584 = vmatmul.f32.gmra.mxu0 %v3547
    %v3585 = vpop.f32.mrf.mxu0
    %v3586 = vadd.f32 %v3566, %v3585
    %3587 = vdwg.mxu0
    %v3589 = vsel %vm622, %v3586, 0
    %3591 = vmatpush.msra.mxu0 0.0
    %3592 = vmatpush.msra.mxu0 0.0
    %3593 = vmatpush.msra.mxu0 0.0
    %3594 = vmatpush.msra.mxu0 0.0
    %3595 = vmatpush.msra.mxu0 0.0
    %3596 = vmatpush.msra.mxu0 0.0
    %3597 = vmatpush.msra.mxu0 0.0
    %3598 = vmatpush.msra.mxu0 0.0
    %3599 = vmatpush.msra.mxu0 0.0
    %3600 = vmatpush.msra.mxu0 0.0
    %3601 = vmatpush.msra.mxu0 0.0
    %3602 = vmatpush.msra.mxu0 0.0
    %3603 = vmatpush.msra.mxu0 %v580
    %3604 = vmatpush.msra.mxu0 %v578
    %3605 = vmatpush.msra.mxu0 %v576
    %3606 = vmatpush.msra.mxu0 %v574
    %3607 = vmatmul.f32.gmra.mxu0 %v3589
    %v3608 = vpop.f32.mrf.mxu0
    %v3609 = vadd.f32 1e-05, %v3608
    %3610 = vdwg.mxu0
    %3611 = vmatpush.msra.mxu0 0.0
    %3612 = vmatpush.msra.mxu0 0.0
    %3613 = vmatpush.msra.mxu0 0.0
    %3614 = vmatpush.msra.mxu0 0.0
    %3615 = vmatpush.msra.mxu0 0.0
    %3616 = vmatpush.msra.mxu0 0.0
    %3617 = vmatpush.msra.mxu0 0.0
    %3618 = vmatpush.msra.mxu0 0.0
    %3619 = vmatpush.msra.mxu0 0.0
    %3620 = vmatpush.msra.mxu0 0.0
    %3621 = vmatpush.msra.mxu0 0.0
    %3622 = vmatpush.msra.mxu0 0.0
    %3623 = vmatpush.msra.mxu0 %v581
    %3624 = vmatpush.msra.mxu0 %v579
    %3625 = vmatpush.msra.mxu0 %v577
    %3626 = vmatpush.msra.mxu0 %v575
    %3627 = vmatmul.f32.gmra.mxu0 %v3589
    %v3628 = vpop.f32.mrf.mxu0
    %v3629 = vadd.f32 1e-05, %v3628
    %3630 = vdwg.mxu0
    %v3631 = vrsqrt.pop %v3609
    %v3632 = vmul.f32 %v3631, %v3609
    %v3633 = vmul.f32 %v3632, %v3631
    %v3634 = vmul.f32 0.5, %v3633
    %v3635 = vsub.f32 1.5, %v3634
    %v3636 = vmul.f32 %v3631, %v3635
    %vm3637 = vweird.f32 %v3609
    %vm3638 = vweird.f32 %v3631
    %vm3639 = vmor %vm3637, %vm3638
    %v3640 = vsel %vm3639, %v3631, %v3636
    %v3641 = vrsqrt.pop %v3629
    %v3642 = vmul.f32 %v3641, %v3629
    %v3643 = vmul.f32 %v3642, %v3641
    %v3644 = vmul.f32 0.5, %v3643
    %v3645 = vsub.f32 1.5, %v3644
    %v3646 = vmul.f32 %v3641, %v3645
    %vm3647 = vweird.f32 %v3629
    %vm3648 = vweird.f32 %v3641
    %vm3649 = vmor %vm3647, %vm3648
    %v3650 = vsel %vm3649, %v3641, %v3646
    %v3651 = vmul.f32 %v3544, %v3640
    %v3652 = vmul.f32 %v3545, %v3650
    %v3653 = vld [vmem:[%s3 + $0x2f] sm:$0x3]
    %v3655 = vperm.slane %v3653, 0
    %v3656 = vperm.slane %v3653, 1
    %v3659 = vmul.f32 %v3651, %v3655
    %v3660 = vmul.f32 %v3652, %v3656
    %v3661 = vld [vmem:[%s3 + $0x31] sm:$0x3]
    %v3663 = vperm.slane %v3661, 0
    %v3664 = vperm.slane %v3661, 1
    %v3667 = vadd.f32 %v3659, %v3663
    %v3668 = vadd.f32 %v3660, %v3664
    %v3669 = vsub.f32 0.0, %v3667
    %v3670 = vsub.f32 0.0, %v3668
    %v3671 = vmul.f32 %v3669, 1.442695
    %v3672 = vpow.pop %v3671
    %v3673 = vmul.f32 %v3670, 1.442695
    %v3674 = vpow.pop %v3673
    %v3675 = vadd.f32 %v3672, 1.0
    %v3676 = vadd.f32 %v3674, 1.0
    %v3677 = vrcp.pop %v3675
    %v3678 = vrcp.pop %v3676
    %v3679 = vmul.f32 %v3667, %v3677
    %v3680 = vmul.f32 %v3668, %v3678
    %v3681 = vpack.c.bf16 %v3679, %v3679
    %v3682 = vpack.c.bf16 %v3680, %v3680
    %v3683 = vld [vmem:[#allocation6 + $0x2c] sm:$0xf]
    %v3684 = vld [vmem:[#allocation6 + $0x5c] sm:$0xf]
    %v3685 = vld [vmem:[#allocation6 + $0x8c] sm:$0xf]
    %v3686 = vld [vmem:[#allocation6 + $0xbc] sm:$0xf]
    %v3687 = vld [vmem:[#allocation6 + $0xec] sm:$0xf]
    %v3688 = vld [vmem:[#allocation6 + $0x11c] sm:$0xf]
    %v3689 = vld [vmem:[#allocation6 + $0x14c] sm:$0xf]
    %v3690 = vld [vmem:[#allocation6 + $0x17c] sm:$0xf]
    %v3691 = vld [vmem:[#allocation6 + $0x1ac] sm:$0xf]
    %v3692 = vld [vmem:[#allocation6 + $0x1dc] sm:$0xf]
    %v3693 = vld [vmem:[#allocation6 + $0x20c] sm:$0xf]
    %v3694 = vld [vmem:[#allocation6 + $0x23c] sm:$0xf]
    %v3695 = vld [vmem:[#allocation6 + $0x26c] sm:$0xf]
    %v3696 = vld [vmem:[#allocation6 + $0x29c] sm:$0xf]
    %v3697 = vld [vmem:[#allocation6 + $0x2cc] sm:$0xf]
    %v3698 = vld [vmem:[#allocation6 + $0x2fc] sm:$0xf]
    %v3699 = vld [vmem:[#allocation6 + $0x32c] sm:$0xf]
    %v3700 = vld [vmem:[#allocation6 + $0x35c] sm:$0xf]
    %v3701 = vld [vmem:[#allocation6 + $0x38c] sm:$0xf]
    %v3702 = vld [vmem:[#allocation6 + $0x3bc] sm:$0xf]
    %v3703 = vld [vmem:[#allocation6 + $0x3ec] sm:$0xf]
    %v3704 = vld [vmem:[#allocation6 + $0x41c] sm:$0xf]
    %v3705 = vld [vmem:[#allocation6 + $0x44c] sm:$0xf]
    %v3706 = vld [vmem:[#allocation6 + $0x47c] sm:$0xf]
    %v3707 = vld [vmem:[#allocation6 + $0x4ac] sm:$0xf]
    %v3708 = vld [vmem:[#allocation6 + $0x4dc] sm:$0xf]
    %v3709 = vld [vmem:[#allocation6 + $0x50c] sm:$0xf]
    %v3710 = vld [vmem:[#allocation6 + $0x53c] sm:$0xf]
    %v3711 = vld [vmem:[#allocation6 + $0x56c] sm:$0xf]
    %v3712 = vld [vmem:[#allocation6 + $0x59c] sm:$0xf]
    %v3713 = vld [vmem:[#allocation6 + $0x5cc] sm:$0xf]
    %v3714 = vld [vmem:[#allocation6 + $0x5fc] sm:$0xf]
    %v3715 = vld [vmem:[%s3 + $0x33] sm:$0x1]
    %v3717 = vperm.slane %v3715, 0
    %v3751 = vunpack.c.l.b16 %v3683
    %v3752 = vunpack.c.l.b16 %v3684
    %v3753 = vunpack.c.l.b16 %v3685
    %v3754 = vunpack.c.l.b16 %v3686
    %v3755 = vunpack.c.l.b16 %v3687
    %v3756 = vunpack.c.l.b16 %v3688
    %v3757 = vunpack.c.l.b16 %v3689
    %v3758 = vunpack.c.l.b16 %v3690
    %v3759 = vunpack.c.l.b16 %v3691
    %v3760 = vunpack.c.l.b16 %v3692
    %v3761 = vunpack.c.l.b16 %v3693
    %v3762 = vunpack.c.l.b16 %v3694
    %v3763 = vunpack.c.l.b16 %v3695
    %v3764 = vunpack.c.l.b16 %v3696
    %v3765 = vunpack.c.l.b16 %v3697
    %v3766 = vunpack.c.l.b16 %v3698
    %v3767 = vunpack.c.l.b16 %v3699
    %v3768 = vunpack.c.l.b16 %v3700
    %v3769 = vunpack.c.l.b16 %v3701
    %v3770 = vunpack.c.l.b16 %v3702
    %v3771 = vunpack.c.l.b16 %v3703
    %v3772 = vunpack.c.l.b16 %v3704
    %v3773 = vunpack.c.l.b16 %v3705
    %v3774 = vunpack.c.l.b16 %v3706
    %v3775 = vunpack.c.l.b16 %v3707
    %v3776 = vunpack.c.l.b16 %v3708
    %v3777 = vunpack.c.l.b16 %v3709
    %v3778 = vunpack.c.l.b16 %v3710
    %v3779 = vunpack.c.l.b16 %v3711
    %v3780 = vunpack.c.l.b16 %v3712
    %v3781 = vunpack.c.l.b16 %v3713
    %v3782 = vunpack.c.l.b16 %v3714
    %v3783 = vpack.c.b16 %v3752, %v3751
    %v3784 = vpack.c.b16 %v3754, %v3753
    %v3785 = vpack.c.b16 %v3756, %v3755
    %v3786 = vpack.c.b16 %v3758, %v3757
    %v3787 = vpack.c.b16 %v3760, %v3759
    %v3788 = vpack.c.b16 %v3762, %v3761
    %v3789 = vpack.c.b16 %v3764, %v3763
    %v3790 = vpack.c.b16 %v3766, %v3765
    %v3791 = vpack.c.b16 %v3768, %v3767
    %v3792 = vpack.c.b16 %v3770, %v3769
    %v3793 = vpack.c.b16 %v3772, %v3771
    %v3794 = vpack.c.b16 %v3774, %v3773
    %v3795 = vpack.c.b16 %v3776, %v3775
    %v3796 = vpack.c.b16 %v3778, %v3777
    %v3797 = vpack.c.b16 %v3780, %v3779
    %v3798 = vpack.c.b16 %v3782, %v3781
    %3815 = vmatpush.bf16.msra.mxu0 %v3790
    %3816 = vmatpush.bf16.msra.mxu0 %v3789
    %3817 = vmatpush.bf16.msra.mxu0 %v3788
    %3818 = vmatpush.bf16.msra.mxu0 %v3787
    %3819 = vmatpush.bf16.msra.mxu0 %v3786
    %3820 = vmatpush.bf16.msra.mxu0 %v3785
    %3821 = vmatpush.bf16.msra.mxu0 %v3784
    %3822 = vmatpush.bf16.msra.mxu0 %v3783
    %3823 = vmatmul.bf16.gmra.mxu0 %v3681
    %v3824 = vpop.f32.mrf.mxu0
    %v3825 = vadd.f32 %v3717, %v3824
    %v3826 = vpop.f32.mrf.mxu0
    %3827 = vdwg.mxu0
    %3828 = vmatpush.bf16.msra.mxu0 %v3798
    %3829 = vmatpush.bf16.msra.mxu0 %v3797
    %3830 = vmatpush.bf16.msra.mxu0 %v3796
    %3831 = vmatpush.bf16.msra.mxu0 %v3795
    %3832 = vmatpush.bf16.msra.mxu0 %v3794
    %3833 = vmatpush.bf16.msra.mxu0 %v3793
    %3834 = vmatpush.bf16.msra.mxu0 %v3792
    %3835 = vmatpush.bf16.msra.mxu0 %v3791
    %3836 = vmatmul.bf16.gmra.mxu0 %v3682
    %v3837 = vpop.f32.mrf.mxu0
    %v3838 = vadd.f32 %v3825, %v3837
    %v3839 = vpop.f32.mrf.mxu0
    %3840 = vdwg.mxu0
    %v3841 = vadd.f32 %v3838, %v82
    %v3842 = vld [vmem:[#allocation4 + $0x28] sm:$0xff]
    %v3843 = vld [vmem:[#allocation4 + $0x30] sm:$0xff]
    %v3844 = vld [vmem:[#allocation4 + $0x60] sm:$0xff]
    %v3845 = vld [vmem:[#allocation4 + $0x68] sm:$0xff]
    %v3846 = vld [vmem:[#allocation4 + $0x98] sm:$0xff]
    %v3847 = vld [vmem:[#allocation4 + $0xa0] sm:$0xff]
    %v3848 = vld [vmem:[#allocation4 + $0xd0] sm:$0xff]
    %v3849 = vld [vmem:[#allocation4 + $0xd8] sm:$0xff]
    %v3850 = vld [vmem:[#allocation4 + $0x108] sm:$0xff]
    %v3851 = vld [vmem:[#allocation4 + $0x110] sm:$0xff]
    %v3852 = vld [vmem:[#allocation4 + $0x140] sm:$0xff]
    %v3853 = vld [vmem:[#allocation4 + $0x148] sm:$0xff]
    %v3854 = vld [vmem:[#allocation4 + $0x178] sm:$0xff]
    %v3855 = vld [vmem:[#allocation4 + $0x180] sm:$0xff]
    %v3856 = vld [vmem:[#allocation4 + $0x1b0] sm:$0xff]
    %v3857 = vld [vmem:[#allocation4 + $0x1b8] sm:$0xff]
    %v3858 = vld [vmem:[#allocation4 + $0x1e8] sm:$0xff]
    %v3859 = vld [vmem:[#allocation4 + $0x1f0] sm:$0xff]
    %v3860 = vld [vmem:[#allocation4 + $0x220] sm:$0xff]
    %v3861 = vld [vmem:[#allocation4 + $0x228] sm:$0xff]
    %v3862 = vld [vmem:[#allocation4 + $0x258] sm:$0xff]
    %v3863 = vld [vmem:[#allocation4 + $0x260] sm:$0xff]
    %v3864 = vld [vmem:[#allocation4 + $0x290] sm:$0xff]
    %v3865 = vld [vmem:[#allocation4 + $0x298] sm:$0xff]
    %v3866 = vld [vmem:[#allocation4 + $0x2c8] sm:$0xff]
    %v3867 = vld [vmem:[#allocation4 + $0x2d0] sm:$0xff]
    %v3868 = vld [vmem:[#allocation4 + $0x300] sm:$0xff]
    %v3869 = vld [vmem:[#allocation4 + $0x308] sm:$0xff]
    %v3870 = vld [vmem:[#allocation4 + $0x338] sm:$0xff]
    %v3871 = vld [vmem:[#allocation4 + $0x340] sm:$0xff]
    %v3872 = vld [vmem:[#allocation4 + $0x370] sm:$0xff]
    %v3873 = vld [vmem:[#allocation4 + $0x378] sm:$0xff]
    %v3874 = vld [vmem:[%s3 + $0x34] sm:$0xf]
    %v3876 = vperm.slane %v3874, 0
    %v3877 = vperm.slane %v3874, 1
    %v3878 = vperm.slane %v3874, 2
    %v3879 = vperm.slane %v3874, 3
    %v3916 = vunpack.c.l.b16 %v3842
    %v3917 = vunpack.c.h.b16 %v3842
    %v3918 = vunpack.c.l.b16 %v3843
    %v3919 = vunpack.c.h.b16 %v3843
    %v3920 = vunpack.c.l.b16 %v3844
    %v3921 = vunpack.c.h.b16 %v3844
    %v3922 = vunpack.c.l.b16 %v3845
    %v3923 = vunpack.c.h.b16 %v3845
    %v3924 = vunpack.c.l.b16 %v3846
    %v3925 = vunpack.c.h.b16 %v3846
    %v3926 = vunpack.c.l.b16 %v3847
    %v3927 = vunpack.c.h.b16 %v3847
    %v3928 = vunpack.c.l.b16 %v3848
    %v3929 = vunpack.c.h.b16 %v3848
    %v3930 = vunpack.c.l.b16 %v3849
    %v3931 = vunpack.c.h.b16 %v3849
    %v3932 = vunpack.c.l.b16 %v3850
    %v3933 = vunpack.c.h.b16 %v3850
    %v3934 = vunpack.c.l.b16 %v3851
    %v3935 = vunpack.c.h.b16 %v3851
    %v3936 = vunpack.c.l.b16 %v3852
    %v3937 = vunpack.c.h.b16 %v3852
    %v3938 = vunpack.c.l.b16 %v3853
    %v3939 = vunpack.c.h.b16 %v3853
    %v3940 = vunpack.c.l.b16 %v3854
    %v3941 = vunpack.c.h.b16 %v3854
    %v3942 = vunpack.c.l.b16 %v3855
    %v3943 = vunpack.c.h.b16 %v3855
    %v3944 = vunpack.c.l.b16 %v3856
    %v3945 = vunpack.c.h.b16 %v3856
    %v3946 = vunpack.c.l.b16 %v3857
    %v3947 = vunpack.c.h.b16 %v3857
    %v3948 = vunpack.c.l.b16 %v3858
    %v3949 = vunpack.c.h.b16 %v3858
    %v3950 = vunpack.c.l.b16 %v3859
    %v3951 = vunpack.c.h.b16 %v3859
    %v3952 = vunpack.c.l.b16 %v3860
    %v3953 = vunpack.c.h.b16 %v3860
    %v3954 = vunpack.c.l.b16 %v3861
    %v3955 = vunpack.c.h.b16 %v3861
    %v3956 = vunpack.c.l.b16 %v3862
    %v3957 = vunpack.c.h.b16 %v3862
    %v3958 = vunpack.c.l.b16 %v3863
    %v3959 = vunpack.c.h.b16 %v3863
    %v3960 = vunpack.c.l.b16 %v3864
    %v3961 = vunpack.c.h.b16 %v3864
    %v3962 = vunpack.c.l.b16 %v3865
    %v3963 = vunpack.c.h.b16 %v3865
    %v3964 = vunpack.c.l.b16 %v3866
    %v3965 = vunpack.c.h.b16 %v3866
    %v3966 = vunpack.c.l.b16 %v3867
    %v3967 = vunpack.c.h.b16 %v3867
    %v3968 = vunpack.c.l.b16 %v3868
    %v3969 = vunpack.c.h.b16 %v3868
    %v3970 = vunpack.c.l.b16 %v3869
    %v3971 = vunpack.c.h.b16 %v3869
    %v3972 = vunpack.c.l.b16 %v3870
    %v3973 = vunpack.c.h.b16 %v3870
    %v3974 = vunpack.c.l.b16 %v3871
    %v3975 = vunpack.c.h.b16 %v3871
    %v3976 = vunpack.c.l.b16 %v3872
    %v3977 = vunpack.c.h.b16 %v3872
    %v3978 = vunpack.c.l.b16 %v3873
    %v3979 = vunpack.c.h.b16 %v3873
    %v3980 = vpack.c.b16 %v3920, %v3916
    %v3981 = vpack.c.b16 %v3921, %v3917
    %v3982 = vpack.c.b16 %v3922, %v3918
    %v3983 = vpack.c.b16 %v3923, %v3919
    %v3984 = vpack.c.b16 %v3928, %v3924
    %v3985 = vpack.c.b16 %v3929, %v3925
    %v3986 = vpack.c.b16 %v3930, %v3926
    %v3987 = vpack.c.b16 %v3931, %v3927
    %v3988 = vpack.c.b16 %v3936, %v3932
    %v3989 = vpack.c.b16 %v3937, %v3933
    %v3990 = vpack.c.b16 %v3938, %v3934
    %v3991 = vpack.c.b16 %v3939, %v3935
    %v3992 = vpack.c.b16 %v3944, %v3940
    %v3993 = vpack.c.b16 %v3945, %v3941
    %v3994 = vpack.c.b16 %v3946, %v3942
    %v3995 = vpack.c.b16 %v3947, %v3943
    %v3996 = vpack.c.b16 %v3952, %v3948
    %v3997 = vpack.c.b16 %v3953, %v3949
    %v3998 = vpack.c.b16 %v3954, %v3950
    %v3999 = vpack.c.b16 %v3955, %v3951
    %v4000 = vpack.c.b16 %v3960, %v3956
    %v4001 = vpack.c.b16 %v3961, %v3957
    %v4002 = vpack.c.b16 %v3962, %v3958
    %v4003 = vpack.c.b16 %v3963, %v3959
    %v4004 = vpack.c.b16 %v3968, %v3964
    %v4005 = vpack.c.b16 %v3969, %v3965
    %v4006 = vpack.c.b16 %v3970, %v3966
    %v4007 = vpack.c.b16 %v3971, %v3967
    %v4008 = vpack.c.b16 %v3976, %v3972
    %v4009 = vpack.c.b16 %v3977, %v3973
    %v4010 = vpack.c.b16 %v3978, %v3974
    %v4011 = vpack.c.b16 %v3979, %v3975
    %4044 = vmatpush.bf16.msra.mxu0 %v4008
    %4045 = vmatpush.bf16.msra.mxu0 %v4004
    %4046 = vmatpush.bf16.msra.mxu0 %v4000
    %4047 = vmatpush.bf16.msra.mxu0 %v3996
    %4048 = vmatpush.bf16.msra.mxu0 %v3992
    %4049 = vmatpush.bf16.msra.mxu0 %v3988
    %4050 = vmatpush.bf16.msra.mxu0 %v3984
    %4051 = vmatpush.bf16.msra.mxu0 %v3980
    %4052 = vmatmul.bf16.gmra.mxu0 %v137
    %v4053 = vpop.f32.mrf.mxu0
    %v4054 = vadd.f32 %v3876, %v4053
    %v4055 = vpop.f32.mrf.mxu0
    %4056 = vdwg.mxu0
    %4057 = vmatpush.bf16.msra.mxu0 %v4009
    %4058 = vmatpush.bf16.msra.mxu0 %v4005
    %4059 = vmatpush.bf16.msra.mxu0 %v4001
    %4060 = vmatpush.bf16.msra.mxu0 %v3997
    %4061 = vmatpush.bf16.msra.mxu0 %v3993
    %4062 = vmatpush.bf16.msra.mxu0 %v3989
    %4063 = vmatpush.bf16.msra.mxu0 %v3985
    %4064 = vmatpush.bf16.msra.mxu0 %v3981
    %4065 = vmatmul.bf16.gmra.mxu0 %v137
    %v4066 = vpop.f32.mrf.mxu0
    %v4067 = vadd.f32 %v3877, %v4066
    %v4068 = vpop.f32.mrf.mxu0
    %4069 = vdwg.mxu0
    %4070 = vmatpush.bf16.msra.mxu0 %v4010
    %4071 = vmatpush.bf16.msra.mxu0 %v4006
    %4072 = vmatpush.bf16.msra.mxu0 %v4002
    %4073 = vmatpush.bf16.msra.mxu0 %v3998
    %4074 = vmatpush.bf16.msra.mxu0 %v3994
    %4075 = vmatpush.bf16.msra.mxu0 %v3990
    %4076 = vmatpush.bf16.msra.mxu0 %v3986
    %4077 = vmatpush.bf16.msra.mxu0 %v3982
    %4078 = vmatmul.bf16.gmra.mxu0 %v137
    %v4079 = vpop.f32.mrf.mxu0
    %v4080 = vadd.f32 %v3878, %v4079
    %v4081 = vpop.f32.mrf.mxu0
    %4082 = vdwg.mxu0
    %4083 = vmatpush.bf16.msra.mxu0 %v4011
    %4084 = vmatpush.bf16.msra.mxu0 %v4007
    %4085 = vmatpush.bf16.msra.mxu0 %v4003
    %4086 = vmatpush.bf16.msra.mxu0 %v3999
    %4087 = vmatpush.bf16.msra.mxu0 %v3995
    %4088 = vmatpush.bf16.msra.mxu0 %v3991
    %4089 = vmatpush.bf16.msra.mxu0 %v3987
    %4090 = vmatpush.bf16.msra.mxu0 %v3983
    %4091 = vmatmul.bf16.gmra.mxu0 %v137
    %v4092 = vpop.f32.mrf.mxu0
    %v4093 = vadd.f32 %v3879, %v4092
    %v4094 = vpop.f32.mrf.mxu0
    %4095 = vdwg.mxu0
    %v4096 = vsub.f32 0.0, %v4054
    %v4097 = vsub.f32 0.0, %v4067
    %v4098 = vsub.f32 0.0, %v4080
    %v4099 = vsub.f32 0.0, %v4093
    %v4100 = vmul.f32 %v4096, 1.442695
    %v4101 = vpow.pop %v4100
    %v4102 = vmul.f32 %v4097, 1.442695
    %v4103 = vpow.pop %v4102
    %v4104 = vmul.f32 %v4098, 1.442695
    %v4105 = vpow.pop %v4104
    %v4106 = vmul.f32 %v4099, 1.442695
    %v4107 = vpow.pop %v4106
    %v4108 = vadd.f32 %v4101, 1.0
    %v4109 = vadd.f32 %v4103, 1.0
    %v4110 = vadd.f32 %v4105, 1.0
    %v4111 = vadd.f32 %v4107, 1.0
    %v4112 = vrcp.pop %v4108
    %v4113 = vrcp.pop %v4109
    %v4114 = vrcp.pop %v4110
    %v4115 = vrcp.pop %v4111
    %v4116 = vmul.f32 %v4054, %v4112
    %v4117 = vmul.f32 %v4067, %v4113
    %v4118 = vmul.f32 %v4080, %v4114
    %v4119 = vmul.f32 %v4093, %v4115
    %s4120 = smul.u32 4, 64
    %s4121 = smul.u32 %s4120, 5
    %s4122 = sshll.u32 %s4121, 4
    %4123 = dma.done [#allocation3], %s4122
    %v4124 = vpack.c.bf16 %v4116, %v4116
    %v4125 = vpack.c.bf16 %v4117, %v4117
    %v4126 = vpack.c.bf16 %v4118, %v4118
    %v4127 = vpack.c.bf16 %v4119, %v4119
    %v4128 = vld [vmem:[#allocation2] sm:$0xff]
    %v4129 = vld [vmem:[#allocation2 + $0x8] sm:$0xff]
    %v4130 = vld [vmem:[#allocation2 + $0x14] sm:$0xff]
    %v4131 = vld [vmem:[#allocation2 + $0x1c] sm:$0xff]
    %v4132 = vld [vmem:[#allocation2 + $0x28] sm:$0xff]
    %v4133 = vld [vmem:[#allocation2 + $0x30] sm:$0xff]
    %v4134 = vld [vmem:[#allocation2 + $0x3c] sm:$0xff]
    %v4135 = vld [vmem:[#allocation2 + $0x44] sm:$0xff]
    %v4136 = vld [vmem:[#allocation2 + $0x50] sm:$0xff]
    %v4137 = vld [vmem:[#allocation2 + $0x58] sm:$0xff]
    %v4138 = vld [vmem:[#allocation2 + $0x64] sm:$0xff]
    %v4139 = vld [vmem:[#allocation2 + $0x6c] sm:$0xff]
    %v4140 = vld [vmem:[#allocation2 + $0x78] sm:$0xff]
    %v4141 = vld [vmem:[#allocation2 + $0x80] sm:$0xff]
    %v4142 = vld [vmem:[#allocation2 + $0x8c] sm:$0xff]
    %v4143 = vld [vmem:[#allocation2 + $0x94] sm:$0xff]
    %v4144 = vld [vmem:[#allocation2 + $0xa0] sm:$0xff]
    %v4145 = vld [vmem:[#allocation2 + $0xa8] sm:$0xff]
    %v4146 = vld [vmem:[#allocation2 + $0xb4] sm:$0xff]
    %v4147 = vld [vmem:[#allocation2 + $0xbc] sm:$0xff]
    %v4148 = vld [vmem:[#allocation2 + $0xc8] sm:$0xff]
    %v4149 = vld [vmem:[#allocation2 + $0xd0] sm:$0xff]
    %v4150 = vld [vmem:[#allocation2 + $0xdc] sm:$0xff]
    %v4151 = vld [vmem:[#allocation2 + $0xe4] sm:$0xff]
    %v4152 = vld [vmem:[#allocation2 + $0xf0] sm:$0xff]
    %v4153 = vld [vmem:[#allocation2 + $0xf8] sm:$0xff]
    %v4154 = vld [vmem:[#allocation2 + $0x104] sm:$0xff]
    %v4155 = vld [vmem:[#allocation2 + $0x10c] sm:$0xff]
    %v4156 = vld [vmem:[#allocation2 + $0x118] sm:$0xff]
    %v4157 = vld [vmem:[#allocation2 + $0x120] sm:$0xff]
    %v4158 = vld [vmem:[#allocation2 + $0x12c] sm:$0xff]
    %v4159 = vld [vmem:[#allocation2 + $0x134] sm:$0xff]
    %v4160 = vld [vmem:[#allocation2 + $0x140] sm:$0xff]
    %v4161 = vld [vmem:[#allocation2 + $0x148] sm:$0xff]
    %v4162 = vld [vmem:[#allocation2 + $0x154] sm:$0xff]
    %v4163 = vld [vmem:[#allocation2 + $0x15c] sm:$0xff]
    %v4164 = vld [vmem:[#allocation2 + $0x168] sm:$0xff]
    %v4165 = vld [vmem:[#allocation2 + $0x170] sm:$0xff]
    %v4166 = vld [vmem:[#allocation2 + $0x17c] sm:$0xff]
    %v4167 = vld [vmem:[#allocation2 + $0x184] sm:$0xff]
    %v4168 = vld [vmem:[#allocation2 + $0x190] sm:$0xff]
    %v4169 = vld [vmem:[#allocation2 + $0x198] sm:$0xff]
    %v4170 = vld [vmem:[#allocation2 + $0x1a4] sm:$0xff]
    %v4171 = vld [vmem:[#allocation2 + $0x1ac] sm:$0xff]
    %v4172 = vld [vmem:[#allocation2 + $0x1b8] sm:$0xff]
    %v4173 = vld [vmem:[#allocation2 + $0x1c0] sm:$0xff]
    %v4174 = vld [vmem:[#allocation2 + $0x1cc] sm:$0xff]
    %v4175 = vld [vmem:[#allocation2 + $0x1d4] sm:$0xff]
    %v4176 = vld [vmem:[#allocation2 + $0x1e0] sm:$0xff]
    %v4177 = vld [vmem:[#allocation2 + $0x1e8] sm:$0xff]
    %v4178 = vld [vmem:[#allocation2 + $0x1f4] sm:$0xff]
    %v4179 = vld [vmem:[#allocation2 + $0x1fc] sm:$0xff]
    %v4180 = vld [vmem:[#allocation2 + $0x208] sm:$0xff]
    %v4181 = vld [vmem:[#allocation2 + $0x210] sm:$0xff]
    %v4182 = vld [vmem:[#allocation2 + $0x21c] sm:$0xff]
    %v4183 = vld [vmem:[#allocation2 + $0x224] sm:$0xff]
    %v4184 = vld [vmem:[#allocation2 + $0x230] sm:$0xff]
    %v4185 = vld [vmem:[#allocation2 + $0x238] sm:$0xff]
    %v4186 = vld [vmem:[#allocation2 + $0x244] sm:$0xff]
    %v4187 = vld [vmem:[#allocation2 + $0x24c] sm:$0xff]
    %v4188 = vld [vmem:[#allocation2 + $0x258] sm:$0xff]
    %v4189 = vld [vmem:[#allocation2 + $0x260] sm:$0xff]
    %v4190 = vld [vmem:[#allocation2 + $0x26c] sm:$0xff]
    %v4191 = vld [vmem:[#allocation2 + $0x274] sm:$0xff]
    %v4192 = vld [vmem:[#allocation2 + $0x280] sm:$0xff]
    %v4193 = vld [vmem:[#allocation2 + $0x288] sm:$0xff]
    %v4194 = vld [vmem:[#allocation2 + $0x294] sm:$0xff]
    %v4195 = vld [vmem:[#allocation2 + $0x29c] sm:$0xff]
    %v4196 = vld [vmem:[#allocation2 + $0x2a8] sm:$0xff]
    %v4197 = vld [vmem:[#allocation2 + $0x2b0] sm:$0xff]
    %v4198 = vld [vmem:[#allocation2 + $0x2bc] sm:$0xff]
    %v4199 = vld [vmem:[#allocation2 + $0x2c4] sm:$0xff]
    %v4200 = vld [vmem:[#allocation2 + $0x2d0] sm:$0xff]
    %v4201 = vld [vmem:[#allocation2 + $0x2d8] sm:$0xff]
    %v4202 = vld [vmem:[#allocation2 + $0x2e4] sm:$0xff]
    %v4203 = vld [vmem:[#allocation2 + $0x2ec] sm:$0xff]
    %v4204 = vld [vmem:[#allocation2 + $0x2f8] sm:$0xff]
    %v4205 = vld [vmem:[#allocation2 + $0x300] sm:$0xff]
    %v4206 = vld [vmem:[#allocation2 + $0x30c] sm:$0xff]
    %v4207 = vld [vmem:[#allocation2 + $0x314] sm:$0xff]
    %v4208 = vld [vmem:[#allocation2 + $0x320] sm:$0xff]
    %v4209 = vld [vmem:[#allocation2 + $0x328] sm:$0xff]
    %v4210 = vld [vmem:[#allocation2 + $0x334] sm:$0xff]
    %v4211 = vld [vmem:[#allocation2 + $0x33c] sm:$0xff]
    %v4212 = vld [vmem:[#allocation2 + $0x348] sm:$0xff]
    %v4213 = vld [vmem:[#allocation2 + $0x350] sm:$0xff]
    %v4214 = vld [vmem:[#allocation2 + $0x35c] sm:$0xff]
    %v4215 = vld [vmem:[#allocation2 + $0x364] sm:$0xff]
    %v4216 = vld [vmem:[#allocation2 + $0x370] sm:$0xff]
    %v4217 = vld [vmem:[#allocation2 + $0x378] sm:$0xff]
    %v4218 = vld [vmem:[#allocation2 + $0x384] sm:$0xff]
    %v4219 = vld [vmem:[#allocation2 + $0x38c] sm:$0xff]
    %v4220 = vld [vmem:[#allocation2 + $0x398] sm:$0xff]
    %v4221 = vld [vmem:[#allocation2 + $0x3a0] sm:$0xff]
    %v4222 = vld [vmem:[#allocation2 + $0x3ac] sm:$0xff]
    %v4223 = vld [vmem:[#allocation2 + $0x3b4] sm:$0xff]
    %v4224 = vld [vmem:[#allocation2 + $0x3c0] sm:$0xff]
    %v4225 = vld [vmem:[#allocation2 + $0x3c8] sm:$0xff]
    %v4226 = vld [vmem:[#allocation2 + $0x3d4] sm:$0xff]
    %v4227 = vld [vmem:[#allocation2 + $0x3dc] sm:$0xff]
    %v4228 = vld [vmem:[#allocation2 + $0x3e8] sm:$0xff]
    %v4229 = vld [vmem:[#allocation2 + $0x3f0] sm:$0xff]
    %v4230 = vld [vmem:[#allocation2 + $0x3fc] sm:$0xff]
    %v4231 = vld [vmem:[#allocation2 + $0x404] sm:$0xff]
    %v4232 = vld [vmem:[#allocation2 + $0x410] sm:$0xff]
    %v4233 = vld [vmem:[#allocation2 + $0x418] sm:$0xff]
    %v4234 = vld [vmem:[#allocation2 + $0x424] sm:$0xff]
    %v4235 = vld [vmem:[#allocation2 + $0x42c] sm:$0xff]
    %v4236 = vld [vmem:[#allocation2 + $0x438] sm:$0xff]
    %v4237 = vld [vmem:[#allocation2 + $0x440] sm:$0xff]
    %v4238 = vld [vmem:[#allocation2 + $0x44c] sm:$0xff]
    %v4239 = vld [vmem:[#allocation2 + $0x454] sm:$0xff]
    %v4240 = vld [vmem:[#allocation2 + $0x460] sm:$0xff]
    %v4241 = vld [vmem:[#allocation2 + $0x468] sm:$0xff]
    %v4242 = vld [vmem:[#allocation2 + $0x474] sm:$0xff]
    %v4243 = vld [vmem:[#allocation2 + $0x47c] sm:$0xff]
    %v4244 = vld [vmem:[#allocation2 + $0x488] sm:$0xff]
    %v4245 = vld [vmem:[#allocation2 + $0x490] sm:$0xff]
    %v4246 = vld [vmem:[#allocation2 + $0x49c] sm:$0xff]
    %v4247 = vld [vmem:[#allocation2 + $0x4a4] sm:$0xff]
    %v4248 = vld [vmem:[#allocation2 + $0x4b0] sm:$0xff]
    %v4249 = vld [vmem:[#allocation2 + $0x4b8] sm:$0xff]
    %v4250 = vld [vmem:[#allocation2 + $0x4c4] sm:$0xff]
    %v4251 = vld [vmem:[#allocation2 + $0x4cc] sm:$0xff]
    %v4252 = vld [vmem:[#allocation2 + $0x4d8] sm:$0xff]
    %v4253 = vld [vmem:[#allocation2 + $0x4e0] sm:$0xff]
    %v4254 = vld [vmem:[#allocation2 + $0x4ec] sm:$0xff]
    %v4255 = vld [vmem:[#allocation2 + $0x4f4] sm:$0xff]
    %v4256 = vld [vmem:[%s4 + $0xc] sm:$0xff]
    %v4257 = vld [vmem:[%s4 + $0x14] sm:$0xff]
    %v4258 = vld [vmem:[%s4 + $0x28] sm:$0xff]
    %v4259 = vld [vmem:[%s4 + $0x30] sm:$0xff]
    %v4264 = vunpack.c.l.b16 %v4256
    %v4265 = vunpack.c.h.b16 %v4256
    %v4266 = vunpack.c.l.b16 %v4257
    %v4267 = vunpack.c.h.b16 %v4257
    %v4268 = vunpack.c.l.b16 %v4258
    %v4269 = vunpack.c.h.b16 %v4258
    %v4270 = vunpack.c.l.b16 %v4259
    %v4271 = vunpack.c.h.b16 %v4259
    %v4272 = vpack.c.b16 %v4268, %v4264
    %v4273 = vpack.c.b16 %v4269, %v4265
    %v4274 = vpack.c.b16 %v4270, %v4266
    %v4275 = vpack.c.b16 %v4271, %v4267
    %4280 = vmatpush.bf16.msra.mxu0 0
    %4281 = vmatpush.bf16.msra.mxu0 0
    %4282 = vmatpush.bf16.msra.mxu0 0
    %4283 = vmatpush.bf16.msra.mxu0 0
    %4284 = vmatpush.bf16.msra.mxu0 0
    %4285 = vmatpush.bf16.msra.mxu0 0
    %4286 = vmatpush.bf16.msra.mxu0 0
    %4287 = vmatpush.bf16.msra.mxu0 %v4272
    %4288 = vmatmul.bf16.gmra.mxu0 %v2164
    %v4289 = vpop.f32.mrf.mxu0
    %v4290 = vadd.f32 0.0, %v4289
    %v4291 = vpop.f32.mrf.mxu0
    %4292 = vdwg.mxu0
    %4293 = vmatpush.bf16.msra.mxu0 0
    %4294 = vmatpush.bf16.msra.mxu0 0
    %4295 = vmatpush.bf16.msra.mxu0 0
    %4296 = vmatpush.bf16.msra.mxu0 0
    %4297 = vmatpush.bf16.msra.mxu0 0
    %4298 = vmatpush.bf16.msra.mxu0 0
    %4299 = vmatpush.bf16.msra.mxu0 0
    %4300 = vmatpush.bf16.msra.mxu0 %v4273
    %4301 = vmatmul.bf16.gmra.mxu0 %v2164
    %v4302 = vpop.f32.mrf.mxu0
    %v4303 = vadd.f32 0.0, %v4302
    %v4304 = vpop.f32.mrf.mxu0
    %4305 = vdwg.mxu0
    %4306 = vmatpush.bf16.msra.mxu0 0
    %4307 = vmatpush.bf16.msra.mxu0 0
    %4308 = vmatpush.bf16.msra.mxu0 0
    %4309 = vmatpush.bf16.msra.mxu0 0
    %4310 = vmatpush.bf16.msra.mxu0 0
    %4311 = vmatpush.bf16.msra.mxu0 0
    %4312 = vmatpush.bf16.msra.mxu0 0
    %4313 = vmatpush.bf16.msra.mxu0 %v4274
    %4314 = vmatmul.bf16.gmra.mxu0 %v2164
    %v4315 = vpop.f32.mrf.mxu0
    %v4316 = vadd.f32 0.0, %v4315
    %v4317 = vpop.f32.mrf.mxu0
    %4318 = vdwg.mxu0
    %4319 = vmatpush.bf16.msra.mxu0 0
    %4320 = vmatpush.bf16.msra.mxu0 0
    %4321 = vmatpush.bf16.msra.mxu0 0
    %4322 = vmatpush.bf16.msra.mxu0 0
    %4323 = vmatpush.bf16.msra.mxu0 0
    %4324 = vmatpush.bf16.msra.mxu0 0
    %4325 = vmatpush.bf16.msra.mxu0 0
    %4326 = vmatpush.bf16.msra.mxu0 %v4275
    %4327 = vmatmul.bf16.gmra.mxu0 %v2164
    %v4328 = vpop.f32.mrf.mxu0
    %v4329 = vadd.f32 0.0, %v4328
    %v4330 = vpop.f32.mrf.mxu0
    %4331 = vdwg.mxu0
    %v4460 = vunpack.c.l.b16 %v4128
    %v4461 = vunpack.c.h.b16 %v4128
    %v4462 = vunpack.c.l.b16 %v4129
    %v4463 = vunpack.c.h.b16 %v4129
    %v4464 = vunpack.c.l.b16 %v4130
    %v4465 = vunpack.c.h.b16 %v4130
    %v4466 = vunpack.c.l.b16 %v4131
    %v4467 = vunpack.c.h.b16 %v4131
    %v4468 = vunpack.c.l.b16 %v4132
    %v4469 = vunpack.c.h.b16 %v4132
    %v4470 = vunpack.c.l.b16 %v4133
    %v4471 = vunpack.c.h.b16 %v4133
    %v4472 = vunpack.c.l.b16 %v4134
    %v4473 = vunpack.c.h.b16 %v4134
    %v4474 = vunpack.c.l.b16 %v4135
    %v4475 = vunpack.c.h.b16 %v4135
    %v4476 = vunpack.c.l.b16 %v4136
    %v4477 = vunpack.c.h.b16 %v4136
    %v4478 = vunpack.c.l.b16 %v4137
    %v4479 = vunpack.c.h.b16 %v4137
    %v4480 = vunpack.c.l.b16 %v4138
    %v4481 = vunpack.c.h.b16 %v4138
    %v4482 = vunpack.c.l.b16 %v4139
    %v4483 = vunpack.c.h.b16 %v4139
    %v4484 = vunpack.c.l.b16 %v4140
    %v4485 = vunpack.c.h.b16 %v4140
    %v4486 = vunpack.c.l.b16 %v4141
    %v4487 = vunpack.c.h.b16 %v4141
    %v4488 = vunpack.c.l.b16 %v4142
    %v4489 = vunpack.c.h.b16 %v4142
    %v4490 = vunpack.c.l.b16 %v4143
    %v4491 = vunpack.c.h.b16 %v4143
    %v4492 = vunpack.c.l.b16 %v4144
    %v4493 = vunpack.c.h.b16 %v4144
    %v4494 = vunpack.c.l.b16 %v4145
    %v4495 = vunpack.c.h.b16 %v4145
    %v4496 = vunpack.c.l.b16 %v4146
    %v4497 = vunpack.c.h.b16 %v4146
    %v4498 = vunpack.c.l.b16 %v4147
    %v4499 = vunpack.c.h.b16 %v4147
    %v4500 = vunpack.c.l.b16 %v4148
    %v4501 = vunpack.c.h.b16 %v4148
    %v4502 = vunpack.c.l.b16 %v4149
    %v4503 = vunpack.c.h.b16 %v4149
    %v4504 = vunpack.c.l.b16 %v4150
    %v4505 = vunpack.c.h.b16 %v4150
    %v4506 = vunpack.c.l.b16 %v4151
    %v4507 = vunpack.c.h.b16 %v4151
    %v4508 = vunpack.c.l.b16 %v4152
    %v4509 = vunpack.c.h.b16 %v4152
    %v4510 = vunpack.c.l.b16 %v4153
    %v4511 = vunpack.c.h.b16 %v4153
    %v4512 = vunpack.c.l.b16 %v4154
    %v4513 = vunpack.c.h.b16 %v4154
    %v4514 = vunpack.c.l.b16 %v4155
    %v4515 = vunpack.c.h.b16 %v4155
    %v4516 = vunpack.c.l.b16 %v4156
    %v4517 = vunpack.c.h.b16 %v4156
    %v4518 = vunpack.c.l.b16 %v4157
    %v4519 = vunpack.c.h.b16 %v4157
    %v4520 = vunpack.c.l.b16 %v4158
    %v4521 = vunpack.c.h.b16 %v4158
    %v4522 = vunpack.c.l.b16 %v4159
    %v4523 = vunpack.c.h.b16 %v4159
    %v4524 = vunpack.c.l.b16 %v4160
    %v4525 = vunpack.c.h.b16 %v4160
    %v4526 = vunpack.c.l.b16 %v4161
    %v4527 = vunpack.c.h.b16 %v4161
    %v4528 = vunpack.c.l.b16 %v4162
    %v4529 = vunpack.c.h.b16 %v4162
    %v4530 = vunpack.c.l.b16 %v4163
    %v4531 = vunpack.c.h.b16 %v4163
    %v4532 = vunpack.c.l.b16 %v4164
    %v4533 = vunpack.c.h.b16 %v4164
    %v4534 = vunpack.c.l.b16 %v4165
    %v4535 = vunpack.c.h.b16 %v4165
    %v4536 = vunpack.c.l.b16 %v4166
    %v4537 = vunpack.c.h.b16 %v4166
    %v4538 = vunpack.c.l.b16 %v4167
    %v4539 = vunpack.c.h.b16 %v4167
    %v4540 = vunpack.c.l.b16 %v4168
    %v4541 = vunpack.c.h.b16 %v4168
    %v4542 = vunpack.c.l.b16 %v4169
    %v4543 = vunpack.c.h.b16 %v4169
    %v4544 = vunpack.c.l.b16 %v4170
    %v4545 = vunpack.c.h.b16 %v4170
    %v4546 = vunpack.c.l.b16 %v4171
    %v4547 = vunpack.c.h.b16 %v4171
    %v4548 = vunpack.c.l.b16 %v4172
    %v4549 = vunpack.c.h.b16 %v4172
    %v4550 = vunpack.c.l.b16 %v4173
    %v4551 = vunpack.c.h.b16 %v4173
    %v4552 = vunpack.c.l.b16 %v4174
    %v4553 = vunpack.c.h.b16 %v4174
    %v4554 = vunpack.c.l.b16 %v4175
    %v4555 = vunpack.c.h.b16 %v4175
    %v4556 = vunpack.c.l.b16 %v4176
    %v4557 = vunpack.c.h.b16 %v4176
    %v4558 = vunpack.c.l.b16 %v4177
    %v4559 = vunpack.c.h.b16 %v4177
    %v4560 = vunpack.c.l.b16 %v4178
    %v4561 = vunpack.c.h.b16 %v4178
    %v4562 = vunpack.c.l.b16 %v4179
    %v4563 = vunpack.c.h.b16 %v4179
    %v4564 = vunpack.c.l.b16 %v4180
    %v4565 = vunpack.c.h.b16 %v4180
    %v4566 = vunpack.c.l.b16 %v4181
    %v4567 = vunpack.c.h.b16 %v4181
    %v4568 = vunpack.c.l.b16 %v4182
    %v4569 = vunpack.c.h.b16 %v4182
    %v4570 = vunpack.c.l.b16 %v4183
    %v4571 = vunpack.c.h.b16 %v4183
    %v4572 = vunpack.c.l.b16 %v4184
    %v4573 = vunpack.c.h.b16 %v4184
    %v4574 = vunpack.c.l.b16 %v4185
    %v4575 = vunpack.c.h.b16 %v4185
    %v4576 = vunpack.c.l.b16 %v4186
    %v4577 = vunpack.c.h.b16 %v4186
    %v4578 = vunpack.c.l.b16 %v4187
    %v4579 = vunpack.c.h.b16 %v4187
    %v4580 = vunpack.c.l.b16 %v4188
    %v4581 = vunpack.c.h.b16 %v4188
    %v4582 = vunpack.c.l.b16 %v4189
    %v4583 = vunpack.c.h.b16 %v4189
    %v4584 = vunpack.c.l.b16 %v4190
    %v4585 = vunpack.c.h.b16 %v4190
    %v4586 = vunpack.c.l.b16 %v4191
    %v4587 = vunpack.c.h.b16 %v4191
    %v4588 = vunpack.c.l.b16 %v4192
    %v4589 = vunpack.c.h.b16 %v4192
    %v4590 = vunpack.c.l.b16 %v4193
    %v4591 = vunpack.c.h.b16 %v4193
    %v4592 = vunpack.c.l.b16 %v4194
    %v4593 = vunpack.c.h.b16 %v4194
    %v4594 = vunpack.c.l.b16 %v4195
    %v4595 = vunpack.c.h.b16 %v4195
    %v4596 = vunpack.c.l.b16 %v4196
    %v4597 = vunpack.c.h.b16 %v4196
    %v4598 = vunpack.c.l.b16 %v4197
    %v4599 = vunpack.c.h.b16 %v4197
    %v4600 = vunpack.c.l.b16 %v4198
    %v4601 = vunpack.c.h.b16 %v4198
    %v4602 = vunpack.c.l.b16 %v4199
    %v4603 = vunpack.c.h.b16 %v4199
    %v4604 = vunpack.c.l.b16 %v4200
    %v4605 = vunpack.c.h.b16 %v4200
    %v4606 = vunpack.c.l.b16 %v4201
    %v4607 = vunpack.c.h.b16 %v4201
    %v4608 = vunpack.c.l.b16 %v4202
    %v4609 = vunpack.c.h.b16 %v4202
    %v4610 = vunpack.c.l.b16 %v4203
    %v4611 = vunpack.c.h.b16 %v4203
    %v4612 = vunpack.c.l.b16 %v4204
    %v4613 = vunpack.c.h.b16 %v4204
    %v4614 = vunpack.c.l.b16 %v4205
    %v4615 = vunpack.c.h.b16 %v4205
    %v4616 = vunpack.c.l.b16 %v4206
    %v4617 = vunpack.c.h.b16 %v4206
    %v4618 = vunpack.c.l.b16 %v4207
    %v4619 = vunpack.c.h.b16 %v4207
    %v4620 = vunpack.c.l.b16 %v4208
    %v4621 = vunpack.c.h.b16 %v4208
    %v4622 = vunpack.c.l.b16 %v4209
    %v4623 = vunpack.c.h.b16 %v4209
    %v4624 = vunpack.c.l.b16 %v4210
    %v4625 = vunpack.c.h.b16 %v4210
    %v4626 = vunpack.c.l.b16 %v4211
    %v4627 = vunpack.c.h.b16 %v4211
    %v4628 = vunpack.c.l.b16 %v4212
    %v4629 = vunpack.c.h.b16 %v4212
    %v4630 = vunpack.c.l.b16 %v4213
    %v4631 = vunpack.c.h.b16 %v4213
    %v4632 = vunpack.c.l.b16 %v4214
    %v4633 = vunpack.c.h.b16 %v4214
    %v4634 = vunpack.c.l.b16 %v4215
    %v4635 = vunpack.c.h.b16 %v4215
    %v4636 = vunpack.c.l.b16 %v4216
    %v4637 = vunpack.c.h.b16 %v4216
    %v4638 = vunpack.c.l.b16 %v4217
    %v4639 = vunpack.c.h.b16 %v4217
    %v4640 = vunpack.c.l.b16 %v4218
    %v4641 = vunpack.c.h.b16 %v4218
    %v4642 = vunpack.c.l.b16 %v4219
    %v4643 = vunpack.c.h.b16 %v4219
    %v4644 = vunpack.c.l.b16 %v4220
    %v4645 = vunpack.c.h.b16 %v4220
    %v4646 = vunpack.c.l.b16 %v4221
    %v4647 = vunpack.c.h.b16 %v4221
    %v4648 = vunpack.c.l.b16 %v4222
    %v4649 = vunpack.c.h.b16 %v4222
    %v4650 = vunpack.c.l.b16 %v4223
    %v4651 = vunpack.c.h.b16 %v4223
    %v4652 = vunpack.c.l.b16 %v4224
    %v4653 = vunpack.c.h.b16 %v4224
    %v4654 = vunpack.c.l.b16 %v4225
    %v4655 = vunpack.c.h.b16 %v4225
    %v4656 = vunpack.c.l.b16 %v4226
    %v4657 = vunpack.c.h.b16 %v4226
    %v4658 = vunpack.c.l.b16 %v4227
    %v4659 = vunpack.c.h.b16 %v4227
    %v4660 = vunpack.c.l.b16 %v4228
    %v4661 = vunpack.c.h.b16 %v4228
    %v4662 = vunpack.c.l.b16 %v4229
    %v4663 = vunpack.c.h.b16 %v4229
    %v4664 = vunpack.c.l.b16 %v4230
    %v4665 = vunpack.c.h.b16 %v4230
    %v4666 = vunpack.c.l.b16 %v4231
    %v4667 = vunpack.c.h.b16 %v4231
    %v4668 = vunpack.c.l.b16 %v4232
    %v4669 = vunpack.c.h.b16 %v4232
    %v4670 = vunpack.c.l.b16 %v4233
    %v4671 = vunpack.c.h.b16 %v4233
    %v4672 = vunpack.c.l.b16 %v4234
    %v4673 = vunpack.c.h.b16 %v4234
    %v4674 = vunpack.c.l.b16 %v4235
    %v4675 = vunpack.c.h.b16 %v4235
    %v4676 = vunpack.c.l.b16 %v4236
    %v4677 = vunpack.c.h.b16 %v4236
    %v4678 = vunpack.c.l.b16 %v4237
    %v4679 = vunpack.c.h.b16 %v4237
    %v4680 = vunpack.c.l.b16 %v4238
    %v4681 = vunpack.c.h.b16 %v4238
    %v4682 = vunpack.c.l.b16 %v4239
    %v4683 = vunpack.c.h.b16 %v4239
    %v4684 = vunpack.c.l.b16 %v4240
    %v4685 = vunpack.c.h.b16 %v4240
    %v4686 = vunpack.c.l.b16 %v4241
    %v4687 = vunpack.c.h.b16 %v4241
    %v4688 = vunpack.c.l.b16 %v4242
    %v4689 = vunpack.c.h.b16 %v4242
    %v4690 = vunpack.c.l.b16 %v4243
    %v4691 = vunpack.c.h.b16 %v4243
    %v4692 = vunpack.c.l.b16 %v4244
    %v4693 = vunpack.c.h.b16 %v4244
    %v4694 = vunpack.c.l.b16 %v4245
    %v4695 = vunpack.c.h.b16 %v4245
    %v4696 = vunpack.c.l.b16 %v4246
    %v4697 = vunpack.c.h.b16 %v4246
    %v4698 = vunpack.c.l.b16 %v4247
    %v4699 = vunpack.c.h.b16 %v4247
    %v4700 = vunpack.c.l.b16 %v4248
    %v4701 = vunpack.c.h.b16 %v4248
    %v4702 = vunpack.c.l.b16 %v4249
    %v4703 = vunpack.c.h.b16 %v4249
    %v4704 = vunpack.c.l.b16 %v4250
    %v4705 = vunpack.c.h.b16 %v4250
    %v4706 = vunpack.c.l.b16 %v4251
    %v4707 = vunpack.c.h.b16 %v4251
    %v4708 = vunpack.c.l.b16 %v4252
    %v4709 = vunpack.c.h.b16 %v4252
    %v4710 = vunpack.c.l.b16 %v4253
    %v4711 = vunpack.c.h.b16 %v4253
    %v4712 = vunpack.c.l.b16 %v4254
    %v4713 = vunpack.c.h.b16 %v4254
    %v4714 = vunpack.c.l.b16 %v4255
    %v4715 = vunpack.c.h.b16 %v4255
    %v4716 = vpack.c.b16 %v4464, %v4460
    %v4717 = vpack.c.b16 %v4465, %v4461
    %v4718 = vpack.c.b16 %v4466, %v4462
    %v4719 = vpack.c.b16 %v4467, %v4463
    %v4720 = vpack.c.b16 %v4472, %v4468
    %v4721 = vpack.c.b16 %v4473, %v4469
    %v4722 = vpack.c.b16 %v4474, %v4470
    %v4723 = vpack.c.b16 %v4475, %v4471
    %v4724 = vpack.c.b16 %v4480, %v4476
    %v4725 = vpack.c.b16 %v4481, %v4477
    %v4726 = vpack.c.b16 %v4482, %v4478
    %v4727 = vpack.c.b16 %v4483, %v4479
    %v4728 = vpack.c.b16 %v4488, %v4484
    %v4729 = vpack.c.b16 %v4489, %v4485
    %v4730 = vpack.c.b16 %v4490, %v4486
    %v4731 = vpack.c.b16 %v4491, %v4487
    %v4732 = vpack.c.b16 %v4496, %v4492
    %v4733 = vpack.c.b16 %v4497, %v4493
    %v4734 = vpack.c.b16 %v4498, %v4494
    %v4735 = vpack.c.b16 %v4499, %v4495
    %v4736 = vpack.c.b16 %v4504, %v4500
    %v4737 = vpack.c.b16 %v4505, %v4501
    %v4738 = vpack.c.b16 %v4506, %v4502
    %v4739 = vpack.c.b16 %v4507, %v4503
    %v4740 = vpack.c.b16 %v4512, %v4508
    %v4741 = vpack.c.b16 %v4513, %v4509
    %v4742 = vpack.c.b16 %v4514, %v4510
    %v4743 = vpack.c.b16 %v4515, %v4511
    %v4744 = vpack.c.b16 %v4520, %v4516
    %v4745 = vpack.c.b16 %v4521, %v4517
    %v4746 = vpack.c.b16 %v4522, %v4518
    %v4747 = vpack.c.b16 %v4523, %v4519
    %v4748 = vpack.c.b16 %v4528, %v4524
    %v4749 = vpack.c.b16 %v4529, %v4525
    %v4750 = vpack.c.b16 %v4530, %v4526
    %v4751 = vpack.c.b16 %v4531, %v4527
    %v4752 = vpack.c.b16 %v4536, %v4532
    %v4753 = vpack.c.b16 %v4537, %v4533
    %v4754 = vpack.c.b16 %v4538, %v4534
    %v4755 = vpack.c.b16 %v4539, %v4535
    %v4756 = vpack.c.b16 %v4544, %v4540
    %v4757 = vpack.c.b16 %v4545, %v4541
    %v4758 = vpack.c.b16 %v4546, %v4542
    %v4759 = vpack.c.b16 %v4547, %v4543
    %v4760 = vpack.c.b16 %v4552, %v4548
    %v4761 = vpack.c.b16 %v4553, %v4549
    %v4762 = vpack.c.b16 %v4554, %v4550
    %v4763 = vpack.c.b16 %v4555, %v4551
    %v4764 = vpack.c.b16 %v4560, %v4556
    %v4765 = vpack.c.b16 %v4561, %v4557
    %v4766 = vpack.c.b16 %v4562, %v4558
    %v4767 = vpack.c.b16 %v4563, %v4559
    %v4768 = vpack.c.b16 %v4568, %v4564
    %v4769 = vpack.c.b16 %v4569, %v4565
    %v4770 = vpack.c.b16 %v4570, %v4566
    %v4771 = vpack.c.b16 %v4571, %v4567
    %v4772 = vpack.c.b16 %v4576, %v4572
    %v4773 = vpack.c.b16 %v4577, %v4573
    %v4774 = vpack.c.b16 %v4578, %v4574
    %v4775 = vpack.c.b16 %v4579, %v4575
    %v4776 = vpack.c.b16 %v4584, %v4580
    %v4777 = vpack.c.b16 %v4585, %v4581
    %v4778 = vpack.c.b16 %v4586, %v4582
    %v4779 = vpack.c.b16 %v4587, %v4583
    %v4780 = vpack.c.b16 %v4592, %v4588
    %v4781 = vpack.c.b16 %v4593, %v4589
    %v4782 = vpack.c.b16 %v4594, %v4590
    %v4783 = vpack.c.b16 %v4595, %v4591
    %v4784 = vpack.c.b16 %v4600, %v4596
    %v4785 = vpack.c.b16 %v4601, %v4597
    %v4786 = vpack.c.b16 %v4602, %v4598
    %v4787 = vpack.c.b16 %v4603, %v4599
    %v4788 = vpack.c.b16 %v4608, %v4604
    %v4789 = vpack.c.b16 %v4609, %v4605
    %v4790 = vpack.c.b16 %v4610, %v4606
    %v4791 = vpack.c.b16 %v4611, %v4607
    %v4792 = vpack.c.b16 %v4616, %v4612
    %v4793 = vpack.c.b16 %v4617, %v4613
    %v4794 = vpack.c.b16 %v4618, %v4614
    %v4795 = vpack.c.b16 %v4619, %v4615
    %v4796 = vpack.c.b16 %v4624, %v4620
    %v4797 = vpack.c.b16 %v4625, %v4621
    %v4798 = vpack.c.b16 %v4626, %v4622
    %v4799 = vpack.c.b16 %v4627, %v4623
    %v4800 = vpack.c.b16 %v4632, %v4628
    %v4801 = vpack.c.b16 %v4633, %v4629
    %v4802 = vpack.c.b16 %v4634, %v4630
    %v4803 = vpack.c.b16 %v4635, %v4631
    %v4804 = vpack.c.b16 %v4640, %v4636
    %v4805 = vpack.c.b16 %v4641, %v4637
    %v4806 = vpack.c.b16 %v4642, %v4638
    %v4807 = vpack.c.b16 %v4643, %v4639
    %v4808 = vpack.c.b16 %v4648, %v4644
    %v4809 = vpack.c.b16 %v4649, %v4645
    %v4810 = vpack.c.b16 %v4650, %v4646
    %v4811 = vpack.c.b16 %v4651, %v4647
    %v4812 = vpack.c.b16 %v4656, %v4652
    %v4813 = vpack.c.b16 %v4657, %v4653
    %v4814 = vpack.c.b16 %v4658, %v4654
    %v4815 = vpack.c.b16 %v4659, %v4655
    %v4816 = vpack.c.b16 %v4664, %v4660
    %v4817 = vpack.c.b16 %v4665, %v4661
    %v4818 = vpack.c.b16 %v4666, %v4662
    %v4819 = vpack.c.b16 %v4667, %v4663
    %v4820 = vpack.c.b16 %v4672, %v4668
    %v4821 = vpack.c.b16 %v4673, %v4669
    %v4822 = vpack.c.b16 %v4674, %v4670
    %v4823 = vpack.c.b16 %v4675, %v4671
    %v4824 = vpack.c.b16 %v4680, %v4676
    %v4825 = vpack.c.b16 %v4681, %v4677
    %v4826 = vpack.c.b16 %v4682, %v4678
    %v4827 = vpack.c.b16 %v4683, %v4679
    %v4828 = vpack.c.b16 %v4688, %v4684
    %v4829 = vpack.c.b16 %v4689, %v4685
    %v4830 = vpack.c.b16 %v4690, %v4686
    %v4831 = vpack.c.b16 %v4691, %v4687
    %v4832 = vpack.c.b16 %v4696, %v4692
    %v4833 = vpack.c.b16 %v4697, %v4693
    %v4834 = vpack.c.b16 %v4698, %v4694
    %v4835 = vpack.c.b16 %v4699, %v4695
    %v4836 = vpack.c.b16 %v4704, %v4700
    %v4837 = vpack.c.b16 %v4705, %v4701
    %v4838 = vpack.c.b16 %v4706, %v4702
    %v4839 = vpack.c.b16 %v4707, %v4703
    %v4840 = vpack.c.b16 %v4712, %v4708
    %v4841 = vpack.c.b16 %v4713, %v4709
    %v4842 = vpack.c.b16 %v4714, %v4710
    %v4843 = vpack.c.b16 %v4715, %v4711
    %4972 = vmatpush.bf16.msra.mxu0 %v4744
    %4973 = vmatpush.bf16.msra.mxu0 %v4740
    %4974 = vmatpush.bf16.msra.mxu0 %v4736
    %4975 = vmatpush.bf16.msra.mxu0 %v4732
    %4976 = vmatpush.bf16.msra.mxu0 %v4728
    %4977 = vmatpush.bf16.msra.mxu0 %v4724
    %4978 = vmatpush.bf16.msra.mxu0 %v4720
    %4979 = vmatpush.bf16.msra.mxu0 %v4716
    %4980 = vmatmul.bf16.gmra.mxu0 %v4124
    %v4981 = vpop.f32.mrf.mxu0
    %v4982 = vadd.f32 %v4290, %v4981
    %v4983 = vpop.f32.mrf.mxu0
    %4984 = vdwg.mxu0
    %4985 = vmatpush.bf16.msra.mxu0 %v4776
    %4986 = vmatpush.bf16.msra.mxu0 %v4772
    %4987 = vmatpush.bf16.msra.mxu0 %v4768
    %4988 = vmatpush.bf16.msra.mxu0 %v4764
    %4989 = vmatpush.bf16.msra.mxu0 %v4760
    %4990 = vmatpush.bf16.msra.mxu0 %v4756
    %4991 = vmatpush.bf16.msra.mxu0 %v4752
    %4992 = vmatpush.bf16.msra.mxu0 %v4748
    %4993 = vmatmul.bf16.gmra.mxu0 %v4125
    %v4994 = vpop.f32.mrf.mxu0
    %v4995 = vadd.f32 %v4982, %v4994
    %v4996 = vpop.f32.mrf.mxu0
    %4997 = vdwg.mxu0
    %4998 = vmatpush.bf16.msra.mxu0 %v4808
    %4999 = vmatpush.bf16.msra.mxu0 %v4804
    %5000 = vmatpush.bf16.msra.mxu0 %v4800
    %5001 = vmatpush.bf16.msra.mxu0 %v4796
    %5002 = vmatpush.bf16.msra.mxu0 %v4792
    %5003 = vmatpush.bf16.msra.mxu0 %v4788
    %5004 = vmatpush.bf16.msra.mxu0 %v4784
    %5005 = vmatpush.bf16.msra.mxu0 %v4780
    %5006 = vmatmul.bf16.gmra.mxu0 %v4126
    %v5007 = vpop.f32.mrf.mxu0
    %v5008 = vadd.f32 %v4995, %v5007
    %v5009 = vpop.f32.mrf.mxu0
    %5010 = vdwg.mxu0
    %5011 = vmatpush.bf16.msra.mxu0 %v4840
    %5012 = vmatpush.bf16.msra.mxu0 %v4836
    %5013 = vmatpush.bf16.msra.mxu0 %v4832
    %5014 = vmatpush.bf16.msra.mxu0 %v4828
    %5015 = vmatpush.bf16.msra.mxu0 %v4824
    %5016 = vmatpush.bf16.msra.mxu0 %v4820
    %5017 = vmatpush.bf16.msra.mxu0 %v4816
    %5018 = vmatpush.bf16.msra.mxu0 %v4812
    %5019 = vmatmul.bf16.gmra.mxu0 %v4127
    %v5020 = vpop.f32.mrf.mxu0
    %v5021 = vadd.f32 %v5008, %v5020
    %v5022 = vpop.f32.mrf.mxu0
    %5023 = vdwg.mxu0
    %5024 = vmatpush.bf16.msra.mxu0 %v4745
    %5025 = vmatpush.bf16.msra.mxu0 %v4741
    %5026 = vmatpush.bf16.msra.mxu0 %v4737
    %5027 = vmatpush.bf16.msra.mxu0 %v4733
    %5028 = vmatpush.bf16.msra.mxu0 %v4729
    %5029 = vmatpush.bf16.msra.mxu0 %v4725
    %5030 = vmatpush.bf16.msra.mxu0 %v4721
    %5031 = vmatpush.bf16.msra.mxu0 %v4717
    %5032 = vmatmul.bf16.gmra.mxu0 %v4124
    %v5033 = vpop.f32.mrf.mxu0
    %v5034 = vadd.f32 %v4303, %v5033
    %v5035 = vpop.f32.mrf.mxu0
    %5036 = vdwg.mxu0
    %5037 = vmatpush.bf16.msra.mxu0 %v4777
    %5038 = vmatpush.bf16.msra.mxu0 %v4773
    %5039 = vmatpush.bf16.msra.mxu0 %v4769
    %5040 = vmatpush.bf16.msra.mxu0 %v4765
    %5041 = vmatpush.bf16.msra.mxu0 %v4761
    %5042 = vmatpush.bf16.msra.mxu0 %v4757
    %5043 = vmatpush.bf16.msra.mxu0 %v4753
    %5044 = vmatpush.bf16.msra.mxu0 %v4749
    %5045 = vmatmul.bf16.gmra.mxu0 %v4125
    %v5046 = vpop.f32.mrf.mxu0
    %v5047 = vadd.f32 %v5034, %v5046
    %v5048 = vpop.f32.mrf.mxu0
    %5049 = vdwg.mxu0
    %5050 = vmatpush.bf16.msra.mxu0 %v4809
    %5051 = vmatpush.bf16.msra.mxu0 %v4805
    %5052 = vmatpush.bf16.msra.mxu0 %v4801
    %5053 = vmatpush.bf16.msra.mxu0 %v4797
    %5054 = vmatpush.bf16.msra.mxu0 %v4793
    %5055 = vmatpush.bf16.msra.mxu0 %v4789
    %5056 = vmatpush.bf16.msra.mxu0 %v4785
    %5057 = vmatpush.bf16.msra.mxu0 %v4781
    %5058 = vmatmul.bf16.gmra.mxu0 %v4126
    %v5059 = vpop.f32.mrf.mxu0
    %v5060 = vadd.f32 %v5047, %v5059
    %v5061 = vpop.f32.mrf.mxu0
    %5062 = vdwg.mxu0
    %5063 = vmatpush.bf16.msra.mxu0 %v4841
    %5064 = vmatpush.bf16.msra.mxu0 %v4837
    %5065 = vmatpush.bf16.msra.mxu0 %v4833
    %5066 = vmatpush.bf16.msra.mxu0 %v4829
    %5067 = vmatpush.bf16.msra.mxu0 %v4825
    %5068 = vmatpush.bf16.msra.mxu0 %v4821
    %5069 = vmatpush.bf16.msra.mxu0 %v4817
    %5070 = vmatpush.bf16.msra.mxu0 %v4813
    %5071 = vmatmul.bf16.gmra.mxu0 %v4127
    %v5072 = vpop.f32.mrf.mxu0
    %v5073 = vadd.f32 %v5060, %v5072
    %v5074 = vpop.f32.mrf.mxu0
    %5075 = vdwg.mxu0
    %5076 = vmatpush.bf16.msra.mxu0 %v4746
    %5077 = vmatpush.bf16.msra.mxu0 %v4742
    %5078 = vmatpush.bf16.msra.mxu0 %v4738
    %5079 = vmatpush.bf16.msra.mxu0 %v4734
    %5080 = vmatpush.bf16.msra.mxu0 %v4730
    %5081 = vmatpush.bf16.msra.mxu0 %v4726
    %5082 = vmatpush.bf16.msra.mxu0 %v4722
    %5083 = vmatpush.bf16.msra.mxu0 %v4718
    %5084 = vmatmul.bf16.gmra.mxu0 %v4124
    %v5085 = vpop.f32.mrf.mxu0
    %v5086 = vadd.f32 %v4316, %v5085
    %v5087 = vpop.f32.mrf.mxu0
    %5088 = vdwg.mxu0
    %5089 = vmatpush.bf16.msra.mxu0 %v4778
    %5090 = vmatpush.bf16.msra.mxu0 %v4774
    %5091 = vmatpush.bf16.msra.mxu0 %v4770
    %5092 = vmatpush.bf16.msra.mxu0 %v4766
    %5093 = vmatpush.bf16.msra.mxu0 %v4762
    %5094 = vmatpush.bf16.msra.mxu0 %v4758
    %5095 = vmatpush.bf16.msra.mxu0 %v4754
    %5096 = vmatpush.bf16.msra.mxu0 %v4750
    %5097 = vmatmul.bf16.gmra.mxu0 %v4125
    %v5098 = vpop.f32.mrf.mxu0
    %v5099 = vadd.f32 %v5086, %v5098
    %v5100 = vpop.f32.mrf.mxu0
    %5101 = vdwg.mxu0
    %5102 = vmatpush.bf16.msra.mxu0 %v4810
    %5103 = vmatpush.bf16.msra.mxu0 %v4806
    %5104 = vmatpush.bf16.msra.mxu0 %v4802
    %5105 = vmatpush.bf16.msra.mxu0 %v4798
    %5106 = vmatpush.bf16.msra.mxu0 %v4794
    %5107 = vmatpush.bf16.msra.mxu0 %v4790
    %5108 = vmatpush.bf16.msra.mxu0 %v4786
    %5109 = vmatpush.bf16.msra.mxu0 %v4782
    %5110 = vmatmul.bf16.gmra.mxu0 %v4126
    %v5111 = vpop.f32.mrf.mxu0
    %v5112 = vadd.f32 %v5099, %v5111
    %v5113 = vpop.f32.mrf.mxu0
    %5114 = vdwg.mxu0
    %5115 = vmatpush.bf16.msra.mxu0 %v4842
    %5116 = vmatpush.bf16.msra.mxu0 %v4838
    %5117 = vmatpush.bf16.msra.mxu0 %v4834
    %5118 = vmatpush.bf16.msra.mxu0 %v4830
    %5119 = vmatpush.bf16.msra.mxu0 %v4826
    %5120 = vmatpush.bf16.msra.mxu0 %v4822
    %5121 = vmatpush.bf16.msra.mxu0 %v4818
    %5122 = vmatpush.bf16.msra.mxu0 %v4814
    %5123 = vmatmul.bf16.gmra.mxu0 %v4127
    %v5124 = vpop.f32.mrf.mxu0
    %v5125 = vadd.f32 %v5112, %v5124
    %v5126 = vpop.f32.mrf.mxu0
    %5127 = vdwg.mxu0
    %5128 = vmatpush.bf16.msra.mxu0 %v4747
    %5129 = vmatpush.bf16.msra.mxu0 %v4743
    %5130 = vmatpush.bf16.msra.mxu0 %v4739
    %5131 = vmatpush.bf16.msra.mxu0 %v4735
    %5132 = vmatpush.bf16.msra.mxu0 %v4731
    %5133 = vmatpush.bf16.msra.mxu0 %v4727
    %5134 = vmatpush.bf16.msra.mxu0 %v4723
    %5135 = vmatpush.bf16.msra.mxu0 %v4719
    %5136 = vmatmul.bf16.gmra.mxu0 %v4124
    %v5137 = vpop.f32.mrf.mxu0
    %v5138 = vadd.f32 %v4329, %v5137
    %v5139 = vpop.f32.mrf.mxu0
    %5140 = vdwg.mxu0
    %5141 = vmatpush.bf16.msra.mxu0 %v4779
    %5142 = vmatpush.bf16.msra.mxu0 %v4775
    %5143 = vmatpush.bf16.msra.mxu0 %v4771
    %5144 = vmatpush.bf16.msra.mxu0 %v4767
    %5145 = vmatpush.bf16.msra.mxu0 %v4763
    %5146 = vmatpush.bf16.msra.mxu0 %v4759
    %5147 = vmatpush.bf16.msra.mxu0 %v4755
    %5148 = vmatpush.bf16.msra.mxu0 %v4751
    %5149 = vmatmul.bf16.gmra.mxu0 %v4125
    %v5150 = vpop.f32.mrf.mxu0
    %v5151 = vadd.f32 %v5138, %v5150
    %v5152 = vpop.f32.mrf.mxu0
    %5153 = vdwg.mxu0
    %5154 = vmatpush.bf16.msra.mxu0 %v4811
    %5155 = vmatpush.bf16.msra.mxu0 %v4807
    %5156 = vmatpush.bf16.msra.mxu0 %v4803
    %5157 = vmatpush.bf16.msra.mxu0 %v4799
    %5158 = vmatpush.bf16.msra.mxu0 %v4795
    %5159 = vmatpush.bf16.msra.mxu0 %v4791
    %5160 = vmatpush.bf16.msra.mxu0 %v4787
    %5161 = vmatpush.bf16.msra.mxu0 %v4783
    %5162 = vmatmul.bf16.gmra.mxu0 %v4126
    %v5163 = vpop.f32.mrf.mxu0
    %v5164 = vadd.f32 %v5151, %v5163
    %v5165 = vpop.f32.mrf.mxu0
    %5166 = vdwg.mxu0
    %5167 = vmatpush.bf16.msra.mxu0 %v4843
    %5168 = vmatpush.bf16.msra.mxu0 %v4839
    %5169 = vmatpush.bf16.msra.mxu0 %v4835
    %5170 = vmatpush.bf16.msra.mxu0 %v4831
    %5171 = vmatpush.bf16.msra.mxu0 %v4827
    %5172 = vmatpush.bf16.msra.mxu0 %v4823
    %5173 = vmatpush.bf16.msra.mxu0 %v4819
    %5174 = vmatpush.bf16.msra.mxu0 %v4815
    %5175 = vmatmul.bf16.gmra.mxu0 %v4127
    %v5176 = vpop.f32.mrf.mxu0
    %v5177 = vadd.f32 %v5164, %v5176
    %v5178 = vpop.f32.mrf.mxu0
    %5179 = vdwg.mxu0
    %v5180 = vld [vmem:[%s3 + $0x38] sm:$0xf]
    %v5182 = vperm.slane %v5180, 0
    %v5183 = vperm.slane %v5180, 1
    %v5184 = vperm.slane %v5180, 2
    %v5185 = vperm.slane %v5180, 3
    %v5190 = vmul.f32 %v89, %v5182
    %v5191 = vmul.f32 %v89, %v5183
    %v5192 = vmul.f32 %v89, %v5184
    %v5193 = vmul.f32 %v89, %v5185
    %v5194 = vadd.f32 %v5021, %v5190
    %v5195 = vadd.f32 %v5073, %v5191
    %v5196 = vadd.f32 %v5125, %v5192
    %v5197 = vadd.f32 %v5177, %v5193
    %v5198 = vld [vmem:[%s3 + $0x3c] sm:$0xf]
    %v5200 = vperm.slane %v5198, 0
    %v5201 = vperm.slane %v5198, 1
    %v5202 = vperm.slane %v5198, 2
    %v5203 = vperm.slane %v5198, 3
    %v5208 = vadd.f32 %v5194, %v5200
    %v5209 = vadd.f32 %v5195, %v5201
    %v5210 = vadd.f32 %v5196, %v5202
    %v5211 = vadd.f32 %v5197, %v5203
    %v5212 = vsub.f32 0.0, %v5208
    %v5213 = vsub.f32 0.0, %v5209
    %v5214 = vsub.f32 0.0, %v5210
    %v5215 = vsub.f32 0.0, %v5211
    %v5216 = vmul.f32 %v5212, 1.442695
    %v5217 = vpow.pop %v5216
    %v5218 = vmul.f32 %v5213, 1.442695
    %v5219 = vpow.pop %v5218
    %v5220 = vmul.f32 %v5214, 1.442695
    %v5221 = vpow.pop %v5220
    %v5222 = vmul.f32 %v5215, 1.442695
    %v5223 = vpow.pop %v5222
    %v5224 = vadd.f32 %v5217, 1.0
    %v5225 = vadd.f32 %v5219, 1.0
    %v5226 = vadd.f32 %v5221, 1.0
    %v5227 = vadd.f32 %v5223, 1.0
    %v5228 = vrcp.pop %v5224
    %v5229 = vrcp.pop %v5225
    %v5230 = vrcp.pop %v5226
    %v5231 = vrcp.pop %v5227
    %v5232 = vmul.f32 %v5208, %v5228
    %v5233 = vmul.f32 %v5209, %v5229
    %v5234 = vmul.f32 %v5210, %v5230
    %v5235 = vmul.f32 %v5211, %v5231
    %v5236 = vpack.c.bf16 %v5232, %v5232
    %v5237 = vpack.c.bf16 %v5233, %v5233
    %v5238 = vpack.c.bf16 %v5234, %v5234
    %v5239 = vpack.c.bf16 %v5235, %v5235
    %v5240 = vld [vmem:[#allocation2 + $0x10] sm:$0xf]
    %v5241 = vld [vmem:[#allocation2 + $0x24] sm:$0xf]
    %v5242 = vld [vmem:[#allocation2 + $0x38] sm:$0xf]
    %v5243 = vld [vmem:[#allocation2 + $0x4c] sm:$0xf]
    %v5244 = vld [vmem:[#allocation2 + $0x60] sm:$0xf]
    %v5245 = vld [vmem:[#allocation2 + $0x74] sm:$0xf]
    %v5246 = vld [vmem:[#allocation2 + $0x88] sm:$0xf]
    %v5247 = vld [vmem:[#allocation2 + $0x9c] sm:$0xf]
    %v5248 = vld [vmem:[#allocation2 + $0xb0] sm:$0xf]
    %v5249 = vld [vmem:[#allocation2 + $0xc4] sm:$0xf]
    %v5250 = vld [vmem:[#allocation2 + $0xd8] sm:$0xf]
    %v5251 = vld [vmem:[#allocation2 + $0xec] sm:$0xf]
    %v5252 = vld [vmem:[#allocation2 + $0x100] sm:$0xf]
    %v5253 = vld [vmem:[#allocation2 + $0x114] sm:$0xf]
    %v5254 = vld [vmem:[#allocation2 + $0x128] sm:$0xf]
    %v5255 = vld [vmem:[#allocation2 + $0x13c] sm:$0xf]
    %v5256 = vld [vmem:[#allocation2 + $0x150] sm:$0xf]
    %v5257 = vld [vmem:[#allocation2 + $0x164] sm:$0xf]
    %v5258 = vld [vmem:[#allocation2 + $0x178] sm:$0xf]
    %v5259 = vld [vmem:[#allocation2 + $0x18c] sm:$0xf]
    %v5260 = vld [vmem:[#allocation2 + $0x1a0] sm:$0xf]
    %v5261 = vld [vmem:[#allocation2 + $0x1b4] sm:$0xf]
    %v5262 = vld [vmem:[#allocation2 + $0x1c8] sm:$0xf]
    %v5263 = vld [vmem:[#allocation2 + $0x1dc] sm:$0xf]
    %v5264 = vld [vmem:[#allocation2 + $0x1f0] sm:$0xf]
    %v5265 = vld [vmem:[#allocation2 + $0x204] sm:$0xf]
    %v5266 = vld [vmem:[#allocation2 + $0x218] sm:$0xf]
    %v5267 = vld [vmem:[#allocation2 + $0x22c] sm:$0xf]
    %v5268 = vld [vmem:[#allocation2 + $0x240] sm:$0xf]
    %v5269 = vld [vmem:[#allocation2 + $0x254] sm:$0xf]
    %v5270 = vld [vmem:[#allocation2 + $0x268] sm:$0xf]
    %v5271 = vld [vmem:[#allocation2 + $0x27c] sm:$0xf]
    %v5272 = vld [vmem:[#allocation2 + $0x290] sm:$0xf]
    %v5273 = vld [vmem:[#allocation2 + $0x2a4] sm:$0xf]
    %v5274 = vld [vmem:[#allocation2 + $0x2b8] sm:$0xf]
    %v5275 = vld [vmem:[#allocation2 + $0x2cc] sm:$0xf]
    %v5276 = vld [vmem:[#allocation2 + $0x2e0] sm:$0xf]
    %v5277 = vld [vmem:[#allocation2 + $0x2f4] sm:$0xf]
    %v5278 = vld [vmem:[#allocation2 + $0x308] sm:$0xf]
    %v5279 = vld [vmem:[#allocation2 + $0x31c] sm:$0xf]
    %v5280 = vld [vmem:[#allocation2 + $0x330] sm:$0xf]
    %v5281 = vld [vmem:[#allocation2 + $0x344] sm:$0xf]
    %v5282 = vld [vmem:[#allocation2 + $0x358] sm:$0xf]
    %v5283 = vld [vmem:[#allocation2 + $0x36c] sm:$0xf]
    %v5284 = vld [vmem:[#allocation2 + $0x380] sm:$0xf]
    %v5285 = vld [vmem:[#allocation2 + $0x394] sm:$0xf]
    %v5286 = vld [vmem:[#allocation2 + $0x3a8] sm:$0xf]
    %v5287 = vld [vmem:[#allocation2 + $0x3bc] sm:$0xf]
    %v5288 = vld [vmem:[#allocation2 + $0x3d0] sm:$0xf]
    %v5289 = vld [vmem:[#allocation2 + $0x3e4] sm:$0xf]
    %v5290 = vld [vmem:[#allocation2 + $0x3f8] sm:$0xf]
    %v5291 = vld [vmem:[#allocation2 + $0x40c] sm:$0xf]
    %v5292 = vld [vmem:[#allocation2 + $0x420] sm:$0xf]
    %v5293 = vld [vmem:[#allocation2 + $0x434] sm:$0xf]
    %v5294 = vld [vmem:[#allocation2 + $0x448] sm:$0xf]
    %v5295 = vld [vmem:[#allocation2 + $0x45c] sm:$0xf]
    %v5296 = vld [vmem:[#allocation2 + $0x470] sm:$0xf]
    %v5297 = vld [vmem:[#allocation2 + $0x484] sm:$0xf]
    %v5298 = vld [vmem:[#allocation2 + $0x498] sm:$0xf]
    %v5299 = vld [vmem:[#allocation2 + $0x4ac] sm:$0xf]
    %v5300 = vld [vmem:[#allocation2 + $0x4c0] sm:$0xf]
    %v5301 = vld [vmem:[#allocation2 + $0x4d4] sm:$0xf]
    %v5302 = vld [vmem:[#allocation2 + $0x4e8] sm:$0xf]
    %v5303 = vld [vmem:[#allocation2 + $0x4fc] sm:$0xf]
    %v5304 = vld [vmem:[%s3 + $0x40] sm:$0x1]
    %v5306 = vperm.slane %v5304, 0
    %v5372 = vunpack.c.l.b16 %v5240
    %v5373 = vunpack.c.l.b16 %v5241
    %v5374 = vunpack.c.l.b16 %v5242
    %v5375 = vunpack.c.l.b16 %v5243
    %v5376 = vunpack.c.l.b16 %v5244
    %v5377 = vunpack.c.l.b16 %v5245
    %v5378 = vunpack.c.l.b16 %v5246
    %v5379 = vunpack.c.l.b16 %v5247
    %v5380 = vunpack.c.l.b16 %v5248
    %v5381 = vunpack.c.l.b16 %v5249
    %v5382 = vunpack.c.l.b16 %v5250
    %v5383 = vunpack.c.l.b16 %v5251
    %v5384 = vunpack.c.l.b16 %v5252
    %v5385 = vunpack.c.l.b16 %v5253
    %v5386 = vunpack.c.l.b16 %v5254
    %v5387 = vunpack.c.l.b16 %v5255
    %v5388 = vunpack.c.l.b16 %v5256
    %v5389 = vunpack.c.l.b16 %v5257
    %v5390 = vunpack.c.l.b16 %v5258
    %v5391 = vunpack.c.l.b16 %v5259
    %v5392 = vunpack.c.l.b16 %v5260
    %v5393 = vunpack.c.l.b16 %v5261
    %v5394 = vunpack.c.l.b16 %v5262
    %v5395 = vunpack.c.l.b16 %v5263
    %v5396 = vunpack.c.l.b16 %v5264
    %v5397 = vunpack.c.l.b16 %v5265
    %v5398 = vunpack.c.l.b16 %v5266
    %v5399 = vunpack.c.l.b16 %v5267
    %v5400 = vunpack.c.l.b16 %v5268
    %v5401 = vunpack.c.l.b16 %v5269
    %v5402 = vunpack.c.l.b16 %v5270
    %v5403 = vunpack.c.l.b16 %v5271
    %v5404 = vunpack.c.l.b16 %v5272
    %v5405 = vunpack.c.l.b16 %v5273
    %v5406 = vunpack.c.l.b16 %v5274
    %v5407 = vunpack.c.l.b16 %v5275
    %v5408 = vunpack.c.l.b16 %v5276
    %v5409 = vunpack.c.l.b16 %v5277
    %v5410 = vunpack.c.l.b16 %v5278
    %v5411 = vunpack.c.l.b16 %v5279
    %v5412 = vunpack.c.l.b16 %v5280
    %v5413 = vunpack.c.l.b16 %v5281
    %v5414 = vunpack.c.l.b16 %v5282
    %v5415 = vunpack.c.l.b16 %v5283
    %v5416 = vunpack.c.l.b16 %v5284
    %v5417 = vunpack.c.l.b16 %v5285
    %v5418 = vunpack.c.l.b16 %v5286
    %v5419 = vunpack.c.l.b16 %v5287
    %v5420 = vunpack.c.l.b16 %v5288
    %v5421 = vunpack.c.l.b16 %v5289
    %v5422 = vunpack.c.l.b16 %v5290
    %v5423 = vunpack.c.l.b16 %v5291
    %v5424 = vunpack.c.l.b16 %v5292
    %v5425 = vunpack.c.l.b16 %v5293
    %v5426 = vunpack.c.l.b16 %v5294
    %v5427 = vunpack.c.l.b16 %v5295
    %v5428 = vunpack.c.l.b16 %v5296
    %v5429 = vunpack.c.l.b16 %v5297
    %v5430 = vunpack.c.l.b16 %v5298
    %v5431 = vunpack.c.l.b16 %v5299
    %v5432 = vunpack.c.l.b16 %v5300
    %v5433 = vunpack.c.l.b16 %v5301
    %v5434 = vunpack.c.l.b16 %v5302
    %v5435 = vunpack.c.l.b16 %v5303
    %v5436 = vpack.c.b16 %v5373, %v5372
    %v5437 = vpack.c.b16 %v5375, %v5374
    %v5438 = vpack.c.b16 %v5377, %v5376
    %v5439 = vpack.c.b16 %v5379, %v5378
    %v5440 = vpack.c.b16 %v5381, %v5380
    %v5441 = vpack.c.b16 %v5383, %v5382
    %v5442 = vpack.c.b16 %v5385, %v5384
    %v5443 = vpack.c.b16 %v5387, %v5386
    %v5444 = vpack.c.b16 %v5389, %v5388
    %v5445 = vpack.c.b16 %v5391, %v5390
    %v5446 = vpack.c.b16 %v5393, %v5392
    %v5447 = vpack.c.b16 %v5395, %v5394
    %v5448 = vpack.c.b16 %v5397, %v5396
    %v5449 = vpack.c.b16 %v5399, %v5398
    %v5450 = vpack.c.b16 %v5401, %v5400
    %v5451 = vpack.c.b16 %v5403, %v5402
    %v5452 = vpack.c.b16 %v5405, %v5404
    %v5453 = vpack.c.b16 %v5407, %v5406
    %v5454 = vpack.c.b16 %v5409, %v5408
    %v5455 = vpack.c.b16 %v5411, %v5410
    %v5456 = vpack.c.b16 %v5413, %v5412
    %v5457 = vpack.c.b16 %v5415, %v5414
    %v5458 = vpack.c.b16 %v5417, %v5416
    %v5459 = vpack.c.b16 %v5419, %v5418
    %v5460 = vpack.c.b16 %v5421, %v5420
    %v5461 = vpack.c.b16 %v5423, %v5422
    %v5462 = vpack.c.b16 %v5425, %v5424
    %v5463 = vpack.c.b16 %v5427, %v5426
    %v5464 = vpack.c.b16 %v5429, %v5428
    %v5465 = vpack.c.b16 %v5431, %v5430
    %v5466 = vpack.c.b16 %v5433, %v5432
    %v5467 = vpack.c.b16 %v5435, %v5434
    %5500 = vmatpush.bf16.msra.mxu0 %v5443
    %5501 = vmatpush.bf16.msra.mxu0 %v5442
    %5502 = vmatpush.bf16.msra.mxu0 %v5441
    %5503 = vmatpush.bf16.msra.mxu0 %v5440
    %5504 = vmatpush.bf16.msra.mxu0 %v5439
    %5505 = vmatpush.bf16.msra.mxu0 %v5438
    %5506 = vmatpush.bf16.msra.mxu0 %v5437
    %5507 = vmatpush.bf16.msra.mxu0 %v5436
    %5508 = vmatmul.bf16.gmra.mxu0 %v5236
    %v5509 = vpop.f32.mrf.mxu0
    %v5510 = vadd.f32 %v5306, %v5509
    %v5511 = vpop.f32.mrf.mxu0
    %5512 = vdwg.mxu0
    %5513 = vmatpush.bf16.msra.mxu0 %v5451
    %5514 = vmatpush.bf16.msra.mxu0 %v5450
    %5515 = vmatpush.bf16.msra.mxu0 %v5449
    %5516 = vmatpush.bf16.msra.mxu0 %v5448
    %5517 = vmatpush.bf16.msra.mxu0 %v5447
    %5518 = vmatpush.bf16.msra.mxu0 %v5446
    %5519 = vmatpush.bf16.msra.mxu0 %v5445
    %5520 = vmatpush.bf16.msra.mxu0 %v5444
    %5521 = vmatmul.bf16.gmra.mxu0 %v5237
    %v5522 = vpop.f32.mrf.mxu0
    %v5523 = vadd.f32 %v5510, %v5522
    %v5524 = vpop.f32.mrf.mxu0
    %5525 = vdwg.mxu0
    %5526 = vmatpush.bf16.msra.mxu0 %v5459
    %5527 = vmatpush.bf16.msra.mxu0 %v5458
    %5528 = vmatpush.bf16.msra.mxu0 %v5457
    %5529 = vmatpush.bf16.msra.mxu0 %v5456
    %5530 = vmatpush.bf16.msra.mxu0 %v5455
    %5531 = vmatpush.bf16.msra.mxu0 %v5454
    %5532 = vmatpush.bf16.msra.mxu0 %v5453
    %5533 = vmatpush.bf16.msra.mxu0 %v5452
    %5534 = vmatmul.bf16.gmra.mxu0 %v5238
    %v5535 = vpop.f32.mrf.mxu0
    %v5536 = vadd.f32 %v5523, %v5535
    %v5537 = vpop.f32.mrf.mxu0
    %5538 = vdwg.mxu0
    %5539 = vmatpush.bf16.msra.mxu0 %v5467
    %5540 = vmatpush.bf16.msra.mxu0 %v5466
    %5541 = vmatpush.bf16.msra.mxu0 %v5465
    %5542 = vmatpush.bf16.msra.mxu0 %v5464
    %5543 = vmatpush.bf16.msra.mxu0 %v5463
    %5544 = vmatpush.bf16.msra.mxu0 %v5462
    %5545 = vmatpush.bf16.msra.mxu0 %v5461
    %5546 = vmatpush.bf16.msra.mxu0 %v5460
    %5547 = vmatmul.bf16.gmra.mxu0 %v5239
    %v5548 = vpop.f32.mrf.mxu0
    %v5549 = vadd.f32 %v5536, %v5548
    %v5550 = vpop.f32.mrf.mxu0
    %5551 = vdwg.mxu0
    %v5552 = vsub.f32 1.0, %v136
    %5554 = vset.pattern.permute.xlu0 0
    %5555 = vperm.xlu0 %5554, %v5552
    %v5556 = vpop.permute.xlu0 %5555
    %v5558 = vmul.f32 %v3841, %v5556
    %5560 = vset.pattern.permute.xlu0 0
    %5561 = vperm.xlu0 %5560, %v136
    %v5562 = vpop.permute.xlu0 %5561
    %v5564 = vmul.f32 %v5549, %v5562
    %v5565 = vadd.f32 %v5558, %v5564
    %5566 = vst [vmem:[%s11] sm:$0xff] %v5565
    // Predicated region
    $region54: #{forward.1} parent=1 // pred_check
      _
    $region55: #{forward.1} parent=1 // pred_check_branch
      %5568 = sbr.rel (0) target = $region57
    $region56: #{forward.1} parent=1 // pred_region
      _
    $region57: #{forward.1} parent=1 // pred_fallthru
      _
    // Predicated region
    $region58: #{forward.1} parent=1 // pred_check
      _
    $region59: #{forward.1} parent=1 // pred_check_branch
      %5570 = sbr.rel (0) target = $region61
    $region60: #{forward.1} parent=1 // pred_region
      _
    $region61: #{forward.1} parent=1 // pred_fallthru
      _
    %5571 = vsyncpa [#allocation5], 1
    %5572 = vsyncpa [#allocation7], 1
  %5573 = vsyncmov [#allocation3]
  %s5574 = vpop.sfrf %5573
  %p5575 = scmp.eq.s32.totalorder %s5574, 0
  %p5576 = pneg %p5575
  %5578 = shalt.err (%p5576)

</llo_original>
